<compile_context>
chip_gen: v7x
topology: tpu7x:2x2x1
jax: 0.10.0
libtpu: 0.0.40
codegen_flags: <defaults>
</compile_context>

<pallas_src>
import jax
import jax.numpy as jnp
from jax.experimental import pallas as pl
from jax.experimental.pallas import tpu as pltpu

LN_EPS = 1e-5


def _layernorm(x, gamma, beta):
    # var = E[x^2] - mu^2 : the two cross-lane reductions are independent, so
    # both XLU pushes can issue back-to-back.  rsqrt lands on the EUP slot.
    mu = jnp.mean(x, axis=-1, keepdims=True)
    ms = jnp.mean(x * x, axis=-1, keepdims=True)
    var = jnp.maximum(ms - mu * mu, 0.0)
    return (x - mu) * jax.lax.rsqrt(var + LN_EPS) * gamma + beta


def _fused_forward_kernel(
    x_ref,                 # (bt, input_dim)  f32  (cast to bf16 in-register)
    w1_ref, vec1_ref,      # (in, h0) bf16, (3, h0) f32 = [b1; gamma1; beta1]
    wf_ref, vec2_ref,      # (h0, h1) bf16 folded attn+deep, (3, h1) f32 = [b_fold; gamma2; beta2]
    wh_ref, bh_ref,        # (h1, P) bf16, (1, P) f32   fused lane-padded heads
    out_ref,               # (bt, P)  out dtype
):
    x = x_ref[...].astype(jnp.bfloat16)

    # feature_extractor: Linear -> ReLU -> LayerNorm -> Dropout(identity)
    h = jnp.dot(x, w1_ref[...], preferred_element_type=jnp.float32)
    h = jnp.maximum(h + vec1_ref[0:1, :], 0.0)
    h = _layernorm(h, vec1_ref[1:2, :], vec1_ref[2:3, :])

    # [attention(seq_len==1) -> deep Linear] folded into one matmul:
    #   out_proj(v_proj(h)) @ w2 + b2  ==  h @ (wv@wo@w2) + b_fold
    d = jnp.dot(h.astype(jnp.bfloat16), wf_ref[...],
                preferred_element_type=jnp.float32)
    d = jnp.maximum(d + vec2_ref[0:1, :], 0.0)
    d = _layernorm(d, vec2_ref[1:2, :], vec2_ref[2:3, :])

    # fused ctr / conversion / revenue heads: one MXU push, one lane-dense store
    out_ref[...] = (
        jnp.dot(d.astype(jnp.bfloat16), wh_ref[...],
                preferred_element_type=jnp.float32) + bh_ref[...]
    ).astype(out_ref.dtype)


def _const_spec(shape):
    """BlockSpec for a grid-invariant operand: full block, single VMEM buffer."""
    index_map = lambda i: (0,) * len(shape)
    try:
        return pl.BlockSpec(shape, index_map, pipeline_mode=pl.Buffered(1))
    except Exception:  # older/newer signatures: fall back to default pipelining
        return pl.BlockSpec(shape, index_map)


def pack_params(p, n_ads):
    """Pack nn.Module-style params into the kernel layout.

    * matmul weights in bf16, bias / LayerNorm vectors packed in f32
    * seq_len==1 attention (v_proj, out_proj) and the following deep Linear are
      pre-folded in f32:  W_fold = wv @ wo @ w2,  b_fold = (bv@wo + bo)@w2 + b2
    * the three heads are fused and 128-lane padded for an unmasked store
    """
    lanes = 128
    p3 = 3 * n_ads
    P = ((p3 + lanes - 1) // lanes) * lanes

    wf = p["wv"] @ p["wo"] @ p["w2"]                                  # (h0, h1)
    bf = (p["bv"] @ p["wo"] + p["bo"]) @ p["w2"] + p["b2"]            # (1, h1)

    wh = jnp.concatenate([p["wctr"], p["wconv"], p["wrev"]], axis=1)
    bh = jnp.concatenate([p["bctr"], p["bconv"], p["brev"]], axis=1)
    wh = jnp.pad(wh, ((0, 0), (0, P - p3)))
    bh = jnp.pad(bh, ((0, 0), (0, P - p3)))

    packed = {
        "w1": p["w1"].astype(jnp.bfloat16),
        "vec1": jnp.concatenate([p["b1"], p["g1"], p["be1"]], axis=0).astype(jnp.float32),
        "wf": wf.astype(jnp.bfloat16),
        "vec2": jnp.concatenate([bf, p["g2"], p["be2"]], axis=0).astype(jnp.float32),
        "wh": wh.astype(jnp.bfloat16),
        "bh": bh.astype(jnp.float32),
    }
    return packed, P


def _pick_batch_tile(B):
    """Target >= 4 grid steps (>= 2 per v7x TensorCore), tiles up to 1024 rows,
    multiple of 8 for sublane alignment."""
    bt = max(256, ((B + 3) // 4 + 7) // 8 * 8)
    bt = min(bt, 1024, ((B + 7) // 8) * 8)
    return max(bt, 8)


def advanced_contextual_forward(x, params, n_ads, *, batch_tile=None,
                                out_dtype=jnp.float32, return_packed=False):
    """Fused forward pass.  x: (B, input_dim) f32.

    Returns dict of (B, n_ads) arrays (ctr / conversion / revenue), or the
    packed (B, 3*n_ads) slab if return_packed=True (lets the caller split
    lazily and avoids extra slice kernels).
    """
    B, input_dim = x.shape
    pk, P = pack_params(params, n_ads)
    h0 = pk["w1"].shape[1]
    h1 = pk["wf"].shape[1]

    bt = int(batch_tile) if batch_tile is not None else _pick_batch_tile(B)
    B_pad = ((B + bt - 1) // bt) * bt
    if B_pad != B:
        # pick batch_tile to divide typical B so this pad pass disappears
        x = jnp.pad(x, ((0, B_pad - B), (0, 0)))
    grid = (B_pad // bt,)

    in_specs = [
        pl.BlockSpec((bt, input_dim), lambda i: (i, 0)),   # x (pipelined, f32)
        _const_spec((input_dim, h0)), _const_spec((3, h0)),
        _const_spec((h0, h1)), _const_spec((3, h1)),
        _const_spec((h1, P)), _const_spec((1, P)),
    ]
    out_spec = pl.BlockSpec((bt, P), lambda i: (i, 0))

    # VMEM budget: double-buffered x/out tiles + single-buffered weights +
    # live intermediates, with 4x headroom; cap generation-aware (~75% of
    # physical VMEM, 48 MiB fallback — actual use is only a few MiB anyway).
    out_itemsize = jnp.dtype(out_dtype).itemsize
    wbytes = 2 * (input_dim * h0 + h0 * h1 + h1 * P) + 4 * (3 * h0 + 3 * h1 + P)
    iobytes = 2 * bt * input_dim * 4 + 2 * bt * P * out_itemsize
    actbytes = bt * (2 * h0 + 2 * h1 + P) * 4
    try:
        cap = int(0.75 * pltpu.get_tpu_info().vmem_capacity_bytes)
    except Exception:
        cap = 48 << 20
    vmem_limit = int(min(max(4 * (wbytes + iobytes + actbytes), 16 << 20), cap))

    out = pl.pallas_call(
        _fused_forward_kernel,
        out_shape=jax.ShapeDtypeStruct((B_pad, P), out_dtype),
        grid_spec=pltpu.PrefetchScalarGridSpec(
            num_scalar_prefetch=0,
            grid=grid,
            in_specs=in_specs,
            out_specs=out_spec,
        ),
        compiler_params=pltpu.CompilerParams(
            dimension_semantics=("parallel",),
            vmem_limit_bytes=vmem_limit,
        ),
    )(x, pk["w1"], pk["vec1"], pk["wf"], pk["vec2"], pk["wh"], pk["bh"])

    # NOTE: columns [3*n_ads, P) of the raw output are lane padding (garbage by
    # construction); never read them downstream.
    slab = out[:B, :3 * n_ads]
    if return_packed:
        return slab
    return {
        "ctr": slab[:, :n_ads],
        "conversion": slab[:, n_ads:2 * n_ads],
        "revenue": slab[:, 2 * n_ads:3 * n_ads],
    }


def init_params(key, input_dim, hidden_dims, n_ads):
    """Deterministic synthetic parameters (matching nn.Module shapes,
    Linear weights stored transposed as (in, out))."""
    h0, h1 = hidden_dims
    keys = jax.random.split(key, 16)

    def w(k, shape, scale):
        return (scale * jax.random.normal(k, shape)).astype(jnp.float32)

    return {
        # feature_extractor
        "w1": w(keys[0], (input_dim, h0), 0.1),
        "b1": w(keys[1], (1, h0), 0.05),
        "g1": jnp.ones((1, h0), jnp.float32),
        "be1": jnp.zeros((1, h0), jnp.float32),
        # attention (only v_proj / out_proj matter when seq_len == 1)
        "wv": w(keys[2], (h0, h0), 0.1),
        "bv": w(keys[3], (1, h0), 0.05),
        "wo": w(keys[4], (h0, h0), 0.1),
        "bo": w(keys[5], (1, h0), 0.05),
        # deep_layers (hidden_dims[1:])
        "w2": w(keys[6], (h0, h1), 0.1),
        "b2": w(keys[7], (1, h1), 0.05),
        "g2": jnp.ones((1, h1), jnp.float32),
        "be2": jnp.zeros((1, h1), jnp.float32),
        # heads
        "wctr": w(keys[8], (h1, n_ads), 0.1),
        "bctr": w(keys[9], (1, n_ads), 0.05),
        "wconv": w(keys[10], (h1, n_ads), 0.1),
        "bconv": w(keys[11], (1, n_ads), 0.05),
        "wrev": w(keys[12], (h1, n_ads), 0.1),
        "brev": w(keys[13], (1, n_ads), 0.05),
    }


def reference_forward_f32(x, p):
    """Pure f32 reference (original module math, un-folded)."""
    h = jnp.maximum(x @ p["w1"] + p["b1"], 0.0)
    h = _layernorm(h, p["g1"], p["be1"])
    v = h @ p["wv"] + p["bv"]
    a = v @ p["wo"] + p["bo"]
    d = jnp.maximum(a @ p["w2"] + p["b2"], 0.0)
    d = _layernorm(d, p["g2"], p["be2"])
    return {
        "ctr": d @ p["wctr"] + p["bctr"],
        "conversion": d @ p["wconv"] + p["bconv"],
        "revenue": d @ p["wrev"] + p["brev"],
    }


def reference_forward_packed(x, pk, n_ads):
    """Plain-XLA reference mirroring the kernel's folded bf16/f32 math exactly."""
    def mm(a, w):
        return jnp.dot(a.astype(jnp.bfloat16), w, preferred_element_type=jnp.float32)

    h = jnp.maximum(mm(x, pk["w1"]) + pk["vec1"][0:1], 0.0)
    h = _layernorm(h, pk["vec1"][1:2], pk["vec1"][2:3])
    d = jnp.maximum(mm(h, pk["wf"]) + pk["vec2"][0:1], 0.0)
    d = _layernorm(d, pk["vec2"][1:2], pk["vec2"][2:3])
    out = mm(d, pk["wh"]) + pk["bh"]
    return {
        "ctr": out[:, :n_ads],
        "conversion": out[:, n_ads:2 * n_ads],
        "revenue": out[:, 2 * n_ads:3 * n_ads],
    }


if __name__ == "__main__":
    # Module-consistent small config: input_dim=32, hidden_dims=[64, 32],
    # n_ads=16.  batch=2048 with batch_tile=512 gives 4 grid steps (>= 2 per
    # v7x TensorCore, so DMA/compute overlap per core) while each step feeds
    # the MXU 512 rows; 2048 % 512 == 0 so no batch-pad copy.
    input_dim = 32
    hidden_dims = [64, 32]
    n_ads = 16
    batch = 2048
    batch_tile = 512

    key = jax.random.PRNGKey(0)
    k_x, k_p = jax.random.split(key)
    x = jax.random.normal(k_x, (batch, input_dim), dtype=jnp.float32)
    params = init_params(k_p, input_dim, hidden_dims, n_ads)

    out = advanced_contextual_forward(x, params, n_ads, batch_tile=batch_tile)
    out = jax.tree_util.tree_map(jax.block_until_ready, out)

    pk, _ = pack_params(params, n_ads)
    ref_bf16 = reference_forward_packed(x, pk, n_ads)   # same folded math as the kernel
    ref_f32 = reference_forward_f32(x, params)          # full-precision, un-folded sanity check

    for name in ("ctr", "conversion", "revenue"):
        assert out[name].shape == (batch, n_ads)
        if not jnp.allclose(out[name], ref_bf16[name], atol=5e-3, rtol=5e-3):
            raise AssertionError(f"kernel / bf16-reference mismatch in head {name}")
        if not jnp.allclose(out[name], ref_f32[name], atol=1e-1, rtol=1e-1):
            raise AssertionError(f"kernel / f32-reference mismatch in head {name}")

    print("KERNEL_OK")
</pallas_src>

<mosaic_0001>
module attributes {stable_mosaic.version = 11 : i64} {
  func.func @_fused_forward_kernel(%arg0: i32, %arg1: memref<512x32xf32, #tpu.memory_space<vmem>>, %arg2: memref<32x64xbf16, #tpu.memory_space<vmem>>, %arg3: memref<3x64xf32, #tpu.memory_space<vmem>>, %arg4: memref<64x32xbf16, #tpu.memory_space<vmem>>, %arg5: memref<3x32xf32, #tpu.memory_space<vmem>>, %arg6: memref<32x128xbf16, #tpu.memory_space<vmem>>, %arg7: memref<1x128xf32, #tpu.memory_space<vmem>>, %arg8: memref<512x128xf32, #tpu.memory_space<vmem>>) attributes {dimension_semantics = [#tpu.dimension_semantics<parallel>], iteration_bounds = array<i64: 4>, scalar_prefetch = 0 : i64, scratch_operands = 0 : i64, tpu.core_type = #tpu.core_type<tc>, window_params = [{transform_indices = @transform_0, window_bounds = array<i64: 512, 32>}, {pipeline_mode = #tpu.pipeline_mode<synchronous>, transform_indices = @transform_1, window_bounds = array<i64: 32, 64>}, {pipeline_mode = #tpu.pipeline_mode<synchronous>, transform_indices = @transform_2, window_bounds = array<i64: 3, 64>}, {pipeline_mode = #tpu.pipeline_mode<synchronous>, transform_indices = @transform_3, window_bounds = array<i64: 64, 32>}, {pipeline_mode = #tpu.pipeline_mode<synchronous>, transform_indices = @transform_4, window_bounds = array<i64: 3, 32>}, {pipeline_mode = #tpu.pipeline_mode<synchronous>, transform_indices = @transform_5, window_bounds = array<i64: 32, 128>}, {pipeline_mode = #tpu.pipeline_mode<synchronous>, transform_indices = @transform_6, window_bounds = array<i64: 1, 128>}, {transform_indices = @transform_7, window_bounds = array<i64: 512, 128>}]} {
    %c0 = arith.constant 0 : index
    %c0_0 = arith.constant 0 : index
    %0 = vector.load %arg1[%c0, %c0_0] : memref<512x32xf32, #tpu.memory_space<vmem>>, vector<512x32xf32>
    %1 = arith.truncf %0 : vector<512x32xf32> to vector<512x32xbf16>
    %c0_1 = arith.constant 0 : index
    %c0_2 = arith.constant 0 : index
    %2 = vector.load %arg2[%c0_1, %c0_2] : memref<32x64xbf16, #tpu.memory_space<vmem>>, vector<32x64xbf16>
    %cst = arith.constant dense<0.000000e+00> : vector<512x64xf32>
    %3 = tpu.matmul %1, %2, %cst {dimension_numbers = #tpu.dot_dimension_numbers<[1], [0], [0], [1], [0, 0, 1, 1], [], []>} : vector<512x32xbf16>, vector<32x64xbf16>, vector<512x64xf32> -> vector<512x64xf32>
    %c0_3 = arith.constant 0 : index
    %c0_4 = arith.constant 0 : index
    %4 = vector.load %arg3[%c0_3, %c0_4] : memref<3x64xf32, #tpu.memory_space<vmem>>, vector<1x64xf32>
    %5 = vector.broadcast %4 : vector<1x64xf32> to vector<512x64xf32>
    %6 = arith.addf %3, %5 : vector<512x64xf32>
    %cst_5 = arith.constant 0.000000e+00 : f32
    %7 = vector.broadcast %cst_5 : f32 to vector<512x64xf32>
    %8 = arith.maximumf %6, %7 : vector<512x64xf32>
    %c1 = arith.constant 1 : index
    %c0_6 = arith.constant 0 : index
    %9 = vector.load %arg3[%c1, %c0_6] : memref<3x64xf32, #tpu.memory_space<vmem>>, vector<1x64xf32>
    %c2 = arith.constant 2 : index
    %c0_7 = arith.constant 0 : index
    %10 = vector.load %arg3[%c2, %c0_7] : memref<3x64xf32, #tpu.memory_space<vmem>>, vector<1x64xf32>
    %cst_8 = arith.constant dense<0.000000e+00> : vector<512xf32>
    %11 = vector.multi_reduction <add>, %8, %cst_8 [1] : vector<512x64xf32> to vector<512xf32>
    %12 = vector.shape_cast %11 : vector<512xf32> to vector<512x1xf32>
    %cst_9 = arith.constant 6.400000e+01 : f32
    %13 = vector.broadcast %cst_9 : f32 to vector<512x1xf32>
    %14 = arith.divf %12, %13 : vector<512x1xf32>
    %15 = arith.mulf %8, %8 : vector<512x64xf32>
    %cst_10 = arith.constant dense<0.000000e+00> : vector<512xf32>
    %16 = vector.multi_reduction <add>, %15, %cst_10 [1] : vector<512x64xf32> to vector<512xf32>
    %17 = vector.shape_cast %16 : vector<512xf32> to vector<512x1xf32>
    %cst_11 = arith.constant 6.400000e+01 : f32
    %18 = vector.broadcast %cst_11 : f32 to vector<512x1xf32>
    %19 = arith.divf %17, %18 : vector<512x1xf32>
    %20 = arith.mulf %14, %14 : vector<512x1xf32>
    %21 = arith.subf %19, %20 : vector<512x1xf32>
    %cst_12 = arith.constant 0.000000e+00 : f32
    %22 = vector.broadcast %cst_12 : f32 to vector<512x1xf32>
    %23 = arith.maximumf %21, %22 : vector<512x1xf32>
    %24 = vector.broadcast %14 : vector<512x1xf32> to vector<512x64xf32>
    %25 = arith.subf %8, %24 : vector<512x64xf32>
    %cst_13 = arith.constant 9.99999974E-6 : f32
    %26 = vector.broadcast %cst_13 : f32 to vector<512x1xf32>
    %27 = arith.addf %23, %26 : vector<512x1xf32>
    %28 = math.rsqrt %27 : vector<512x1xf32>
    %29 = vector.broadcast %28 : vector<512x1xf32> to vector<512x64xf32>
    %30 = arith.mulf %25, %29 : vector<512x64xf32>
    %31 = vector.broadcast %9 : vector<1x64xf32> to vector<512x64xf32>
    %32 = arith.mulf %30, %31 : vector<512x64xf32>
    %33 = vector.broadcast %10 : vector<1x64xf32> to vector<512x64xf32>
    %34 = arith.addf %32, %33 : vector<512x64xf32>
    %35 = arith.truncf %34 : vector<512x64xf32> to vector<512x64xbf16>
    %c0_14 = arith.constant 0 : index
    %c0_15 = arith.constant 0 : index
    %36 = vector.load %arg4[%c0_14, %c0_15] : memref<64x32xbf16, #tpu.memory_space<vmem>>, vector<64x32xbf16>
    %cst_16 = arith.constant dense<0.000000e+00> : vector<512x32xf32>
    %37 = tpu.matmul %35, %36, %cst_16 {dimension_numbers = #tpu.dot_dimension_numbers<[1], [0], [0], [1], [0, 0, 1, 1], [], []>} : vector<512x64xbf16>, vector<64x32xbf16>, vector<512x32xf32> -> vector<512x32xf32>
    %c0_17 = arith.constant 0 : index
    %c0_18 = arith.constant 0 : index
    %38 = vector.load %arg5[%c0_17, %c0_18] : memref<3x32xf32, #tpu.memory_space<vmem>>, vector<1x32xf32>
    %39 = vector.broadcast %38 : vector<1x32xf32> to vector<512x32xf32>
    %40 = arith.addf %37, %39 : vector<512x32xf32>
    %cst_19 = arith.constant 0.000000e+00 : f32
    %41 = vector.broadcast %cst_19 : f32 to vector<512x32xf32>
    %42 = arith.maximumf %40, %41 : vector<512x32xf32>
    %c1_20 = arith.constant 1 : index
    %c0_21 = arith.constant 0 : index
    %43 = vector.load %arg5[%c1_20, %c0_21] : memref<3x32xf32, #tpu.memory_space<vmem>>, vector<1x32xf32>
    %c2_22 = arith.constant 2 : index
    %c0_23 = arith.constant 0 : index
    %44 = vector.load %arg5[%c2_22, %c0_23] : memref<3x32xf32, #tpu.memory_space<vmem>>, vector<1x32xf32>
    %cst_24 = arith.constant dense<0.000000e+00> : vector<512xf32>
    %45 = vector.multi_reduction <add>, %42, %cst_24 [1] : vector<512x32xf32> to vector<512xf32>
    %46 = vector.shape_cast %45 : vector<512xf32> to vector<512x1xf32>
    %cst_25 = arith.constant 3.200000e+01 : f32
    %47 = vector.broadcast %cst_25 : f32 to vector<512x1xf32>
    %48 = arith.divf %46, %47 : vector<512x1xf32>
    %49 = arith.mulf %42, %42 : vector<512x32xf32>
    %cst_26 = arith.constant dense<0.000000e+00> : vector<512xf32>
    %50 = vector.multi_reduction <add>, %49, %cst_26 [1] : vector<512x32xf32> to vector<512xf32>
    %51 = vector.shape_cast %50 : vector<512xf32> to vector<512x1xf32>
    %cst_27 = arith.constant 3.200000e+01 : f32
    %52 = vector.broadcast %cst_27 : f32 to vector<512x1xf32>
    %53 = arith.divf %51, %52 : vector<512x1xf32>
    %54 = arith.mulf %48, %48 : vector<512x1xf32>
    %55 = arith.subf %53, %54 : vector<512x1xf32>
    %cst_28 = arith.constant 0.000000e+00 : f32
    %56 = vector.broadcast %cst_28 : f32 to vector<512x1xf32>
    %57 = arith.maximumf %55, %56 : vector<512x1xf32>
    %58 = vector.broadcast %48 : vector<512x1xf32> to vector<512x32xf32>
    %59 = arith.subf %42, %58 : vector<512x32xf32>
    %cst_29 = arith.constant 9.99999974E-6 : f32
    %60 = vector.broadcast %cst_29 : f32 to vector<512x1xf32>
    %61 = arith.addf %57, %60 : vector<512x1xf32>
    %62 = math.rsqrt %61 : vector<512x1xf32>
    %63 = vector.broadcast %62 : vector<512x1xf32> to vector<512x32xf32>
    %64 = arith.mulf %59, %63 : vector<512x32xf32>
    %65 = vector.broadcast %43 : vector<1x32xf32> to vector<512x32xf32>
    %66 = arith.mulf %64, %65 : vector<512x32xf32>
    %67 = vector.broadcast %44 : vector<1x32xf32> to vector<512x32xf32>
    %68 = arith.addf %66, %67 : vector<512x32xf32>
    %69 = arith.truncf %68 : vector<512x32xf32> to vector<512x32xbf16>
    %c0_30 = arith.constant 0 : index
    %c0_31 = arith.constant 0 : index
    %70 = vector.load %arg6[%c0_30, %c0_31] : memref<32x128xbf16, #tpu.memory_space<vmem>>, vector<32x128xbf16>
    %cst_32 = arith.constant dense<0.000000e+00> : vector<512x128xf32>
    %71 = tpu.matmul %69, %70, %cst_32 {dimension_numbers = #tpu.dot_dimension_numbers<[1], [0], [0], [1], [0, 0, 1, 1], [], []>} : vector<512x32xbf16>, vector<32x128xbf16>, vector<512x128xf32> -> vector<512x128xf32>
    %c0_33 = arith.constant 0 : index
    %c0_34 = arith.constant 0 : index
    %72 = vector.load %arg7[%c0_33, %c0_34] : memref<1x128xf32, #tpu.memory_space<vmem>>, vector<1x128xf32>
    %73 = vector.broadcast %72 : vector<1x128xf32> to vector<512x128xf32>
    %74 = arith.addf %71, %73 : vector<512x128xf32>
    %c0_35 = arith.constant 0 : index
    %c0_36 = arith.constant 0 : index
    %75 = vector.load %arg8[%c0_35, %c0_36] : memref<512x128xf32, #tpu.memory_space<vmem>>, vector<512x128xf32>
    tpu.vector_store %arg8[%c0_35, %c0_36], %74 {strides = array<i32>} : memref<512x128xf32, #tpu.memory_space<vmem>>, vector<512x128xf32>,
    return
  }
  func.func @transform_0(%arg0: i32) -> (i32, i32) {
    %c0_i32 = arith.constant 0 : i32
    %c0_i32_0 = arith.constant 0 : i32
    return %arg0, %c0_i32 : i32, i32
  }
  func.func @transform_1(%arg0: i32) -> (i32, i32) {
    %c0_i32 = arith.constant 0 : i32
    %c0_i32_0 = arith.constant 0 : i32
    %c0_i32_1 = arith.constant 0 : i32
    return %c0_i32, %c0_i32_0 : i32, i32
  }
  func.func @transform_2(%arg0: i32) -> (i32, i32) {
    %c0_i32 = arith.constant 0 : i32
    %c0_i32_0 = arith.constant 0 : i32
    %c0_i32_1 = arith.constant 0 : i32
    return %c0_i32, %c0_i32_0 : i32, i32
  }
  func.func @transform_3(%arg0: i32) -> (i32, i32) {
    %c0_i32 = arith.constant 0 : i32
    %c0_i32_0 = arith.constant 0 : i32
    %c0_i32_1 = arith.constant 0 : i32
    return %c0_i32, %c0_i32_0 : i32, i32
  }
  func.func @transform_4(%arg0: i32) -> (i32, i32) {
    %c0_i32 = arith.constant 0 : i32
    %c0_i32_0 = arith.constant 0 : i32
    %c0_i32_1 = arith.constant 0 : i32
    return %c0_i32, %c0_i32_0 : i32, i32
  }
  func.func @transform_5(%arg0: i32) -> (i32, i32) {
    %c0_i32 = arith.constant 0 : i32
    %c0_i32_0 = arith.constant 0 : i32
    %c0_i32_1 = arith.constant 0 : i32
    return %c0_i32, %c0_i32_0 : i32, i32
  }
  func.func @transform_6(%arg0: i32) -> (i32, i32) {
    %c0_i32 = arith.constant 0 : i32
    %c0_i32_0 = arith.constant 0 : i32
    %c0_i32_1 = arith.constant 0 : i32
    return %c0_i32, %c0_i32_0 : i32, i32
  }
  func.func @transform_7(%arg0: i32) -> (i32, i32) {
    %c0_i32 = arith.constant 0 : i32
    %c0_i32_0 = arith.constant 0 : i32
    return %arg0, %c0_i32 : i32, i32
  }
}

</mosaic_0001>

<llo_original>
// kernel: tpu_custom_call.1
$region0: #{tpu_custom_call.1}
  #allocation0 [shape = 'u32[]', space=smem, size = 0x4, offset = 0x4, fixed_abs, tag = 'smem constant byte address 0x4 - core index']
  #allocation1 [shape = 'u32[144,128]{1,0:T(1,128)}', space=vmem, size = 0x12000, scoped, tag = 'internal scratch']
  %s0 = inlined_call_operand.vmem [shape: f32[2048,32], index: 0, kind: input, shape index: {}]
  %s1 = inlined_call_operand.vmem [shape: bf16[32,64], index: 1, kind: input, shape index: {}]
  %s2 = inlined_call_operand.vmem [shape: f32[3,64], index: 2, kind: input, shape index: {}]
  %s3 = inlined_call_operand.vmem [shape: bf16[64,32], index: 3, kind: input, shape index: {}]
  %s4 = inlined_call_operand.vmem [shape: f32[3,32], index: 4, kind: input, shape index: {}]
  %s5 = inlined_call_operand.vmem [shape: bf16[32,128], index: 5, kind: input, shape index: {}]
  %s6 = inlined_call_operand.vmem [shape: f32[1,128], index: 6, kind: input, shape index: {}]
  %s7 = inlined_call_operand.hbm [shape: f32[2048,128], index: 7, kind: output, shape index: {}]
  %s8 = sld [smem:[#allocation0]]
  $region61: #{tpu_custom_call.1} parent=0
    _
  %s10 = ssub.s32 1, %s8
  %s11 = scalar_select 0, %s10, %s8
  $region1: #{tpu_custom_call.1} parent=0
    #allocation2 [shape = 'u8[524288]{0}', space=vmem, size = 0x80000, scoped, tag = 'output window, operand 0']
    #allocation3 [shape = 's32[2]{0}', space=sflag, size = 0x8, scoped, tag = 'scoped memory for tpu_custom_call.1']
    %12 = vsyncpa [#allocation3], 0
    %s13 = scalar_lea.sflag [#allocation3], 1
    %14 = vsyncpa %s13, 0
    loop: start=0, step=1, limit=6
    $region2: #{tpu_custom_call.1} parent=1 // loop_pre_header
      _
    $region3: #{tpu_custom_call.1} parent=1 // loop_header
      %s16 = sphi 0, %s20
      %p17 = scmp.ge.s32.totalorder %s16, 6
      %s26 = sphi 0, %s28
      %s29 = sphi 0, %s26
      %s30 = sphi 0, %s29
      %s46 = sphi 0, %s30
      %s50 = sphi 0, %s50
      %s52 = sphi 0, %s50
      %s53 = sphi 0, %s52
      %s67 = sphi 0, %s53
      %s71 = sphi 0, %s71
      %s73 = sphi 0, %s71
      %s74 = sphi 0, %s73
      %s88 = sphi 0, %s74
      %s92 = sphi 0, %s92
      %s94 = sphi 0, %s92
      %s95 = sphi 0, %s94
      %s109 = sphi 0, %s95
      %s113 = sphi 0, %s113
      %s115 = sphi 0, %s113
      %s116 = sphi 0, %s115
      %s130 = sphi 0, %s116
      %s134 = sphi 0, %s134
      %s136 = sphi 0, %s134
      %s137 = sphi 0, %s136
      %s151 = sphi 0, %s137
      %s155 = sphi 0, %s155
      %s157 = sphi 0, %s155
      %s158 = sphi 0, %s157
      %s172 = sphi 0, %s158
      %s178 = sphi 0, %s180
      %s181 = sphi 0, %s178
      %s182 = sphi 0, %s181
      %s198 = sphi 0, %s182
    $region4: #{tpu_custom_call.1} parent=1 // loop_header_branch
      %19 = sbr.rel (%p17) target = $region8
    $region5: #{tpu_custom_call.1} parent=1 // loop_body
      %s21 = ssub.s32 %s16, 1
      %s22 = ssub.s32 %s16, 2
      %s23 = sadd.s32 %s16, 1
      %s24 = ssub.s32 %s16, %s23
      %p25 = scmp.eq.s32.totalorder %s24, 0
      %s27 = sadd.s32 %s26, 1
      %s28 = scalar_select %p25, %s26, %s27
      %p31 = pneg %p25
      %p32 = scmp.eq.s32.totalorder %s16, 3
      %p33 = por %p31, %p32
      %p34 = scmp.ne.s32.totalorder %s26, %s29
      %p35 = scmp.eq.s32.totalorder %s16, 0
      %p36 = por %p34, %p35
      %p37 = scmp.ne.s32.totalorder %s26, %s29
      %p38 = scmp.eq.s32.totalorder %s21, 3
      %p39 = por %p37, %p38
      %p40 = scmp.ne.s32.totalorder %s29, %s30
      %p41 = scmp.eq.s32.totalorder %s21, 0
      %p42 = por %p40, %p41
      %p43 = scmp.ne.s32.totalorder %s29, %s30
      %p44 = scmp.eq.s32.totalorder %s22, 3
      %p45 = por %p43, %p44
      %p47 = scmp.ne.s32.totalorder %s30, %s46
      %p48 = scmp.eq.s32.totalorder %s22, 0
      %p49 = por %p47, %p48
      %s51 = sadd.s32 %s50, 1
      %p54 = scmp.eq.s32.totalorder %s16, 3
      %p55 = scmp.ne.s32.totalorder %s50, %s52
      %p56 = scmp.eq.s32.totalorder %s16, 0
      %p57 = por %p55, %p56
      %p58 = scmp.ne.s32.totalorder %s50, %s52
      %p59 = scmp.eq.s32.totalorder %s21, 3
      %p60 = por %p58, %p59
      %p61 = scmp.ne.s32.totalorder %s52, %s53
      %p62 = scmp.eq.s32.totalorder %s21, 0
      %p63 = por %p61, %p62
      %p64 = scmp.ne.s32.totalorder %s52, %s53
      %p65 = scmp.eq.s32.totalorder %s22, 3
      %p66 = por %p64, %p65
      %p68 = scmp.ne.s32.totalorder %s53, %s67
      %p69 = scmp.eq.s32.totalorder %s22, 0
      %p70 = por %p68, %p69
      %s72 = sadd.s32 %s71, 1
      %p75 = scmp.eq.s32.totalorder %s16, 3
      %p76 = scmp.ne.s32.totalorder %s71, %s73
      %p77 = scmp.eq.s32.totalorder %s16, 0
      %p78 = por %p76, %p77
      %p79 = scmp.ne.s32.totalorder %s71, %s73
      %p80 = scmp.eq.s32.totalorder %s21, 3
      %p81 = por %p79, %p80
      %p82 = scmp.ne.s32.totalorder %s73, %s74
      %p83 = scmp.eq.s32.totalorder %s21, 0
      %p84 = por %p82, %p83
      %p85 = scmp.ne.s32.totalorder %s73, %s74
      %p86 = scmp.eq.s32.totalorder %s22, 3
      %p87 = por %p85, %p86
      %p89 = scmp.ne.s32.totalorder %s74, %s88
      %p90 = scmp.eq.s32.totalorder %s22, 0
      %p91 = por %p89, %p90
      %s93 = sadd.s32 %s92, 1
      %p96 = scmp.eq.s32.totalorder %s16, 3
      %p97 = scmp.ne.s32.totalorder %s92, %s94
      %p98 = scmp.eq.s32.totalorder %s16, 0
      %p99 = por %p97, %p98
      %p100 = scmp.ne.s32.totalorder %s92, %s94
      %p101 = scmp.eq.s32.totalorder %s21, 3
      %p102 = por %p100, %p101
      %p103 = scmp.ne.s32.totalorder %s94, %s95
      %p104 = scmp.eq.s32.totalorder %s21, 0
      %p105 = por %p103, %p104
      %p106 = scmp.ne.s32.totalorder %s94, %s95
      %p107 = scmp.eq.s32.totalorder %s22, 3
      %p108 = por %p106, %p107
      %p110 = scmp.ne.s32.totalorder %s95, %s109
      %p111 = scmp.eq.s32.totalorder %s22, 0
      %p112 = por %p110, %p111
      %s114 = sadd.s32 %s113, 1
      %p117 = scmp.eq.s32.totalorder %s16, 3
      %p118 = scmp.ne.s32.totalorder %s113, %s115
      %p119 = scmp.eq.s32.totalorder %s16, 0
      %p120 = por %p118, %p119
      %p121 = scmp.ne.s32.totalorder %s113, %s115
      %p122 = scmp.eq.s32.totalorder %s21, 3
      %p123 = por %p121, %p122
      %p124 = scmp.ne.s32.totalorder %s115, %s116
      %p125 = scmp.eq.s32.totalorder %s21, 0
      %p126 = por %p124, %p125
      %p127 = scmp.ne.s32.totalorder %s115, %s116
      %p128 = scmp.eq.s32.totalorder %s22, 3
      %p129 = por %p127, %p128
      %p131 = scmp.ne.s32.totalorder %s116, %s130
      %p132 = scmp.eq.s32.totalorder %s22, 0
      %p133 = por %p131, %p132
      %s135 = sadd.s32 %s134, 1
      %p138 = scmp.eq.s32.totalorder %s16, 3
      %p139 = scmp.ne.s32.totalorder %s134, %s136
      %p140 = scmp.eq.s32.totalorder %s16, 0
      %p141 = por %p139, %p140
      %p142 = scmp.ne.s32.totalorder %s134, %s136
      %p143 = scmp.eq.s32.totalorder %s21, 3
      %p144 = por %p142, %p143
      %p145 = scmp.ne.s32.totalorder %s136, %s137
      %p146 = scmp.eq.s32.totalorder %s21, 0
      %p147 = por %p145, %p146
      %p148 = scmp.ne.s32.totalorder %s136, %s137
      %p149 = scmp.eq.s32.totalorder %s22, 3
      %p150 = por %p148, %p149
      %p152 = scmp.ne.s32.totalorder %s137, %s151
      %p153 = scmp.eq.s32.totalorder %s22, 0
      %p154 = por %p152, %p153
      %s156 = sadd.s32 %s155, 1
      %p159 = scmp.eq.s32.totalorder %s16, 3
      %p160 = scmp.ne.s32.totalorder %s155, %s157
      %p161 = scmp.eq.s32.totalorder %s16, 0
      %p162 = por %p160, %p161
      %p163 = scmp.ne.s32.totalorder %s155, %s157
      %p164 = scmp.eq.s32.totalorder %s21, 3
      %p165 = por %p163, %p164
      %p166 = scmp.ne.s32.totalorder %s157, %s158
      %p167 = scmp.eq.s32.totalorder %s21, 0
      %p168 = por %p166, %p167
      %p169 = scmp.ne.s32.totalorder %s157, %s158
      %p170 = scmp.eq.s32.totalorder %s22, 3
      %p171 = por %p169, %p170
      %p173 = scmp.ne.s32.totalorder %s158, %s172
      %p174 = scmp.eq.s32.totalorder %s22, 0
      %p175 = por %p173, %p174
      %s176 = ssub.s32 %s16, %s23
      %p177 = scmp.eq.s32.totalorder %s176, 0
      %s179 = sadd.s32 %s178, 1
      %s180 = scalar_select %p177, %s178, %s179
      %p183 = pneg %p177
      %p184 = scmp.eq.s32.totalorder %s16, 3
      %p185 = por %p183, %p184
      %p186 = scmp.ne.s32.totalorder %s178, %s181
      %p187 = scmp.eq.s32.totalorder %s16, 0
      %p188 = por %p186, %p187
      %p189 = scmp.ne.s32.totalorder %s178, %s181
      %p190 = scmp.eq.s32.totalorder %s21, 3
      %p191 = por %p189, %p190
      %p192 = scmp.ne.s32.totalorder %s181, %s182
      %p193 = scmp.eq.s32.totalorder %s21, 0
      %p194 = por %p192, %p193
      %p195 = scmp.ne.s32.totalorder %s181, %s182
      %p196 = scmp.eq.s32.totalorder %s22, 3
      %p197 = por %p195, %p196
      %p199 = scmp.ne.s32.totalorder %s182, %s198
      %p200 = scmp.eq.s32.totalorder %s22, 0
      %p201 = por %p199, %p200
      %p202 = scmp.le.s32.totalorder 1, %s16
      %p203 = scmp.lt.s32.totalorder %s16, 5
      %p204 = pnand %p202, %p203
      %p205 = pneg %p204
      // Predicated region
      $region9: #{tpu_custom_call.1} parent=5 // pred_check
        _
      $region10: #{tpu_custom_call.1} parent=5 // pred_check_branch
        %207 = sbr.rel (%p204) target = $region12
      $region11: #{tpu_custom_call.1} parent=5 // pred_region
        %s208 = ssub.s32 %s16, 1
        // Predicated region
        $region13: #{tpu_custom_call.1} parent=11 // pred_check
          %p209 = pneg %p63
        $region14: #{tpu_custom_call.1} parent=11 // pred_check_branch
          %211 = sbr.rel (%p209) target = $region16
        $region15: #{tpu_custom_call.1} parent=11 // pred_region
          _
        $region16: #{tpu_custom_call.1} parent=11 // pred_fallthru
          _
        // Predicated region
        $region17: #{tpu_custom_call.1} parent=11 // pred_check
          %p212 = pneg %p84
        $region18: #{tpu_custom_call.1} parent=11 // pred_check_branch
          %214 = sbr.rel (%p212) target = $region20
        $region19: #{tpu_custom_call.1} parent=11 // pred_region
          _
        $region20: #{tpu_custom_call.1} parent=11 // pred_fallthru
          _
        // Predicated region
        $region21: #{tpu_custom_call.1} parent=11 // pred_check
          %p215 = pneg %p105
        $region22: #{tpu_custom_call.1} parent=11 // pred_check_branch
          %217 = sbr.rel (%p215) target = $region24
        $region23: #{tpu_custom_call.1} parent=11 // pred_region
          _
        $region24: #{tpu_custom_call.1} parent=11 // pred_fallthru
          _
        // Predicated region
        $region25: #{tpu_custom_call.1} parent=11 // pred_check
          %p218 = pneg %p126
        $region26: #{tpu_custom_call.1} parent=11 // pred_check_branch
          %220 = sbr.rel (%p218) target = $region28
        $region27: #{tpu_custom_call.1} parent=11 // pred_region
          _
        $region28: #{tpu_custom_call.1} parent=11 // pred_fallthru
          _
        // Predicated region
        $region29: #{tpu_custom_call.1} parent=11 // pred_check
          %p221 = pneg %p147
        $region30: #{tpu_custom_call.1} parent=11 // pred_check_branch
          %223 = sbr.rel (%p221) target = $region32
        $region31: #{tpu_custom_call.1} parent=11 // pred_region
          _
        $region32: #{tpu_custom_call.1} parent=11 // pred_fallthru
          _
        // Predicated region
        $region33: #{tpu_custom_call.1} parent=11 // pred_check
          %p224 = pneg %p168
        $region34: #{tpu_custom_call.1} parent=11 // pred_check_branch
          %226 = sbr.rel (%p224) target = $region36
        $region35: #{tpu_custom_call.1} parent=11 // pred_region
          _
        $region36: #{tpu_custom_call.1} parent=11 // pred_fallthru
          _
      $region12: #{tpu_custom_call.1} parent=5 // pred_fallthru
        _
      %p227 = scmp.lt.s32.totalorder %s16, 4
      // Predicated region
      $region37: #{tpu_custom_call.1} parent=5 // pred_check
        %p228 = pneg %p227
      $region38: #{tpu_custom_call.1} parent=5 // pred_check_branch
        %230 = sbr.rel (%p228) target = $region40
      $region39: #{tpu_custom_call.1} parent=5 // pred_region
        // Predicated region
        $region41: #{tpu_custom_call.1} parent=39 // pred_check
          %p231 = pneg %p36
        $region42: #{tpu_custom_call.1} parent=39 // pred_check_branch
          %233 = sbr.rel (%p231) target = $region44
        $region43: #{tpu_custom_call.1} parent=39 // pred_region
          %s234 = smul.u32 64, %s16
          %p235 = scmp.lt.s32.totalorder %s234, 255
          %s236 = scalar_select %p235, %s234, 255
          %s237 = smul.addr %s236, 8
          %s238 = scalar_lea.vmem %s0, %s237
          %s239 = smul.u32 64, %s16
        $region44: #{tpu_custom_call.1} parent=39 // pred_fallthru
          _
      $region40: #{tpu_custom_call.1} parent=5 // pred_fallthru
        _
      %p240 = scmp.le.s32.totalorder 1, %s16
      %p241 = scmp.lt.s32.totalorder %s16, 5
      %p242 = pnand %p240, %p241
      %p243 = pneg %p242
      // Predicated region
      $region45: #{tpu_custom_call.1} parent=5 // pred_check
        _
      $region46: #{tpu_custom_call.1} parent=5 // pred_check_branch
        %245 = sbr.rel (%p242) target = $region48
      $region47: #{tpu_custom_call.1} parent=5 // pred_region
        %s246 = ssub.s32 %s16, 1
        %s247 = smul.u32 64, %s21
        %p248 = scmp.lt.s32.totalorder %s247, 255
        %s249 = scalar_select %p248, %s247, 255
        %s250 = smul.addr %s249, 8
        %s251 = scalar_lea.vmem %s0, %s250
        %p252 = pneg %p42
        %p253 = pneg %p39
        %p254 = pneg %p63
        %p255 = pneg %p60
        %p256 = pneg %p84
        %p257 = pneg %p81
        %p258 = pneg %p105
        %p259 = pneg %p102
        %p260 = pneg %p126
        %p261 = pneg %p123
        %p262 = pneg %p147
        %p263 = pneg %p144
        %p264 = pneg %p168
        %p265 = pneg %p165
        %p266 = pneg %p194
        %p267 = pneg %p191
        %s268 = sand.u32 %s181, 1
        %s269 = scalar_lea.sflag [#allocation3], %s268
        %s270 = sand.u32 %s181, 1
        %s271 = smul.addr %s270, 512
        %s272 = scalar_lea.vmem [#allocation2], %s271
        %s273 = smul.u32 64, %s21
        %p274 = scmp.lt.s32.totalorder %s273, 255
        %s275 = scalar_select %p274, %s273, 255
        %s276 = smul.addr %s275, 8
        %s277 = scalar_lea.vmem %s0, %s276
        %s278 = smul.u32 64, %s21
        %s279 = smul.u32 64, %s21
        %v281 = vld [vmem:[%s277] sm:$0xff]
        %v282 = vld [vmem:[%s277 + $0x8] sm:$0xff]
        %v283 = vld [vmem:[%s277 + $0x10] sm:$0xff]
        %v284 = vld [vmem:[%s277 + $0x18] sm:$0xff]
        %v285 = vld [vmem:[%s277 + $0x20] sm:$0xff]
        %v286 = vld [vmem:[%s277 + $0x28] sm:$0xff]
        %v287 = vld [vmem:[%s277 + $0x30] sm:$0xff]
        %v288 = vld [vmem:[%s277 + $0x38] sm:$0xff]
        %v289 = vld [vmem:[%s277 + $0x40] sm:$0xff]
        %v290 = vld [vmem:[%s277 + $0x48] sm:$0xff]
        %v291 = vld [vmem:[%s277 + $0x50] sm:$0xff]
        %v292 = vld [vmem:[%s277 + $0x58] sm:$0xff]
        %v293 = vld [vmem:[%s277 + $0x60] sm:$0xff]
        %v294 = vld [vmem:[%s277 + $0x68] sm:$0xff]
        %v295 = vld [vmem:[%s277 + $0x70] sm:$0xff]
        %v296 = vld [vmem:[%s277 + $0x78] sm:$0xff]
        %v297 = vld [vmem:[%s277 + $0x80] sm:$0xff]
        %v298 = vld [vmem:[%s277 + $0x88] sm:$0xff]
        %v299 = vld [vmem:[%s277 + $0x90] sm:$0xff]
        %v300 = vld [vmem:[%s277 + $0x98] sm:$0xff]
        %v301 = vld [vmem:[%s277 + $0xa0] sm:$0xff]
        %v302 = vld [vmem:[%s277 + $0xa8] sm:$0xff]
        %v303 = vld [vmem:[%s277 + $0xb0] sm:$0xff]
        %v304 = vld [vmem:[%s277 + $0xb8] sm:$0xff]
        %v305 = vld [vmem:[%s277 + $0xc0] sm:$0xff]
        %v306 = vld [vmem:[%s277 + $0xc8] sm:$0xff]
        %v307 = vld [vmem:[%s277 + $0xd0] sm:$0xff]
        %v308 = vld [vmem:[%s277 + $0xd8] sm:$0xff]
        %v309 = vld [vmem:[%s277 + $0xe0] sm:$0xff]
        %v310 = vld [vmem:[%s277 + $0xe8] sm:$0xff]
        %v311 = vld [vmem:[%s277 + $0xf0] sm:$0xff]
        %v312 = vld [vmem:[%s277 + $0xf8] sm:$0xff]
        %v313 = vld [vmem:[%s277 + $0x100] sm:$0xff]
        %v314 = vld [vmem:[%s277 + $0x108] sm:$0xff]
        %v315 = vld [vmem:[%s277 + $0x110] sm:$0xff]
        %v316 = vld [vmem:[%s277 + $0x118] sm:$0xff]
        %v317 = vld [vmem:[%s277 + $0x120] sm:$0xff]
        %v318 = vld [vmem:[%s277 + $0x128] sm:$0xff]
        %v319 = vld [vmem:[%s277 + $0x130] sm:$0xff]
        %v320 = vld [vmem:[%s277 + $0x138] sm:$0xff]
        %v321 = vld [vmem:[%s277 + $0x140] sm:$0xff]
        %v322 = vld [vmem:[%s277 + $0x148] sm:$0xff]
        %v323 = vld [vmem:[%s277 + $0x150] sm:$0xff]
        %v324 = vld [vmem:[%s277 + $0x158] sm:$0xff]
        %v325 = vld [vmem:[%s277 + $0x160] sm:$0xff]
        %v326 = vld [vmem:[%s277 + $0x168] sm:$0xff]
        %v327 = vld [vmem:[%s277 + $0x170] sm:$0xff]
        %v328 = vld [vmem:[%s277 + $0x178] sm:$0xff]
        %v329 = vld [vmem:[%s277 + $0x180] sm:$0xff]
        %v330 = vld [vmem:[%s277 + $0x188] sm:$0xff]
        %v331 = vld [vmem:[%s277 + $0x190] sm:$0xff]
        %v332 = vld [vmem:[%s277 + $0x198] sm:$0xff]
        %v333 = vld [vmem:[%s277 + $0x1a0] sm:$0xff]
        %v334 = vld [vmem:[%s277 + $0x1a8] sm:$0xff]
        %v335 = vld [vmem:[%s277 + $0x1b0] sm:$0xff]
        %v336 = vld [vmem:[%s277 + $0x1b8] sm:$0xff]
        %v337 = vld [vmem:[%s277 + $0x1c0] sm:$0xff]
        %v338 = vld [vmem:[%s277 + $0x1c8] sm:$0xff]
        %v339 = vld [vmem:[%s277 + $0x1d0] sm:$0xff]
        %v340 = vld [vmem:[%s277 + $0x1d8] sm:$0xff]
        %v341 = vld [vmem:[%s277 + $0x1e0] sm:$0xff]
        %v342 = vld [vmem:[%s277 + $0x1e8] sm:$0xff]
        %v343 = vld [vmem:[%s277 + $0x1f0] sm:$0xff]
        %v344 = vld [vmem:[%s277 + $0x1f8] sm:$0xff]
        %v345 = vpack.c.bf16 %v282, %v281
        %v346 = vpack.c.bf16 %v284, %v283
        %v347 = vpack.c.bf16 %v286, %v285
        %v348 = vpack.c.bf16 %v288, %v287
        %v349 = vpack.c.bf16 %v290, %v289
        %v350 = vpack.c.bf16 %v292, %v291
        %v351 = vpack.c.bf16 %v294, %v293
        %v352 = vpack.c.bf16 %v296, %v295
        %v353 = vpack.c.bf16 %v298, %v297
        %v354 = vpack.c.bf16 %v300, %v299
        %v355 = vpack.c.bf16 %v302, %v301
        %v356 = vpack.c.bf16 %v304, %v303
        %v357 = vpack.c.bf16 %v306, %v305
        %v358 = vpack.c.bf16 %v308, %v307
        %v359 = vpack.c.bf16 %v310, %v309
        %v360 = vpack.c.bf16 %v312, %v311
        %v361 = vpack.c.bf16 %v314, %v313
        %v362 = vpack.c.bf16 %v316, %v315
        %v363 = vpack.c.bf16 %v318, %v317
        %v364 = vpack.c.bf16 %v320, %v319
        %v365 = vpack.c.bf16 %v322, %v321
        %v366 = vpack.c.bf16 %v324, %v323
        %v367 = vpack.c.bf16 %v326, %v325
        %v368 = vpack.c.bf16 %v328, %v327
        %v369 = vpack.c.bf16 %v330, %v329
        %v370 = vpack.c.bf16 %v332, %v331
        %v371 = vpack.c.bf16 %v334, %v333
        %v372 = vpack.c.bf16 %v336, %v335
        %v373 = vpack.c.bf16 %v338, %v337
        %v374 = vpack.c.bf16 %v340, %v339
        %v375 = vpack.c.bf16 %v342, %v341
        %v376 = vpack.c.bf16 %v344, %v343
        %v377 = vld [vmem:[%s1] sm:$0xf]
        %v378 = vld [vmem:[%s1 + $0x4] sm:$0xf]
        %v379 = vld [vmem:[%s1 + $0x8] sm:$0xf]
        %v380 = vld [vmem:[%s1 + $0xc] sm:$0xf]
        %v381 = vld [vmem:[%s2] sm:$0x1]
        %v382 = vlaneseq
        %v383 = vshrl.u32 %v382, 7
        %v384 = vsub.s32 0, %v383
        %v385 = vrot.slane %v381, %v384
        %v390 = vunpack.c.l.b16 %v377
        %v391 = vunpack.c.l.b16 %v378
        %v392 = vunpack.c.l.b16 %v379
        %v393 = vunpack.c.l.b16 %v380
        %v394 = vpack.c.b16 %v391, %v390
        %v395 = vpack.c.b16 %v393, %v392
        %vm398 = vcmask 261120
        %v400 = vsel %vm398, %v345, 0
        %v403 = vsel %vm398, %v346, 0
        %v406 = vsel %vm398, %v347, 0
        %v409 = vsel %vm398, %v348, 0
        %v412 = vsel %vm398, %v349, 0
        %v415 = vsel %vm398, %v350, 0
        %v418 = vsel %vm398, %v351, 0
        %v421 = vsel %vm398, %v352, 0
        %v424 = vsel %vm398, %v353, 0
        %v427 = vsel %vm398, %v354, 0
        %v430 = vsel %vm398, %v355, 0
        %v433 = vsel %vm398, %v356, 0
        %v436 = vsel %vm398, %v357, 0
        %v439 = vsel %vm398, %v358, 0
        %v442 = vsel %vm398, %v359, 0
        %v445 = vsel %vm398, %v360, 0
        %v448 = vsel %vm398, %v361, 0
        %v451 = vsel %vm398, %v362, 0
        %v454 = vsel %vm398, %v363, 0
        %v457 = vsel %vm398, %v364, 0
        %v460 = vsel %vm398, %v365, 0
        %v463 = vsel %vm398, %v366, 0
        %v466 = vsel %vm398, %v367, 0
        %v469 = vsel %vm398, %v368, 0
        %v472 = vsel %vm398, %v369, 0
        %v475 = vsel %vm398, %v370, 0
        %v478 = vsel %vm398, %v371, 0
        %v481 = vsel %vm398, %v372, 0
        %v484 = vsel %vm398, %v373, 0
        %v487 = vsel %vm398, %v374, 0
        %v490 = vsel %vm398, %v375, 0
        %v493 = vsel %vm398, %v376, 0
        %495 = vmatprep.subr.bf16.mxu0 0
        %496 = vmatpush1.bf16.msra.mxu0 %v394
        %497 = vmatprep.subr.bf16.mxu0 0
        %498 = vmatpush1.bf16.msra.mxu0 %v395
        %499 = vmatprep.subr.bf16.mxu0 0
        %500 = vmatpush1.bf16.msra.mxu0 0
        %501 = vmatprep.subr.bf16.mxu0 0
        %502 = vmatpush1.bf16.msra.mxu0 0
        %503 = vmatprep.subr.bf16.mxu0 0
        %504 = vmatpush1.bf16.msra.mxu0 0
        %505 = vmatprep.subr.bf16.mxu0 0
        %506 = vmatpush1.bf16.msra.mxu0 0
        %507 = vmatprep.subr.bf16.mxu0 0
        %508 = vmatpush1.bf16.msra.mxu0 0
        %509 = vmatprep.subr.bf16.mxu0 0
        %510 = vmatpush1.bf16.msra.mxu0 0
        %511 = vmatprep.subr.bf16.mxu0 0
        %512 = vmatpush1.bf16.msra.mxu0 0
        %513 = vmatprep.subr.bf16.mxu0 0
        %514 = vmatpush1.bf16.msra.mxu0 0
        %515 = vmatprep.subr.bf16.mxu0 0
        %516 = vmatpush1.bf16.msra.mxu0 0
        %517 = vmatprep.subr.bf16.mxu0 0
        %518 = vmatpush1.bf16.msra.mxu0 0
        %519 = vmatprep.subr.bf16.mxu0 0
        %520 = vmatpush1.bf16.msra.mxu0 0
        %521 = vmatprep.subr.bf16.mxu0 0
        %522 = vmatpush1.bf16.msra.mxu0 0
        %523 = vmatprep.subr.bf16.mxu0 0
        %524 = vmatpush1.bf16.msra.mxu0 0
        %525 = vmatprep.subr.bf16.mxu0 0
        %526 = vmatpush1.bf16.msra.mxu0 0
        %527 = vmatprep.mubr.bf16.mxu0 0
        %528 = vmatmul.mubr.bf16.gmra.mrb[0].mxu0 %v400
        %v529 = vpop.f32.mrb[0].mxu0
        %v530 = vadd.f32 %v385, %v529
        %v531 = vpop.f32.mrb[0].mxu0
        %v532 = vpop.f32.mrb[0].mxu0
        %v533 = vadd.f32 %v385, %v532
        %v534 = vpop.f32.mrb[0].mxu0
        %535 = vmatprep.mubr.bf16.mxu0 0
        %536 = vmatmul.mubr.bf16.gmra.mrb[0].mxu0 %v403
        %v537 = vpop.f32.mrb[0].mxu0
        %v538 = vadd.f32 %v385, %v537
        %v539 = vpop.f32.mrb[0].mxu0
        %v540 = vpop.f32.mrb[0].mxu0
        %v541 = vadd.f32 %v385, %v540
        %v542 = vpop.f32.mrb[0].mxu0
        %543 = vmatprep.mubr.bf16.mxu0 0
        %544 = vmatmul.mubr.bf16.gmra.mrb[0].mxu0 %v406
        %v545 = vpop.f32.mrb[0].mxu0
        %v546 = vadd.f32 %v385, %v545
        %v547 = vpop.f32.mrb[0].mxu0
        %v548 = vpop.f32.mrb[0].mxu0
        %v549 = vadd.f32 %v385, %v548
        %v550 = vpop.f32.mrb[0].mxu0
        %551 = vmatprep.mubr.bf16.mxu0 0
        %552 = vmatmul.mubr.bf16.gmra.mrb[0].mxu0 %v409
        %v553 = vpop.f32.mrb[0].mxu0
        %v554 = vadd.f32 %v385, %v553
        %v555 = vpop.f32.mrb[0].mxu0
        %v556 = vpop.f32.mrb[0].mxu0
        %v557 = vadd.f32 %v385, %v556
        %v558 = vpop.f32.mrb[0].mxu0
        %559 = vmatprep.mubr.bf16.mxu0 0
        %560 = vmatmul.mubr.bf16.gmra.mrb[0].mxu0 %v412
        %v561 = vpop.f32.mrb[0].mxu0
        %v562 = vadd.f32 %v385, %v561
        %v563 = vpop.f32.mrb[0].mxu0
        %v564 = vpop.f32.mrb[0].mxu0
        %v565 = vadd.f32 %v385, %v564
        %v566 = vpop.f32.mrb[0].mxu0
        %567 = vmatprep.mubr.bf16.mxu0 0
        %568 = vmatmul.mubr.bf16.gmra.mrb[0].mxu0 %v415
        %v569 = vpop.f32.mrb[0].mxu0
        %v570 = vadd.f32 %v385, %v569
        %v571 = vpop.f32.mrb[0].mxu0
        %v572 = vpop.f32.mrb[0].mxu0
        %v573 = vadd.f32 %v385, %v572
        %v574 = vpop.f32.mrb[0].mxu0
        %575 = vmatprep.mubr.bf16.mxu0 0
        %576 = vmatmul.mubr.bf16.gmra.mrb[0].mxu0 %v418
        %v577 = vpop.f32.mrb[0].mxu0
        %v578 = vadd.f32 %v385, %v577
        %v579 = vpop.f32.mrb[0].mxu0
        %v580 = vpop.f32.mrb[0].mxu0
        %v581 = vadd.f32 %v385, %v580
        %v582 = vpop.f32.mrb[0].mxu0
        %583 = vmatprep.mubr.bf16.mxu0 0
        %584 = vmatmul.mubr.bf16.gmra.mrb[0].mxu0 %v421
        %v585 = vpop.f32.mrb[0].mxu0
        %v586 = vadd.f32 %v385, %v585
        %v587 = vpop.f32.mrb[0].mxu0
        %v588 = vpop.f32.mrb[0].mxu0
        %v589 = vadd.f32 %v385, %v588
        %v590 = vpop.f32.mrb[0].mxu0
        %591 = vmatprep.mubr.bf16.mxu0 0
        %592 = vmatmul.mubr.bf16.gmra.mrb[0].mxu0 %v424
        %v593 = vpop.f32.mrb[0].mxu0
        %v594 = vadd.f32 %v385, %v593
        %v595 = vpop.f32.mrb[0].mxu0
        %v596 = vpop.f32.mrb[0].mxu0
        %v597 = vadd.f32 %v385, %v596
        %v598 = vpop.f32.mrb[0].mxu0
        %599 = vmatprep.mubr.bf16.mxu0 0
        %600 = vmatmul.mubr.bf16.gmra.mrb[0].mxu0 %v427
        %v601 = vpop.f32.mrb[0].mxu0
        %v602 = vadd.f32 %v385, %v601
        %v603 = vpop.f32.mrb[0].mxu0
        %v604 = vpop.f32.mrb[0].mxu0
        %v605 = vadd.f32 %v385, %v604
        %v606 = vpop.f32.mrb[0].mxu0
        %607 = vmatprep.mubr.bf16.mxu0 0
        %608 = vmatmul.mubr.bf16.gmra.mrb[0].mxu0 %v430
        %v609 = vpop.f32.mrb[0].mxu0
        %v610 = vadd.f32 %v385, %v609
        %v611 = vpop.f32.mrb[0].mxu0
        %v612 = vpop.f32.mrb[0].mxu0
        %v613 = vadd.f32 %v385, %v612
        %v614 = vpop.f32.mrb[0].mxu0
        %615 = vmatprep.mubr.bf16.mxu0 0
        %616 = vmatmul.mubr.bf16.gmra.mrb[0].mxu0 %v433
        %v617 = vpop.f32.mrb[0].mxu0
        %v618 = vadd.f32 %v385, %v617
        %v619 = vpop.f32.mrb[0].mxu0
        %v620 = vpop.f32.mrb[0].mxu0
        %v621 = vadd.f32 %v385, %v620
        %v622 = vpop.f32.mrb[0].mxu0
        %623 = vmatprep.mubr.bf16.mxu0 0
        %624 = vmatmul.mubr.bf16.gmra.mrb[0].mxu0 %v436
        %v625 = vpop.f32.mrb[0].mxu0
        %v626 = vadd.f32 %v385, %v625
        %v627 = vpop.f32.mrb[0].mxu0
        %v628 = vpop.f32.mrb[0].mxu0
        %v629 = vadd.f32 %v385, %v628
        %v630 = vpop.f32.mrb[0].mxu0
        %631 = vmatprep.mubr.bf16.mxu0 0
        %632 = vmatmul.mubr.bf16.gmra.mrb[0].mxu0 %v439
        %v633 = vpop.f32.mrb[0].mxu0
        %v634 = vadd.f32 %v385, %v633
        %v635 = vpop.f32.mrb[0].mxu0
        %v636 = vpop.f32.mrb[0].mxu0
        %v637 = vadd.f32 %v385, %v636
        %v638 = vpop.f32.mrb[0].mxu0
        %639 = vmatprep.mubr.bf16.mxu0 0
        %640 = vmatmul.mubr.bf16.gmra.mrb[0].mxu0 %v442
        %v641 = vpop.f32.mrb[0].mxu0
        %v642 = vadd.f32 %v385, %v641
        %v643 = vpop.f32.mrb[0].mxu0
        %v644 = vpop.f32.mrb[0].mxu0
        %v645 = vadd.f32 %v385, %v644
        %v646 = vpop.f32.mrb[0].mxu0
        %647 = vmatprep.mubr.bf16.mxu0 0
        %648 = vmatmul.mubr.bf16.gmra.mrb[0].mxu0 %v445
        %v649 = vpop.f32.mrb[0].mxu0
        %v650 = vadd.f32 %v385, %v649
        %v651 = vpop.f32.mrb[0].mxu0
        %v652 = vpop.f32.mrb[0].mxu0
        %v653 = vadd.f32 %v385, %v652
        %v654 = vpop.f32.mrb[0].mxu0
        %655 = vmatprep.mubr.bf16.mxu0 0
        %656 = vmatmul.mubr.bf16.gmra.mrb[0].mxu0 %v448
        %v657 = vpop.f32.mrb[0].mxu0
        %v658 = vadd.f32 %v385, %v657
        %v659 = vpop.f32.mrb[0].mxu0
        %v660 = vpop.f32.mrb[0].mxu0
        %v661 = vadd.f32 %v385, %v660
        %v662 = vpop.f32.mrb[0].mxu0
        %663 = vmatprep.mubr.bf16.mxu0 0
        %664 = vmatmul.mubr.bf16.gmra.mrb[0].mxu0 %v451
        %v665 = vpop.f32.mrb[0].mxu0
        %v666 = vadd.f32 %v385, %v665
        %v667 = vpop.f32.mrb[0].mxu0
        %v668 = vpop.f32.mrb[0].mxu0
        %v669 = vadd.f32 %v385, %v668
        %v670 = vpop.f32.mrb[0].mxu0
        %671 = vmatprep.mubr.bf16.mxu0 0
        %672 = vmatmul.mubr.bf16.gmra.mrb[0].mxu0 %v454
        %v673 = vpop.f32.mrb[0].mxu0
        %v674 = vadd.f32 %v385, %v673
        %v675 = vpop.f32.mrb[0].mxu0
        %v676 = vpop.f32.mrb[0].mxu0
        %v677 = vadd.f32 %v385, %v676
        %v678 = vpop.f32.mrb[0].mxu0
        %679 = vmatprep.mubr.bf16.mxu0 0
        %680 = vmatmul.mubr.bf16.gmra.mrb[0].mxu0 %v457
        %v681 = vpop.f32.mrb[0].mxu0
        %v682 = vadd.f32 %v385, %v681
        %v683 = vpop.f32.mrb[0].mxu0
        %v684 = vpop.f32.mrb[0].mxu0
        %v685 = vadd.f32 %v385, %v684
        %v686 = vpop.f32.mrb[0].mxu0
        %687 = vmatprep.mubr.bf16.mxu0 0
        %688 = vmatmul.mubr.bf16.gmra.mrb[0].mxu0 %v460
        %v689 = vpop.f32.mrb[0].mxu0
        %v690 = vadd.f32 %v385, %v689
        %v691 = vpop.f32.mrb[0].mxu0
        %v692 = vpop.f32.mrb[0].mxu0
        %v693 = vadd.f32 %v385, %v692
        %v694 = vpop.f32.mrb[0].mxu0
        %695 = vmatprep.mubr.bf16.mxu0 0
        %696 = vmatmul.mubr.bf16.gmra.mrb[0].mxu0 %v463
        %v697 = vpop.f32.mrb[0].mxu0
        %v698 = vadd.f32 %v385, %v697
        %v699 = vpop.f32.mrb[0].mxu0
        %v700 = vpop.f32.mrb[0].mxu0
        %v701 = vadd.f32 %v385, %v700
        %v702 = vpop.f32.mrb[0].mxu0
        %703 = vmatprep.mubr.bf16.mxu0 0
        %704 = vmatmul.mubr.bf16.gmra.mrb[0].mxu0 %v466
        %v705 = vpop.f32.mrb[0].mxu0
        %v706 = vadd.f32 %v385, %v705
        %v707 = vpop.f32.mrb[0].mxu0
        %v708 = vpop.f32.mrb[0].mxu0
        %v709 = vadd.f32 %v385, %v708
        %v710 = vpop.f32.mrb[0].mxu0
        %711 = vmatprep.mubr.bf16.mxu0 0
        %712 = vmatmul.mubr.bf16.gmra.mrb[0].mxu0 %v469
        %v713 = vpop.f32.mrb[0].mxu0
        %v714 = vadd.f32 %v385, %v713
        %v715 = vpop.f32.mrb[0].mxu0
        %v716 = vpop.f32.mrb[0].mxu0
        %v717 = vadd.f32 %v385, %v716
        %v718 = vpop.f32.mrb[0].mxu0
        %719 = vmatprep.mubr.bf16.mxu0 0
        %720 = vmatmul.mubr.bf16.gmra.mrb[0].mxu0 %v472
        %v721 = vpop.f32.mrb[0].mxu0
        %v722 = vadd.f32 %v385, %v721
        %v723 = vpop.f32.mrb[0].mxu0
        %v724 = vpop.f32.mrb[0].mxu0
        %v725 = vadd.f32 %v385, %v724
        %v726 = vpop.f32.mrb[0].mxu0
        %727 = vmatprep.mubr.bf16.mxu0 0
        %728 = vmatmul.mubr.bf16.gmra.mrb[0].mxu0 %v475
        %v729 = vpop.f32.mrb[0].mxu0
        %v730 = vadd.f32 %v385, %v729
        %v731 = vpop.f32.mrb[0].mxu0
        %v732 = vpop.f32.mrb[0].mxu0
        %v733 = vadd.f32 %v385, %v732
        %v734 = vpop.f32.mrb[0].mxu0
        %735 = vmatprep.mubr.bf16.mxu0 0
        %736 = vmatmul.mubr.bf16.gmra.mrb[0].mxu0 %v478
        %v737 = vpop.f32.mrb[0].mxu0
        %v738 = vadd.f32 %v385, %v737
        %v739 = vpop.f32.mrb[0].mxu0
        %v740 = vpop.f32.mrb[0].mxu0
        %v741 = vadd.f32 %v385, %v740
        %v742 = vpop.f32.mrb[0].mxu0
        %743 = vmatprep.mubr.bf16.mxu0 0
        %744 = vmatmul.mubr.bf16.gmra.mrb[0].mxu0 %v481
        %v745 = vpop.f32.mrb[0].mxu0
        %v746 = vadd.f32 %v385, %v745
        %v747 = vpop.f32.mrb[0].mxu0
        %v748 = vpop.f32.mrb[0].mxu0
        %v749 = vadd.f32 %v385, %v748
        %v750 = vpop.f32.mrb[0].mxu0
        %751 = vmatprep.mubr.bf16.mxu0 0
        %752 = vmatmul.mubr.bf16.gmra.mrb[0].mxu0 %v484
        %v753 = vpop.f32.mrb[0].mxu0
        %v754 = vadd.f32 %v385, %v753
        %v755 = vpop.f32.mrb[0].mxu0
        %v756 = vpop.f32.mrb[0].mxu0
        %v757 = vadd.f32 %v385, %v756
        %v758 = vpop.f32.mrb[0].mxu0
        %759 = vmatprep.mubr.bf16.mxu0 0
        %760 = vmatmul.mubr.bf16.gmra.mrb[0].mxu0 %v487
        %v761 = vpop.f32.mrb[0].mxu0
        %v762 = vadd.f32 %v385, %v761
        %v763 = vpop.f32.mrb[0].mxu0
        %v764 = vpop.f32.mrb[0].mxu0
        %v765 = vadd.f32 %v385, %v764
        %v766 = vpop.f32.mrb[0].mxu0
        %767 = vmatprep.mubr.bf16.mxu0 0
        %768 = vmatmul.mubr.bf16.gmra.mrb[0].mxu0 %v490
        %v769 = vpop.f32.mrb[0].mxu0
        %v770 = vadd.f32 %v385, %v769
        %v771 = vpop.f32.mrb[0].mxu0
        %v772 = vpop.f32.mrb[0].mxu0
        %v773 = vadd.f32 %v385, %v772
        %v774 = vpop.f32.mrb[0].mxu0
        %775 = vmatprep.mubr.bf16.mxu0 0
        %776 = vmatmul.mubr.bf16.gmra.mrb[0].mxu0 %v493
        %v777 = vpop.f32.mrb[0].mxu0
        %v778 = vadd.f32 %v385, %v777
        %v779 = vpop.f32.mrb[0].mxu0
        %v780 = vpop.f32.mrb[0].mxu0
        %v781 = vadd.f32 %v385, %v780
        %v782 = vpop.f32.mrb[0].mxu0
        %783 = vdwg.mxu0
        %v784 = vmax.f32 %v530, 0.0
        %v785 = vmax.f32 %v533, 0.0
        %v786 = vmax.f32 %v538, 0.0
        %v787 = vmax.f32 %v541, 0.0
        %v788 = vmax.f32 %v546, 0.0
        %v789 = vmax.f32 %v549, 0.0
        %v790 = vmax.f32 %v554, 0.0
        %v791 = vmax.f32 %v557, 0.0
        %v792 = vmax.f32 %v562, 0.0
        %v793 = vmax.f32 %v565, 0.0
        %v794 = vmax.f32 %v570, 0.0
        %v795 = vmax.f32 %v573, 0.0
        %v796 = vmax.f32 %v578, 0.0
        %v797 = vmax.f32 %v581, 0.0
        %v798 = vmax.f32 %v586, 0.0
        %v799 = vmax.f32 %v589, 0.0
        %v800 = vmax.f32 %v594, 0.0
        %v801 = vmax.f32 %v597, 0.0
        %v802 = vmax.f32 %v602, 0.0
        %v803 = vmax.f32 %v605, 0.0
        %v804 = vmax.f32 %v610, 0.0
        %v805 = vmax.f32 %v613, 0.0
        %v806 = vmax.f32 %v618, 0.0
        %v807 = vmax.f32 %v621, 0.0
        %v808 = vmax.f32 %v626, 0.0
        %v809 = vmax.f32 %v629, 0.0
        %v810 = vmax.f32 %v634, 0.0
        %v811 = vmax.f32 %v637, 0.0
        %v812 = vmax.f32 %v642, 0.0
        %v813 = vmax.f32 %v645, 0.0
        %v814 = vmax.f32 %v650, 0.0
        %v815 = vmax.f32 %v653, 0.0
        %v816 = vmax.f32 %v658, 0.0
        %v817 = vmax.f32 %v661, 0.0
        %v818 = vmax.f32 %v666, 0.0
        %v819 = vmax.f32 %v669, 0.0
        %v820 = vmax.f32 %v674, 0.0
        %v821 = vmax.f32 %v677, 0.0
        %v822 = vmax.f32 %v682, 0.0
        %v823 = vmax.f32 %v685, 0.0
        %v824 = vmax.f32 %v690, 0.0
        %v825 = vmax.f32 %v693, 0.0
        %v826 = vmax.f32 %v698, 0.0
        %v827 = vmax.f32 %v701, 0.0
        %v828 = vmax.f32 %v706, 0.0
        %v829 = vmax.f32 %v709, 0.0
        %v830 = vmax.f32 %v714, 0.0
        %v831 = vmax.f32 %v717, 0.0
        %v832 = vmax.f32 %v722, 0.0
        %v833 = vmax.f32 %v725, 0.0
        %v834 = vmax.f32 %v730, 0.0
        %v835 = vmax.f32 %v733, 0.0
        %v836 = vmax.f32 %v738, 0.0
        %v837 = vmax.f32 %v741, 0.0
        %v838 = vmax.f32 %v746, 0.0
        %v839 = vmax.f32 %v749, 0.0
        %v840 = vmax.f32 %v754, 0.0
        %v841 = vmax.f32 %v757, 0.0
        %v842 = vmax.f32 %v762, 0.0
        %v843 = vmax.f32 %v765, 0.0
        %v844 = vmax.f32 %v770, 0.0
        %v845 = vmax.f32 %v773, 0.0
        %v846 = vmax.f32 %v778, 0.0
        %v847 = vmax.f32 %v781, 0.0
        %v848 = vld [vmem:[%s2 + $0x1] sm:$0x1]
        %v849 = vld [vmem:[%s2 + $0x2] sm:$0x1]
        %vm850 = vcmask 523264
        %v851 = vsel %vm850, %v784, 0.0
        %852 = vadd.xlane.f32.xlu0 %v851
        %v853 = vpop.xlane.xlu0 %852
        %v854 = vsel %vm850, %v785, 0.0
        %855 = vadd.xlane.f32.xlu0 %v854
        %v856 = vpop.xlane.xlu0 %855
        %v857 = vsel %vm850, %v786, 0.0
        %858 = vadd.xlane.f32.xlu0 %v857
        %v859 = vpop.xlane.xlu0 %858
        %v860 = vsel %vm850, %v787, 0.0
        %861 = vadd.xlane.f32.xlu0 %v860
        %v862 = vpop.xlane.xlu0 %861
        %v863 = vsel %vm850, %v788, 0.0
        %864 = vadd.xlane.f32.xlu0 %v863
        %v865 = vpop.xlane.xlu0 %864
        %v866 = vsel %vm850, %v789, 0.0
        %867 = vadd.xlane.f32.xlu0 %v866
        %v868 = vpop.xlane.xlu0 %867
        %v869 = vsel %vm850, %v790, 0.0
        %870 = vadd.xlane.f32.xlu0 %v869
        %v871 = vpop.xlane.xlu0 %870
        %v872 = vsel %vm850, %v791, 0.0
        %873 = vadd.xlane.f32.xlu0 %v872
        %v874 = vpop.xlane.xlu0 %873
        %v875 = vsel %vm850, %v792, 0.0
        %876 = vadd.xlane.f32.xlu0 %v875
        %v877 = vpop.xlane.xlu0 %876
        %v878 = vsel %vm850, %v793, 0.0
        %879 = vadd.xlane.f32.xlu0 %v878
        %v880 = vpop.xlane.xlu0 %879
        %v881 = vsel %vm850, %v794, 0.0
        %882 = vadd.xlane.f32.xlu0 %v881
        %v883 = vpop.xlane.xlu0 %882
        %v884 = vsel %vm850, %v795, 0.0
        %885 = vadd.xlane.f32.xlu0 %v884
        %v886 = vpop.xlane.xlu0 %885
        %v887 = vsel %vm850, %v796, 0.0
        %888 = vadd.xlane.f32.xlu0 %v887
        %v889 = vpop.xlane.xlu0 %888
        %v890 = vsel %vm850, %v797, 0.0
        %891 = vadd.xlane.f32.xlu0 %v890
        %v892 = vpop.xlane.xlu0 %891
        %v893 = vsel %vm850, %v798, 0.0
        %894 = vadd.xlane.f32.xlu0 %v893
        %v895 = vpop.xlane.xlu0 %894
        %v896 = vsel %vm850, %v799, 0.0
        %897 = vadd.xlane.f32.xlu0 %v896
        %v898 = vpop.xlane.xlu0 %897
        %v899 = vsel %vm850, %v800, 0.0
        %900 = vadd.xlane.f32.xlu0 %v899
        %v901 = vpop.xlane.xlu0 %900
        %v902 = vsel %vm850, %v801, 0.0
        %903 = vadd.xlane.f32.xlu0 %v902
        %v904 = vpop.xlane.xlu0 %903
        %v905 = vsel %vm850, %v802, 0.0
        %906 = vadd.xlane.f32.xlu0 %v905
        %v907 = vpop.xlane.xlu0 %906
        %v908 = vsel %vm850, %v803, 0.0
        %909 = vadd.xlane.f32.xlu0 %v908
        %v910 = vpop.xlane.xlu0 %909
        %v911 = vsel %vm850, %v804, 0.0
        %912 = vadd.xlane.f32.xlu0 %v911
        %v913 = vpop.xlane.xlu0 %912
        %v914 = vsel %vm850, %v805, 0.0
        %915 = vadd.xlane.f32.xlu0 %v914
        %v916 = vpop.xlane.xlu0 %915
        %v917 = vsel %vm850, %v806, 0.0
        %918 = vadd.xlane.f32.xlu0 %v917
        %v919 = vpop.xlane.xlu0 %918
        %v920 = vsel %vm850, %v807, 0.0
        %921 = vadd.xlane.f32.xlu0 %v920
        %v922 = vpop.xlane.xlu0 %921
        %v923 = vsel %vm850, %v808, 0.0
        %924 = vadd.xlane.f32.xlu0 %v923
        %v925 = vpop.xlane.xlu0 %924
        %v926 = vsel %vm850, %v809, 0.0
        %927 = vadd.xlane.f32.xlu0 %v926
        %v928 = vpop.xlane.xlu0 %927
        %v929 = vsel %vm850, %v810, 0.0
        %930 = vadd.xlane.f32.xlu0 %v929
        %v931 = vpop.xlane.xlu0 %930
        %v932 = vsel %vm850, %v811, 0.0
        %933 = vadd.xlane.f32.xlu0 %v932
        %v934 = vpop.xlane.xlu0 %933
        %v935 = vsel %vm850, %v812, 0.0
        %936 = vadd.xlane.f32.xlu0 %v935
        %v937 = vpop.xlane.xlu0 %936
        %v938 = vsel %vm850, %v813, 0.0
        %939 = vadd.xlane.f32.xlu0 %v938
        %v940 = vpop.xlane.xlu0 %939
        %v941 = vsel %vm850, %v814, 0.0
        %942 = vadd.xlane.f32.xlu0 %v941
        %v943 = vpop.xlane.xlu0 %942
        %v944 = vsel %vm850, %v815, 0.0
        %945 = vadd.xlane.f32.xlu0 %v944
        %v946 = vpop.xlane.xlu0 %945
        %v947 = vsel %vm850, %v816, 0.0
        %948 = vadd.xlane.f32.xlu0 %v947
        %v949 = vpop.xlane.xlu0 %948
        %v950 = vsel %vm850, %v817, 0.0
        %951 = vadd.xlane.f32.xlu0 %v950
        %v952 = vpop.xlane.xlu0 %951
        %v953 = vsel %vm850, %v818, 0.0
        %954 = vadd.xlane.f32.xlu0 %v953
        %v955 = vpop.xlane.xlu0 %954
        %v956 = vsel %vm850, %v819, 0.0
        %957 = vadd.xlane.f32.xlu0 %v956
        %v958 = vpop.xlane.xlu0 %957
        %v959 = vsel %vm850, %v820, 0.0
        %960 = vadd.xlane.f32.xlu0 %v959
        %v961 = vpop.xlane.xlu0 %960
        %v962 = vsel %vm850, %v821, 0.0
        %963 = vadd.xlane.f32.xlu0 %v962
        %v964 = vpop.xlane.xlu0 %963
        %v965 = vsel %vm850, %v822, 0.0
        %966 = vadd.xlane.f32.xlu0 %v965
        %v967 = vpop.xlane.xlu0 %966
        %v968 = vsel %vm850, %v823, 0.0
        %969 = vadd.xlane.f32.xlu0 %v968
        %v970 = vpop.xlane.xlu0 %969
        %v971 = vsel %vm850, %v824, 0.0
        %972 = vadd.xlane.f32.xlu0 %v971
        %v973 = vpop.xlane.xlu0 %972
        %v974 = vsel %vm850, %v825, 0.0
        %975 = vadd.xlane.f32.xlu0 %v974
        %v976 = vpop.xlane.xlu0 %975
        %v977 = vsel %vm850, %v826, 0.0
        %978 = vadd.xlane.f32.xlu0 %v977
        %v979 = vpop.xlane.xlu0 %978
        %v980 = vsel %vm850, %v827, 0.0
        %981 = vadd.xlane.f32.xlu0 %v980
        %v982 = vpop.xlane.xlu0 %981
        %v983 = vsel %vm850, %v828, 0.0
        %984 = vadd.xlane.f32.xlu0 %v983
        %v985 = vpop.xlane.xlu0 %984
        %v986 = vsel %vm850, %v829, 0.0
        %987 = vadd.xlane.f32.xlu0 %v986
        %v988 = vpop.xlane.xlu0 %987
        %v989 = vsel %vm850, %v830, 0.0
        %990 = vadd.xlane.f32.xlu0 %v989
        %v991 = vpop.xlane.xlu0 %990
        %v992 = vsel %vm850, %v831, 0.0
        %993 = vadd.xlane.f32.xlu0 %v992
        %v994 = vpop.xlane.xlu0 %993
        %v995 = vsel %vm850, %v832, 0.0
        %996 = vadd.xlane.f32.xlu0 %v995
        %v997 = vpop.xlane.xlu0 %996
        %v998 = vsel %vm850, %v833, 0.0
        %999 = vadd.xlane.f32.xlu0 %v998
        %v1000 = vpop.xlane.xlu0 %999
        %v1001 = vsel %vm850, %v834, 0.0
        %1002 = vadd.xlane.f32.xlu0 %v1001
        %v1003 = vpop.xlane.xlu0 %1002
        %v1004 = vsel %vm850, %v835, 0.0
        %1005 = vadd.xlane.f32.xlu0 %v1004
        %v1006 = vpop.xlane.xlu0 %1005
        %v1007 = vsel %vm850, %v836, 0.0
        %1008 = vadd.xlane.f32.xlu0 %v1007
        %v1009 = vpop.xlane.xlu0 %1008
        %v1010 = vsel %vm850, %v837, 0.0
        %1011 = vadd.xlane.f32.xlu0 %v1010
        %v1012 = vpop.xlane.xlu0 %1011
        %v1013 = vsel %vm850, %v838, 0.0
        %1014 = vadd.xlane.f32.xlu0 %v1013
        %v1015 = vpop.xlane.xlu0 %1014
        %v1016 = vsel %vm850, %v839, 0.0
        %1017 = vadd.xlane.f32.xlu0 %v1016
        %v1018 = vpop.xlane.xlu0 %1017
        %v1019 = vsel %vm850, %v840, 0.0
        %1020 = vadd.xlane.f32.xlu0 %v1019
        %v1021 = vpop.xlane.xlu0 %1020
        %v1022 = vsel %vm850, %v841, 0.0
        %1023 = vadd.xlane.f32.xlu0 %v1022
        %v1024 = vpop.xlane.xlu0 %1023
        %v1025 = vsel %vm850, %v842, 0.0
        %1026 = vadd.xlane.f32.xlu0 %v1025
        %v1027 = vpop.xlane.xlu0 %1026
        %v1028 = vsel %vm850, %v843, 0.0
        %1029 = vadd.xlane.f32.xlu0 %v1028
        %v1030 = vpop.xlane.xlu0 %1029
        %v1031 = vsel %vm850, %v844, 0.0
        %1032 = vadd.xlane.f32.xlu0 %v1031
        %v1033 = vpop.xlane.xlu0 %1032
        %v1034 = vsel %vm850, %v845, 0.0
        %1035 = vadd.xlane.f32.xlu0 %v1034
        %v1036 = vpop.xlane.xlu0 %1035
        %v1037 = vsel %vm850, %v846, 0.0
        %1038 = vadd.xlane.f32.xlu0 %v1037
        %v1039 = vpop.xlane.xlu0 %1038
        %v1040 = vsel %vm850, %v847, 0.0
        %1041 = vadd.xlane.f32.xlu0 %v1040
        %v1042 = vpop.xlane.xlu0 %1041
        %v1043 = vrcp.pop 64.0
        %v1044 = vmul.f32 %v853, %v1043
        %v1045 = vmul.f32 %v856, %v1043
        %v1046 = vmul.f32 %v859, %v1043
        %v1047 = vmul.f32 %v862, %v1043
        %v1048 = vmul.f32 %v865, %v1043
        %v1049 = vmul.f32 %v868, %v1043
        %v1050 = vmul.f32 %v871, %v1043
        %v1051 = vmul.f32 %v874, %v1043
        %v1052 = vmul.f32 %v877, %v1043
        %v1053 = vmul.f32 %v880, %v1043
        %v1054 = vmul.f32 %v883, %v1043
        %v1055 = vmul.f32 %v886, %v1043
        %v1056 = vmul.f32 %v889, %v1043
        %v1057 = vmul.f32 %v892, %v1043
        %v1058 = vmul.f32 %v895, %v1043
        %v1059 = vmul.f32 %v898, %v1043
        %v1060 = vmul.f32 %v901, %v1043
        %v1061 = vmul.f32 %v904, %v1043
        %v1062 = vmul.f32 %v907, %v1043
        %v1063 = vmul.f32 %v910, %v1043
        %v1064 = vmul.f32 %v913, %v1043
        %v1065 = vmul.f32 %v916, %v1043
        %v1066 = vmul.f32 %v919, %v1043
        %v1067 = vmul.f32 %v922, %v1043
        %v1068 = vmul.f32 %v925, %v1043
        %v1069 = vmul.f32 %v928, %v1043
        %v1070 = vmul.f32 %v931, %v1043
        %v1071 = vmul.f32 %v934, %v1043
        %v1072 = vmul.f32 %v937, %v1043
        %v1073 = vmul.f32 %v940, %v1043
        %v1074 = vmul.f32 %v943, %v1043
        %v1075 = vmul.f32 %v946, %v1043
        %v1076 = vmul.f32 %v949, %v1043
        %v1077 = vmul.f32 %v952, %v1043
        %v1078 = vmul.f32 %v955, %v1043
        %v1079 = vmul.f32 %v958, %v1043
        %v1080 = vmul.f32 %v961, %v1043
        %v1081 = vmul.f32 %v964, %v1043
        %v1082 = vmul.f32 %v967, %v1043
        %v1083 = vmul.f32 %v970, %v1043
        %v1084 = vmul.f32 %v973, %v1043
        %v1085 = vmul.f32 %v976, %v1043
        %v1086 = vmul.f32 %v979, %v1043
        %v1087 = vmul.f32 %v982, %v1043
        %v1088 = vmul.f32 %v985, %v1043
        %v1089 = vmul.f32 %v988, %v1043
        %v1090 = vmul.f32 %v991, %v1043
        %v1091 = vmul.f32 %v994, %v1043
        %v1092 = vmul.f32 %v997, %v1043
        %v1093 = vmul.f32 %v1000, %v1043
        %v1094 = vmul.f32 %v1003, %v1043
        %v1095 = vmul.f32 %v1006, %v1043
        %v1096 = vmul.f32 %v1009, %v1043
        %v1097 = vmul.f32 %v1012, %v1043
        %v1098 = vmul.f32 %v1015, %v1043
        %v1099 = vmul.f32 %v1018, %v1043
        %v1100 = vmul.f32 %v1021, %v1043
        %v1101 = vmul.f32 %v1024, %v1043
        %v1102 = vmul.f32 %v1027, %v1043
        %v1103 = vmul.f32 %v1030, %v1043
        %v1104 = vmul.f32 %v1033, %v1043
        %v1105 = vmul.f32 %v1036, %v1043
        %v1106 = vmul.f32 %v1039, %v1043
        %v1107 = vmul.f32 %v1042, %v1043
        %v1108 = vmul.f32 %v784, %v784
        %v1109 = vmul.f32 %v785, %v785
        %v1110 = vmul.f32 %v786, %v786
        %v1111 = vmul.f32 %v787, %v787
        %v1112 = vmul.f32 %v788, %v788
        %v1113 = vmul.f32 %v789, %v789
        %v1114 = vmul.f32 %v790, %v790
        %v1115 = vmul.f32 %v791, %v791
        %v1116 = vmul.f32 %v792, %v792
        %v1117 = vmul.f32 %v793, %v793
        %v1118 = vmul.f32 %v794, %v794
        %v1119 = vmul.f32 %v795, %v795
        %v1120 = vmul.f32 %v796, %v796
        %v1121 = vmul.f32 %v797, %v797
        %v1122 = vmul.f32 %v798, %v798
        %v1123 = vmul.f32 %v799, %v799
        %v1124 = vmul.f32 %v800, %v800
        %v1125 = vmul.f32 %v801, %v801
        %v1126 = vmul.f32 %v802, %v802
        %v1127 = vmul.f32 %v803, %v803
        %v1128 = vmul.f32 %v804, %v804
        %v1129 = vmul.f32 %v805, %v805
        %v1130 = vmul.f32 %v806, %v806
        %v1131 = vmul.f32 %v807, %v807
        %v1132 = vmul.f32 %v808, %v808
        %v1133 = vmul.f32 %v809, %v809
        %v1134 = vmul.f32 %v810, %v810
        %v1135 = vmul.f32 %v811, %v811
        %v1136 = vmul.f32 %v812, %v812
        %v1137 = vmul.f32 %v813, %v813
        %v1138 = vmul.f32 %v814, %v814
        %v1139 = vmul.f32 %v815, %v815
        %v1140 = vmul.f32 %v816, %v816
        %v1141 = vmul.f32 %v817, %v817
        %v1142 = vmul.f32 %v818, %v818
        %v1143 = vmul.f32 %v819, %v819
        %v1144 = vmul.f32 %v820, %v820
        %v1145 = vmul.f32 %v821, %v821
        %v1146 = vmul.f32 %v822, %v822
        %v1147 = vmul.f32 %v823, %v823
        %v1148 = vmul.f32 %v824, %v824
        %v1149 = vmul.f32 %v825, %v825
        %v1150 = vmul.f32 %v826, %v826
        %v1151 = vmul.f32 %v827, %v827
        %v1152 = vmul.f32 %v828, %v828
        %v1153 = vmul.f32 %v829, %v829
        %v1154 = vmul.f32 %v830, %v830
        %v1155 = vmul.f32 %v831, %v831
        %v1156 = vmul.f32 %v832, %v832
        %v1157 = vmul.f32 %v833, %v833
        %v1158 = vmul.f32 %v834, %v834
        %v1159 = vmul.f32 %v835, %v835
        %v1160 = vmul.f32 %v836, %v836
        %v1161 = vmul.f32 %v837, %v837
        %v1162 = vmul.f32 %v838, %v838
        %v1163 = vmul.f32 %v839, %v839
        %v1164 = vmul.f32 %v840, %v840
        %v1165 = vmul.f32 %v841, %v841
        %v1166 = vmul.f32 %v842, %v842
        %v1167 = vmul.f32 %v843, %v843
        %v1168 = vmul.f32 %v844, %v844
        %v1169 = vmul.f32 %v845, %v845
        %v1170 = vmul.f32 %v846, %v846
        %v1171 = vmul.f32 %v847, %v847
        %v1172 = vsel %vm850, %v1108, 0.0
        %1173 = vadd.xlane.f32.xlu0 %v1172
        %v1174 = vpop.xlane.xlu0 %1173
        %v1175 = vsel %vm850, %v1109, 0.0
        %1176 = vadd.xlane.f32.xlu0 %v1175
        %v1177 = vpop.xlane.xlu0 %1176
        %v1178 = vsel %vm850, %v1110, 0.0
        %1179 = vadd.xlane.f32.xlu0 %v1178
        %v1180 = vpop.xlane.xlu0 %1179
        %v1181 = vsel %vm850, %v1111, 0.0
        %1182 = vadd.xlane.f32.xlu0 %v1181
        %v1183 = vpop.xlane.xlu0 %1182
        %v1184 = vsel %vm850, %v1112, 0.0
        %1185 = vadd.xlane.f32.xlu0 %v1184
        %v1186 = vpop.xlane.xlu0 %1185
        %v1187 = vsel %vm850, %v1113, 0.0
        %1188 = vadd.xlane.f32.xlu0 %v1187
        %v1189 = vpop.xlane.xlu0 %1188
        %v1190 = vsel %vm850, %v1114, 0.0
        %1191 = vadd.xlane.f32.xlu0 %v1190
        %v1192 = vpop.xlane.xlu0 %1191
        %v1193 = vsel %vm850, %v1115, 0.0
        %1194 = vadd.xlane.f32.xlu0 %v1193
        %v1195 = vpop.xlane.xlu0 %1194
        %v1196 = vsel %vm850, %v1116, 0.0
        %1197 = vadd.xlane.f32.xlu0 %v1196
        %v1198 = vpop.xlane.xlu0 %1197
        %v1199 = vsel %vm850, %v1117, 0.0
        %1200 = vadd.xlane.f32.xlu0 %v1199
        %v1201 = vpop.xlane.xlu0 %1200
        %v1202 = vsel %vm850, %v1118, 0.0
        %1203 = vadd.xlane.f32.xlu0 %v1202
        %v1204 = vpop.xlane.xlu0 %1203
        %v1205 = vsel %vm850, %v1119, 0.0
        %1206 = vadd.xlane.f32.xlu0 %v1205
        %v1207 = vpop.xlane.xlu0 %1206
        %v1208 = vsel %vm850, %v1120, 0.0
        %1209 = vadd.xlane.f32.xlu0 %v1208
        %v1210 = vpop.xlane.xlu0 %1209
        %v1211 = vsel %vm850, %v1121, 0.0
        %1212 = vadd.xlane.f32.xlu0 %v1211
        %v1213 = vpop.xlane.xlu0 %1212
        %v1214 = vsel %vm850, %v1122, 0.0
        %1215 = vadd.xlane.f32.xlu0 %v1214
        %v1216 = vpop.xlane.xlu0 %1215
        %v1217 = vsel %vm850, %v1123, 0.0
        %1218 = vadd.xlane.f32.xlu0 %v1217
        %v1219 = vpop.xlane.xlu0 %1218
        %v1220 = vsel %vm850, %v1124, 0.0
        %1221 = vadd.xlane.f32.xlu0 %v1220
        %v1222 = vpop.xlane.xlu0 %1221
        %v1223 = vsel %vm850, %v1125, 0.0
        %1224 = vadd.xlane.f32.xlu0 %v1223
        %v1225 = vpop.xlane.xlu0 %1224
        %v1226 = vsel %vm850, %v1126, 0.0
        %1227 = vadd.xlane.f32.xlu0 %v1226
        %v1228 = vpop.xlane.xlu0 %1227
        %v1229 = vsel %vm850, %v1127, 0.0
        %1230 = vadd.xlane.f32.xlu0 %v1229
        %v1231 = vpop.xlane.xlu0 %1230
        %v1232 = vsel %vm850, %v1128, 0.0
        %1233 = vadd.xlane.f32.xlu0 %v1232
        %v1234 = vpop.xlane.xlu0 %1233
        %v1235 = vsel %vm850, %v1129, 0.0
        %1236 = vadd.xlane.f32.xlu0 %v1235
        %v1237 = vpop.xlane.xlu0 %1236
        %v1238 = vsel %vm850, %v1130, 0.0
        %1239 = vadd.xlane.f32.xlu0 %v1238
        %v1240 = vpop.xlane.xlu0 %1239
        %v1241 = vsel %vm850, %v1131, 0.0
        %1242 = vadd.xlane.f32.xlu0 %v1241
        %v1243 = vpop.xlane.xlu0 %1242
        %v1244 = vsel %vm850, %v1132, 0.0
        %1245 = vadd.xlane.f32.xlu0 %v1244
        %v1246 = vpop.xlane.xlu0 %1245
        %v1247 = vsel %vm850, %v1133, 0.0
        %1248 = vadd.xlane.f32.xlu0 %v1247
        %v1249 = vpop.xlane.xlu0 %1248
        %v1250 = vsel %vm850, %v1134, 0.0
        %1251 = vadd.xlane.f32.xlu0 %v1250
        %v1252 = vpop.xlane.xlu0 %1251
        %v1253 = vsel %vm850, %v1135, 0.0
        %1254 = vadd.xlane.f32.xlu0 %v1253
        %v1255 = vpop.xlane.xlu0 %1254
        %v1256 = vsel %vm850, %v1136, 0.0
        %1257 = vadd.xlane.f32.xlu0 %v1256
        %v1258 = vpop.xlane.xlu0 %1257
        %v1259 = vsel %vm850, %v1137, 0.0
        %1260 = vadd.xlane.f32.xlu0 %v1259
        %v1261 = vpop.xlane.xlu0 %1260
        %v1262 = vsel %vm850, %v1138, 0.0
        %1263 = vadd.xlane.f32.xlu0 %v1262
        %v1264 = vpop.xlane.xlu0 %1263
        %v1265 = vsel %vm850, %v1139, 0.0
        %1266 = vadd.xlane.f32.xlu0 %v1265
        %v1267 = vpop.xlane.xlu0 %1266
        %v1268 = vsel %vm850, %v1140, 0.0
        %1269 = vadd.xlane.f32.xlu0 %v1268
        %v1270 = vpop.xlane.xlu0 %1269
        %v1271 = vsel %vm850, %v1141, 0.0
        %1272 = vadd.xlane.f32.xlu0 %v1271
        %v1273 = vpop.xlane.xlu0 %1272
        %v1274 = vsel %vm850, %v1142, 0.0
        %1275 = vadd.xlane.f32.xlu0 %v1274
        %v1276 = vpop.xlane.xlu0 %1275
        %v1277 = vsel %vm850, %v1143, 0.0
        %1278 = vadd.xlane.f32.xlu0 %v1277
        %v1279 = vpop.xlane.xlu0 %1278
        %v1280 = vsel %vm850, %v1144, 0.0
        %1281 = vadd.xlane.f32.xlu0 %v1280
        %v1282 = vpop.xlane.xlu0 %1281
        %v1283 = vsel %vm850, %v1145, 0.0
        %1284 = vadd.xlane.f32.xlu0 %v1283
        %v1285 = vpop.xlane.xlu0 %1284
        %v1286 = vsel %vm850, %v1146, 0.0
        %1287 = vadd.xlane.f32.xlu0 %v1286
        %v1288 = vpop.xlane.xlu0 %1287
        %v1289 = vsel %vm850, %v1147, 0.0
        %1290 = vadd.xlane.f32.xlu0 %v1289
        %v1291 = vpop.xlane.xlu0 %1290
        %v1292 = vsel %vm850, %v1148, 0.0
        %1293 = vadd.xlane.f32.xlu0 %v1292
        %v1294 = vpop.xlane.xlu0 %1293
        %v1295 = vsel %vm850, %v1149, 0.0
        %1296 = vadd.xlane.f32.xlu0 %v1295
        %v1297 = vpop.xlane.xlu0 %1296
        %v1298 = vsel %vm850, %v1150, 0.0
        %1299 = vadd.xlane.f32.xlu0 %v1298
        %v1300 = vpop.xlane.xlu0 %1299
        %v1301 = vsel %vm850, %v1151, 0.0
        %1302 = vadd.xlane.f32.xlu0 %v1301
        %v1303 = vpop.xlane.xlu0 %1302
        %v1304 = vsel %vm850, %v1152, 0.0
        %1305 = vadd.xlane.f32.xlu0 %v1304
        %v1306 = vpop.xlane.xlu0 %1305
        %v1307 = vsel %vm850, %v1153, 0.0
        %1308 = vadd.xlane.f32.xlu0 %v1307
        %v1309 = vpop.xlane.xlu0 %1308
        %v1310 = vsel %vm850, %v1154, 0.0
        %1311 = vadd.xlane.f32.xlu0 %v1310
        %v1312 = vpop.xlane.xlu0 %1311
        %v1313 = vsel %vm850, %v1155, 0.0
        %1314 = vadd.xlane.f32.xlu0 %v1313
        %v1315 = vpop.xlane.xlu0 %1314
        %v1316 = vsel %vm850, %v1156, 0.0
        %1317 = vadd.xlane.f32.xlu0 %v1316
        %v1318 = vpop.xlane.xlu0 %1317
        %v1319 = vsel %vm850, %v1157, 0.0
        %1320 = vadd.xlane.f32.xlu0 %v1319
        %v1321 = vpop.xlane.xlu0 %1320
        %v1322 = vsel %vm850, %v1158, 0.0
        %1323 = vadd.xlane.f32.xlu0 %v1322
        %v1324 = vpop.xlane.xlu0 %1323
        %v1325 = vsel %vm850, %v1159, 0.0
        %1326 = vadd.xlane.f32.xlu0 %v1325
        %v1327 = vpop.xlane.xlu0 %1326
        %v1328 = vsel %vm850, %v1160, 0.0
        %1329 = vadd.xlane.f32.xlu0 %v1328
        %v1330 = vpop.xlane.xlu0 %1329
        %v1331 = vsel %vm850, %v1161, 0.0
        %1332 = vadd.xlane.f32.xlu0 %v1331
        %v1333 = vpop.xlane.xlu0 %1332
        %v1334 = vsel %vm850, %v1162, 0.0
        %1335 = vadd.xlane.f32.xlu0 %v1334
        %v1336 = vpop.xlane.xlu0 %1335
        %v1337 = vsel %vm850, %v1163, 0.0
        %1338 = vadd.xlane.f32.xlu0 %v1337
        %v1339 = vpop.xlane.xlu0 %1338
        %v1340 = vsel %vm850, %v1164, 0.0
        %1341 = vadd.xlane.f32.xlu0 %v1340
        %v1342 = vpop.xlane.xlu0 %1341
        %v1343 = vsel %vm850, %v1165, 0.0
        %1344 = vadd.xlane.f32.xlu0 %v1343
        %v1345 = vpop.xlane.xlu0 %1344
        %v1346 = vsel %vm850, %v1166, 0.0
        %1347 = vadd.xlane.f32.xlu0 %v1346
        %v1348 = vpop.xlane.xlu0 %1347
        %v1349 = vsel %vm850, %v1167, 0.0
        %1350 = vadd.xlane.f32.xlu0 %v1349
        %v1351 = vpop.xlane.xlu0 %1350
        %v1352 = vsel %vm850, %v1168, 0.0
        %1353 = vadd.xlane.f32.xlu0 %v1352
        %v1354 = vpop.xlane.xlu0 %1353
        %v1355 = vsel %vm850, %v1169, 0.0
        %1356 = vadd.xlane.f32.xlu0 %v1355
        %v1357 = vpop.xlane.xlu0 %1356
        %v1358 = vsel %vm850, %v1170, 0.0
        %1359 = vadd.xlane.f32.xlu0 %v1358
        %v1360 = vpop.xlane.xlu0 %1359
        %v1361 = vsel %vm850, %v1171, 0.0
        %1362 = vadd.xlane.f32.xlu0 %v1361
        %v1363 = vpop.xlane.xlu0 %1362
        %v1364 = vmul.f32 %v1174, %v1043
        %v1365 = vmul.f32 %v1177, %v1043
        %v1366 = vmul.f32 %v1180, %v1043
        %v1367 = vmul.f32 %v1183, %v1043
        %v1368 = vmul.f32 %v1186, %v1043
        %v1369 = vmul.f32 %v1189, %v1043
        %v1370 = vmul.f32 %v1192, %v1043
        %v1371 = vmul.f32 %v1195, %v1043
        %v1372 = vmul.f32 %v1198, %v1043
        %v1373 = vmul.f32 %v1201, %v1043
        %v1374 = vmul.f32 %v1204, %v1043
        %v1375 = vmul.f32 %v1207, %v1043
        %v1376 = vmul.f32 %v1210, %v1043
        %v1377 = vmul.f32 %v1213, %v1043
        %v1378 = vmul.f32 %v1216, %v1043
        %v1379 = vmul.f32 %v1219, %v1043
        %v1380 = vmul.f32 %v1222, %v1043
        %v1381 = vmul.f32 %v1225, %v1043
        %v1382 = vmul.f32 %v1228, %v1043
        %v1383 = vmul.f32 %v1231, %v1043
        %v1384 = vmul.f32 %v1234, %v1043
        %v1385 = vmul.f32 %v1237, %v1043
        %v1386 = vmul.f32 %v1240, %v1043
        %v1387 = vmul.f32 %v1243, %v1043
        %v1388 = vmul.f32 %v1246, %v1043
        %v1389 = vmul.f32 %v1249, %v1043
        %v1390 = vmul.f32 %v1252, %v1043
        %v1391 = vmul.f32 %v1255, %v1043
        %v1392 = vmul.f32 %v1258, %v1043
        %v1393 = vmul.f32 %v1261, %v1043
        %v1394 = vmul.f32 %v1264, %v1043
        %v1395 = vmul.f32 %v1267, %v1043
        %v1396 = vmul.f32 %v1270, %v1043
        %v1397 = vmul.f32 %v1273, %v1043
        %v1398 = vmul.f32 %v1276, %v1043
        %v1399 = vmul.f32 %v1279, %v1043
        %v1400 = vmul.f32 %v1282, %v1043
        %v1401 = vmul.f32 %v1285, %v1043
        %v1402 = vmul.f32 %v1288, %v1043
        %v1403 = vmul.f32 %v1291, %v1043
        %v1404 = vmul.f32 %v1294, %v1043
        %v1405 = vmul.f32 %v1297, %v1043
        %v1406 = vmul.f32 %v1300, %v1043
        %v1407 = vmul.f32 %v1303, %v1043
        %v1408 = vmul.f32 %v1306, %v1043
        %v1409 = vmul.f32 %v1309, %v1043
        %v1410 = vmul.f32 %v1312, %v1043
        %v1411 = vmul.f32 %v1315, %v1043
        %v1412 = vmul.f32 %v1318, %v1043
        %v1413 = vmul.f32 %v1321, %v1043
        %v1414 = vmul.f32 %v1324, %v1043
        %v1415 = vmul.f32 %v1327, %v1043
        %v1416 = vmul.f32 %v1330, %v1043
        %v1417 = vmul.f32 %v1333, %v1043
        %v1418 = vmul.f32 %v1336, %v1043
        %v1419 = vmul.f32 %v1339, %v1043
        %v1420 = vmul.f32 %v1342, %v1043
        %v1421 = vmul.f32 %v1345, %v1043
        %v1422 = vmul.f32 %v1348, %v1043
        %v1423 = vmul.f32 %v1351, %v1043
        %v1424 = vmul.f32 %v1354, %v1043
        %v1425 = vmul.f32 %v1357, %v1043
        %v1426 = vmul.f32 %v1360, %v1043
        %v1427 = vmul.f32 %v1363, %v1043
        %v1428 = vmul.f32 %v1044, %v1044
        %v1429 = vmul.f32 %v1045, %v1045
        %v1430 = vmul.f32 %v1046, %v1046
        %v1431 = vmul.f32 %v1047, %v1047
        %v1432 = vmul.f32 %v1048, %v1048
        %v1433 = vmul.f32 %v1049, %v1049
        %v1434 = vmul.f32 %v1050, %v1050
        %v1435 = vmul.f32 %v1051, %v1051
        %v1436 = vmul.f32 %v1052, %v1052
        %v1437 = vmul.f32 %v1053, %v1053
        %v1438 = vmul.f32 %v1054, %v1054
        %v1439 = vmul.f32 %v1055, %v1055
        %v1440 = vmul.f32 %v1056, %v1056
        %v1441 = vmul.f32 %v1057, %v1057
        %v1442 = vmul.f32 %v1058, %v1058
        %v1443 = vmul.f32 %v1059, %v1059
        %v1444 = vmul.f32 %v1060, %v1060
        %v1445 = vmul.f32 %v1061, %v1061
        %v1446 = vmul.f32 %v1062, %v1062
        %v1447 = vmul.f32 %v1063, %v1063
        %v1448 = vmul.f32 %v1064, %v1064
        %v1449 = vmul.f32 %v1065, %v1065
        %v1450 = vmul.f32 %v1066, %v1066
        %v1451 = vmul.f32 %v1067, %v1067
        %v1452 = vmul.f32 %v1068, %v1068
        %v1453 = vmul.f32 %v1069, %v1069
        %v1454 = vmul.f32 %v1070, %v1070
        %v1455 = vmul.f32 %v1071, %v1071
        %v1456 = vmul.f32 %v1072, %v1072
        %v1457 = vmul.f32 %v1073, %v1073
        %v1458 = vmul.f32 %v1074, %v1074
        %v1459 = vmul.f32 %v1075, %v1075
        %v1460 = vmul.f32 %v1076, %v1076
        %v1461 = vmul.f32 %v1077, %v1077
        %v1462 = vmul.f32 %v1078, %v1078
        %v1463 = vmul.f32 %v1079, %v1079
        %v1464 = vmul.f32 %v1080, %v1080
        %v1465 = vmul.f32 %v1081, %v1081
        %v1466 = vmul.f32 %v1082, %v1082
        %v1467 = vmul.f32 %v1083, %v1083
        %v1468 = vmul.f32 %v1084, %v1084
        %v1469 = vmul.f32 %v1085, %v1085
        %v1470 = vmul.f32 %v1086, %v1086
        %v1471 = vmul.f32 %v1087, %v1087
        %v1472 = vmul.f32 %v1088, %v1088
        %v1473 = vmul.f32 %v1089, %v1089
        %v1474 = vmul.f32 %v1090, %v1090
        %v1475 = vmul.f32 %v1091, %v1091
        %v1476 = vmul.f32 %v1092, %v1092
        %v1477 = vmul.f32 %v1093, %v1093
        %v1478 = vmul.f32 %v1094, %v1094
        %v1479 = vmul.f32 %v1095, %v1095
        %v1480 = vmul.f32 %v1096, %v1096
        %v1481 = vmul.f32 %v1097, %v1097
        %v1482 = vmul.f32 %v1098, %v1098
        %v1483 = vmul.f32 %v1099, %v1099
        %v1484 = vmul.f32 %v1100, %v1100
        %v1485 = vmul.f32 %v1101, %v1101
        %v1486 = vmul.f32 %v1102, %v1102
        %v1487 = vmul.f32 %v1103, %v1103
        %v1488 = vmul.f32 %v1104, %v1104
        %v1489 = vmul.f32 %v1105, %v1105
        %v1490 = vmul.f32 %v1106, %v1106
        %v1491 = vmul.f32 %v1107, %v1107
        %v1492 = vsub.f32 %v1364, %v1428
        %v1493 = vsub.f32 %v1365, %v1429
        %v1494 = vsub.f32 %v1366, %v1430
        %v1495 = vsub.f32 %v1367, %v1431
        %v1496 = vsub.f32 %v1368, %v1432
        %v1497 = vsub.f32 %v1369, %v1433
        %v1498 = vsub.f32 %v1370, %v1434
        %v1499 = vsub.f32 %v1371, %v1435
        %v1500 = vsub.f32 %v1372, %v1436
        %v1501 = vsub.f32 %v1373, %v1437
        %v1502 = vsub.f32 %v1374, %v1438
        %v1503 = vsub.f32 %v1375, %v1439
        %v1504 = vsub.f32 %v1376, %v1440
        %v1505 = vsub.f32 %v1377, %v1441
        %v1506 = vsub.f32 %v1378, %v1442
        %v1507 = vsub.f32 %v1379, %v1443
        %v1508 = vsub.f32 %v1380, %v1444
        %v1509 = vsub.f32 %v1381, %v1445
        %v1510 = vsub.f32 %v1382, %v1446
        %v1511 = vsub.f32 %v1383, %v1447
        %v1512 = vsub.f32 %v1384, %v1448
        %v1513 = vsub.f32 %v1385, %v1449
        %v1514 = vsub.f32 %v1386, %v1450
        %v1515 = vsub.f32 %v1387, %v1451
        %v1516 = vsub.f32 %v1388, %v1452
        %v1517 = vsub.f32 %v1389, %v1453
        %v1518 = vsub.f32 %v1390, %v1454
        %v1519 = vsub.f32 %v1391, %v1455
        %v1520 = vsub.f32 %v1392, %v1456
        %v1521 = vsub.f32 %v1393, %v1457
        %v1522 = vsub.f32 %v1394, %v1458
        %v1523 = vsub.f32 %v1395, %v1459
        %v1524 = vsub.f32 %v1396, %v1460
        %v1525 = vsub.f32 %v1397, %v1461
        %v1526 = vsub.f32 %v1398, %v1462
        %v1527 = vsub.f32 %v1399, %v1463
        %v1528 = vsub.f32 %v1400, %v1464
        %v1529 = vsub.f32 %v1401, %v1465
        %v1530 = vsub.f32 %v1402, %v1466
        %v1531 = vsub.f32 %v1403, %v1467
        %v1532 = vsub.f32 %v1404, %v1468
        %v1533 = vsub.f32 %v1405, %v1469
        %v1534 = vsub.f32 %v1406, %v1470
        %v1535 = vsub.f32 %v1407, %v1471
        %v1536 = vsub.f32 %v1408, %v1472
        %v1537 = vsub.f32 %v1409, %v1473
        %v1538 = vsub.f32 %v1410, %v1474
        %v1539 = vsub.f32 %v1411, %v1475
        %v1540 = vsub.f32 %v1412, %v1476
        %v1541 = vsub.f32 %v1413, %v1477
        %v1542 = vsub.f32 %v1414, %v1478
        %v1543 = vsub.f32 %v1415, %v1479
        %v1544 = vsub.f32 %v1416, %v1480
        %v1545 = vsub.f32 %v1417, %v1481
        %v1546 = vsub.f32 %v1418, %v1482
        %v1547 = vsub.f32 %v1419, %v1483
        %v1548 = vsub.f32 %v1420, %v1484
        %v1549 = vsub.f32 %v1421, %v1485
        %v1550 = vsub.f32 %v1422, %v1486
        %v1551 = vsub.f32 %v1423, %v1487
        %v1552 = vsub.f32 %v1424, %v1488
        %v1553 = vsub.f32 %v1425, %v1489
        %v1554 = vsub.f32 %v1426, %v1490
        %v1555 = vsub.f32 %v1427, %v1491
        %v1556 = vmax.f32 %v1492, 0.0
        %v1557 = vmax.f32 %v1493, 0.0
        %v1558 = vmax.f32 %v1494, 0.0
        %v1559 = vmax.f32 %v1495, 0.0
        %v1560 = vmax.f32 %v1496, 0.0
        %v1561 = vmax.f32 %v1497, 0.0
        %v1562 = vmax.f32 %v1498, 0.0
        %v1563 = vmax.f32 %v1499, 0.0
        %v1564 = vmax.f32 %v1500, 0.0
        %v1565 = vmax.f32 %v1501, 0.0
        %v1566 = vmax.f32 %v1502, 0.0
        %v1567 = vmax.f32 %v1503, 0.0
        %v1568 = vmax.f32 %v1504, 0.0
        %v1569 = vmax.f32 %v1505, 0.0
        %v1570 = vmax.f32 %v1506, 0.0
        %v1571 = vmax.f32 %v1507, 0.0
        %v1572 = vmax.f32 %v1508, 0.0
        %v1573 = vmax.f32 %v1509, 0.0
        %v1574 = vmax.f32 %v1510, 0.0
        %v1575 = vmax.f32 %v1511, 0.0
        %v1576 = vmax.f32 %v1512, 0.0
        %v1577 = vmax.f32 %v1513, 0.0
        %v1578 = vmax.f32 %v1514, 0.0
        %v1579 = vmax.f32 %v1515, 0.0
        %v1580 = vmax.f32 %v1516, 0.0
        %v1581 = vmax.f32 %v1517, 0.0
        %v1582 = vmax.f32 %v1518, 0.0
        %v1583 = vmax.f32 %v1519, 0.0
        %v1584 = vmax.f32 %v1520, 0.0
        %v1585 = vmax.f32 %v1521, 0.0
        %v1586 = vmax.f32 %v1522, 0.0
        %v1587 = vmax.f32 %v1523, 0.0
        %v1588 = vmax.f32 %v1524, 0.0
        %v1589 = vmax.f32 %v1525, 0.0
        %v1590 = vmax.f32 %v1526, 0.0
        %v1591 = vmax.f32 %v1527, 0.0
        %v1592 = vmax.f32 %v1528, 0.0
        %v1593 = vmax.f32 %v1529, 0.0
        %v1594 = vmax.f32 %v1530, 0.0
        %v1595 = vmax.f32 %v1531, 0.0
        %v1596 = vmax.f32 %v1532, 0.0
        %v1597 = vmax.f32 %v1533, 0.0
        %v1598 = vmax.f32 %v1534, 0.0
        %v1599 = vmax.f32 %v1535, 0.0
        %v1600 = vmax.f32 %v1536, 0.0
        %v1601 = vmax.f32 %v1537, 0.0
        %v1602 = vmax.f32 %v1538, 0.0
        %v1603 = vmax.f32 %v1539, 0.0
        %v1604 = vmax.f32 %v1540, 0.0
        %v1605 = vmax.f32 %v1541, 0.0
        %v1606 = vmax.f32 %v1542, 0.0
        %v1607 = vmax.f32 %v1543, 0.0
        %v1608 = vmax.f32 %v1544, 0.0
        %v1609 = vmax.f32 %v1545, 0.0
        %v1610 = vmax.f32 %v1546, 0.0
        %v1611 = vmax.f32 %v1547, 0.0
        %v1612 = vmax.f32 %v1548, 0.0
        %v1613 = vmax.f32 %v1549, 0.0
        %v1614 = vmax.f32 %v1550, 0.0
        %v1615 = vmax.f32 %v1551, 0.0
        %v1616 = vmax.f32 %v1552, 0.0
        %v1617 = vmax.f32 %v1553, 0.0
        %v1618 = vmax.f32 %v1554, 0.0
        %v1619 = vmax.f32 %v1555, 0.0
        %v1620 = vsub.f32 %v784, %v1044
        %v1621 = vsub.f32 %v785, %v1045
        %v1622 = vsub.f32 %v786, %v1046
        %v1623 = vsub.f32 %v787, %v1047
        %v1624 = vsub.f32 %v788, %v1048
        %v1625 = vsub.f32 %v789, %v1049
        %v1626 = vsub.f32 %v790, %v1050
        %v1627 = vsub.f32 %v791, %v1051
        %v1628 = vsub.f32 %v792, %v1052
        %v1629 = vsub.f32 %v793, %v1053
        %v1630 = vsub.f32 %v794, %v1054
        %v1631 = vsub.f32 %v795, %v1055
        %v1632 = vsub.f32 %v796, %v1056
        %v1633 = vsub.f32 %v797, %v1057
        %v1634 = vsub.f32 %v798, %v1058
        %v1635 = vsub.f32 %v799, %v1059
        %v1636 = vsub.f32 %v800, %v1060
        %v1637 = vsub.f32 %v801, %v1061
        %v1638 = vsub.f32 %v802, %v1062
        %v1639 = vsub.f32 %v803, %v1063
        %v1640 = vsub.f32 %v804, %v1064
        %v1641 = vsub.f32 %v805, %v1065
        %v1642 = vsub.f32 %v806, %v1066
        %v1643 = vsub.f32 %v807, %v1067
        %v1644 = vsub.f32 %v808, %v1068
        %v1645 = vsub.f32 %v809, %v1069
        %v1646 = vsub.f32 %v810, %v1070
        %v1647 = vsub.f32 %v811, %v1071
        %v1648 = vsub.f32 %v812, %v1072
        %v1649 = vsub.f32 %v813, %v1073
        %v1650 = vsub.f32 %v814, %v1074
        %v1651 = vsub.f32 %v815, %v1075
        %v1652 = vsub.f32 %v816, %v1076
        %v1653 = vsub.f32 %v817, %v1077
        %v1654 = vsub.f32 %v818, %v1078
        %v1655 = vsub.f32 %v819, %v1079
        %v1656 = vsub.f32 %v820, %v1080
        %v1657 = vsub.f32 %v821, %v1081
        %v1658 = vsub.f32 %v822, %v1082
        %v1659 = vsub.f32 %v823, %v1083
        %v1660 = vsub.f32 %v824, %v1084
        %v1661 = vsub.f32 %v825, %v1085
        %v1662 = vsub.f32 %v826, %v1086
        %v1663 = vsub.f32 %v827, %v1087
        %v1664 = vsub.f32 %v828, %v1088
        %v1665 = vsub.f32 %v829, %v1089
        %v1666 = vsub.f32 %v830, %v1090
        %v1667 = vsub.f32 %v831, %v1091
        %v1668 = vsub.f32 %v832, %v1092
        %v1669 = vsub.f32 %v833, %v1093
        %v1670 = vsub.f32 %v834, %v1094
        %v1671 = vsub.f32 %v835, %v1095
        %v1672 = vsub.f32 %v836, %v1096
        %v1673 = vsub.f32 %v837, %v1097
        %v1674 = vsub.f32 %v838, %v1098
        %v1675 = vsub.f32 %v839, %v1099
        %v1676 = vsub.f32 %v840, %v1100
        %v1677 = vsub.f32 %v841, %v1101
        %v1678 = vsub.f32 %v842, %v1102
        %v1679 = vsub.f32 %v843, %v1103
        %v1680 = vsub.f32 %v844, %v1104
        %v1681 = vsub.f32 %v845, %v1105
        %v1682 = vsub.f32 %v846, %v1106
        %v1683 = vsub.f32 %v847, %v1107
        %v1684 = vadd.f32 %v1556, 1e-05
        %v1685 = vadd.f32 %v1557, 1e-05
        %v1686 = vadd.f32 %v1558, 1e-05
        %v1687 = vadd.f32 %v1559, 1e-05
        %v1688 = vadd.f32 %v1560, 1e-05
        %v1689 = vadd.f32 %v1561, 1e-05
        %v1690 = vadd.f32 %v1562, 1e-05
        %v1691 = vadd.f32 %v1563, 1e-05
        %v1692 = vadd.f32 %v1564, 1e-05
        %v1693 = vadd.f32 %v1565, 1e-05
        %v1694 = vadd.f32 %v1566, 1e-05
        %v1695 = vadd.f32 %v1567, 1e-05
        %v1696 = vadd.f32 %v1568, 1e-05
        %v1697 = vadd.f32 %v1569, 1e-05
        %v1698 = vadd.f32 %v1570, 1e-05
        %v1699 = vadd.f32 %v1571, 1e-05
        %v1700 = vadd.f32 %v1572, 1e-05
        %v1701 = vadd.f32 %v1573, 1e-05
        %v1702 = vadd.f32 %v1574, 1e-05
        %v1703 = vadd.f32 %v1575, 1e-05
        %v1704 = vadd.f32 %v1576, 1e-05
        %v1705 = vadd.f32 %v1577, 1e-05
        %v1706 = vadd.f32 %v1578, 1e-05
        %v1707 = vadd.f32 %v1579, 1e-05
        %v1708 = vadd.f32 %v1580, 1e-05
        %v1709 = vadd.f32 %v1581, 1e-05
        %v1710 = vadd.f32 %v1582, 1e-05
        %v1711 = vadd.f32 %v1583, 1e-05
        %v1712 = vadd.f32 %v1584, 1e-05
        %v1713 = vadd.f32 %v1585, 1e-05
        %v1714 = vadd.f32 %v1586, 1e-05
        %v1715 = vadd.f32 %v1587, 1e-05
        %v1716 = vadd.f32 %v1588, 1e-05
        %v1717 = vadd.f32 %v1589, 1e-05
        %v1718 = vadd.f32 %v1590, 1e-05
        %v1719 = vadd.f32 %v1591, 1e-05
        %v1720 = vadd.f32 %v1592, 1e-05
        %v1721 = vadd.f32 %v1593, 1e-05
        %v1722 = vadd.f32 %v1594, 1e-05
        %v1723 = vadd.f32 %v1595, 1e-05
        %v1724 = vadd.f32 %v1596, 1e-05
        %v1725 = vadd.f32 %v1597, 1e-05
        %v1726 = vadd.f32 %v1598, 1e-05
        %v1727 = vadd.f32 %v1599, 1e-05
        %v1728 = vadd.f32 %v1600, 1e-05
        %v1729 = vadd.f32 %v1601, 1e-05
        %v1730 = vadd.f32 %v1602, 1e-05
        %v1731 = vadd.f32 %v1603, 1e-05
        %v1732 = vadd.f32 %v1604, 1e-05
        %v1733 = vadd.f32 %v1605, 1e-05
        %v1734 = vadd.f32 %v1606, 1e-05
        %v1735 = vadd.f32 %v1607, 1e-05
        %v1736 = vadd.f32 %v1608, 1e-05
        %v1737 = vadd.f32 %v1609, 1e-05
        %v1738 = vadd.f32 %v1610, 1e-05
        %v1739 = vadd.f32 %v1611, 1e-05
        %v1740 = vadd.f32 %v1612, 1e-05
        %v1741 = vadd.f32 %v1613, 1e-05
        %v1742 = vadd.f32 %v1614, 1e-05
        %v1743 = vadd.f32 %v1615, 1e-05
        %v1744 = vadd.f32 %v1616, 1e-05
        %v1745 = vadd.f32 %v1617, 1e-05
        %v1746 = vadd.f32 %v1618, 1e-05
        %v1747 = vadd.f32 %v1619, 1e-05
        %v1748 = vrsqrt.pop %v1684
        %v1749 = vrsqrt.pop %v1685
        %v1750 = vrsqrt.pop %v1686
        %v1751 = vrsqrt.pop %v1687
        %v1752 = vrsqrt.pop %v1688
        %v1753 = vrsqrt.pop %v1689
        %v1754 = vrsqrt.pop %v1690
        %v1755 = vrsqrt.pop %v1691
        %v1756 = vrsqrt.pop %v1692
        %v1757 = vrsqrt.pop %v1693
        %v1758 = vrsqrt.pop %v1694
        %v1759 = vrsqrt.pop %v1695
        %v1760 = vrsqrt.pop %v1696
        %v1761 = vrsqrt.pop %v1697
        %v1762 = vrsqrt.pop %v1698
        %v1763 = vrsqrt.pop %v1699
        %v1764 = vrsqrt.pop %v1700
        %v1765 = vrsqrt.pop %v1701
        %v1766 = vrsqrt.pop %v1702
        %v1767 = vrsqrt.pop %v1703
        %v1768 = vrsqrt.pop %v1704
        %v1769 = vrsqrt.pop %v1705
        %v1770 = vrsqrt.pop %v1706
        %v1771 = vrsqrt.pop %v1707
        %v1772 = vrsqrt.pop %v1708
        %v1773 = vrsqrt.pop %v1709
        %v1774 = vrsqrt.pop %v1710
        %v1775 = vrsqrt.pop %v1711
        %v1776 = vrsqrt.pop %v1712
        %v1777 = vrsqrt.pop %v1713
        %v1778 = vrsqrt.pop %v1714
        %v1779 = vrsqrt.pop %v1715
        %v1780 = vrsqrt.pop %v1716
        %v1781 = vrsqrt.pop %v1717
        %v1782 = vrsqrt.pop %v1718
        %v1783 = vrsqrt.pop %v1719
        %v1784 = vrsqrt.pop %v1720
        %v1785 = vrsqrt.pop %v1721
        %v1786 = vrsqrt.pop %v1722
        %v1787 = vrsqrt.pop %v1723
        %v1788 = vrsqrt.pop %v1724
        %v1789 = vrsqrt.pop %v1725
        %v1790 = vrsqrt.pop %v1726
        %v1791 = vrsqrt.pop %v1727
        %v1792 = vrsqrt.pop %v1728
        %v1793 = vrsqrt.pop %v1729
        %v1794 = vrsqrt.pop %v1730
        %v1795 = vrsqrt.pop %v1731
        %v1796 = vrsqrt.pop %v1732
        %v1797 = vrsqrt.pop %v1733
        %v1798 = vrsqrt.pop %v1734
        %v1799 = vrsqrt.pop %v1735
        %v1800 = vrsqrt.pop %v1736
        %v1801 = vrsqrt.pop %v1737
        %v1802 = vrsqrt.pop %v1738
        %v1803 = vrsqrt.pop %v1739
        %v1804 = vrsqrt.pop %v1740
        %v1805 = vrsqrt.pop %v1741
        %v1806 = vrsqrt.pop %v1742
        %v1807 = vrsqrt.pop %v1743
        %v1808 = vrsqrt.pop %v1744
        %v1809 = vrsqrt.pop %v1745
        %v1810 = vrsqrt.pop %v1746
        %v1811 = vrsqrt.pop %v1747
        %v1812 = vmul.f32 %v1620, %v1748
        %v1813 = vmul.f32 %v1621, %v1749
        %v1814 = vmul.f32 %v1622, %v1750
        %v1815 = vmul.f32 %v1623, %v1751
        %v1816 = vmul.f32 %v1624, %v1752
        %v1817 = vmul.f32 %v1625, %v1753
        %v1818 = vmul.f32 %v1626, %v1754
        %v1819 = vmul.f32 %v1627, %v1755
        %v1820 = vmul.f32 %v1628, %v1756
        %v1821 = vmul.f32 %v1629, %v1757
        %v1822 = vmul.f32 %v1630, %v1758
        %v1823 = vmul.f32 %v1631, %v1759
        %v1824 = vmul.f32 %v1632, %v1760
        %v1825 = vmul.f32 %v1633, %v1761
        %v1826 = vmul.f32 %v1634, %v1762
        %v1827 = vmul.f32 %v1635, %v1763
        %v1828 = vmul.f32 %v1636, %v1764
        %v1829 = vmul.f32 %v1637, %v1765
        %v1830 = vmul.f32 %v1638, %v1766
        %v1831 = vmul.f32 %v1639, %v1767
        %v1832 = vmul.f32 %v1640, %v1768
        %v1833 = vmul.f32 %v1641, %v1769
        %v1834 = vmul.f32 %v1642, %v1770
        %v1835 = vmul.f32 %v1643, %v1771
        %v1836 = vmul.f32 %v1644, %v1772
        %v1837 = vmul.f32 %v1645, %v1773
        %v1838 = vmul.f32 %v1646, %v1774
        %v1839 = vmul.f32 %v1647, %v1775
        %v1840 = vmul.f32 %v1648, %v1776
        %v1841 = vmul.f32 %v1649, %v1777
        %v1842 = vmul.f32 %v1650, %v1778
        %v1843 = vmul.f32 %v1651, %v1779
        %v1844 = vmul.f32 %v1652, %v1780
        %v1845 = vmul.f32 %v1653, %v1781
        %v1846 = vmul.f32 %v1654, %v1782
        %v1847 = vmul.f32 %v1655, %v1783
        %v1848 = vmul.f32 %v1656, %v1784
        %v1849 = vmul.f32 %v1657, %v1785
        %v1850 = vmul.f32 %v1658, %v1786
        %v1851 = vmul.f32 %v1659, %v1787
        %v1852 = vmul.f32 %v1660, %v1788
        %v1853 = vmul.f32 %v1661, %v1789
        %v1854 = vmul.f32 %v1662, %v1790
        %v1855 = vmul.f32 %v1663, %v1791
        %v1856 = vmul.f32 %v1664, %v1792
        %v1857 = vmul.f32 %v1665, %v1793
        %v1858 = vmul.f32 %v1666, %v1794
        %v1859 = vmul.f32 %v1667, %v1795
        %v1860 = vmul.f32 %v1668, %v1796
        %v1861 = vmul.f32 %v1669, %v1797
        %v1862 = vmul.f32 %v1670, %v1798
        %v1863 = vmul.f32 %v1671, %v1799
        %v1864 = vmul.f32 %v1672, %v1800
        %v1865 = vmul.f32 %v1673, %v1801
        %v1866 = vmul.f32 %v1674, %v1802
        %v1867 = vmul.f32 %v1675, %v1803
        %v1868 = vmul.f32 %v1676, %v1804
        %v1869 = vmul.f32 %v1677, %v1805
        %v1870 = vmul.f32 %v1678, %v1806
        %v1871 = vmul.f32 %v1679, %v1807
        %v1872 = vmul.f32 %v1680, %v1808
        %v1873 = vmul.f32 %v1681, %v1809
        %v1874 = vmul.f32 %v1682, %v1810
        %v1875 = vmul.f32 %v1683, %v1811
        %v1876 = vlaneseq
        %v1877 = vshrl.u32 %v1876, 7
        %v1878 = vsub.s32 0, %v1877
        %v1879 = vrot.slane %v848, %v1878
        %v1880 = vmul.f32 %v1812, %v1879
        %v1881 = vmul.f32 %v1813, %v1879
        %v1882 = vmul.f32 %v1814, %v1879
        %v1883 = vmul.f32 %v1815, %v1879
        %v1884 = vmul.f32 %v1816, %v1879
        %v1885 = vmul.f32 %v1817, %v1879
        %v1886 = vmul.f32 %v1818, %v1879
        %v1887 = vmul.f32 %v1819, %v1879
        %v1888 = vmul.f32 %v1820, %v1879
        %v1889 = vmul.f32 %v1821, %v1879
        %v1890 = vmul.f32 %v1822, %v1879
        %v1891 = vmul.f32 %v1823, %v1879
        %v1892 = vmul.f32 %v1824, %v1879
        %v1893 = vmul.f32 %v1825, %v1879
        %v1894 = vmul.f32 %v1826, %v1879
        %v1895 = vmul.f32 %v1827, %v1879
        %v1896 = vmul.f32 %v1828, %v1879
        %v1897 = vmul.f32 %v1829, %v1879
        %v1898 = vmul.f32 %v1830, %v1879
        %v1899 = vmul.f32 %v1831, %v1879
        %v1900 = vmul.f32 %v1832, %v1879
        %v1901 = vmul.f32 %v1833, %v1879
        %v1902 = vmul.f32 %v1834, %v1879
        %v1903 = vmul.f32 %v1835, %v1879
        %v1904 = vmul.f32 %v1836, %v1879
        %v1905 = vmul.f32 %v1837, %v1879
        %v1906 = vmul.f32 %v1838, %v1879
        %v1907 = vmul.f32 %v1839, %v1879
        %v1908 = vmul.f32 %v1840, %v1879
        %v1909 = vmul.f32 %v1841, %v1879
        %v1910 = vmul.f32 %v1842, %v1879
        %v1911 = vmul.f32 %v1843, %v1879
        %v1912 = vmul.f32 %v1844, %v1879
        %v1913 = vmul.f32 %v1845, %v1879
        %v1914 = vmul.f32 %v1846, %v1879
        %v1915 = vmul.f32 %v1847, %v1879
        %v1916 = vmul.f32 %v1848, %v1879
        %v1917 = vmul.f32 %v1849, %v1879
        %v1918 = vmul.f32 %v1850, %v1879
        %v1919 = vmul.f32 %v1851, %v1879
        %v1920 = vmul.f32 %v1852, %v1879
        %v1921 = vmul.f32 %v1853, %v1879
        %v1922 = vmul.f32 %v1854, %v1879
        %v1923 = vmul.f32 %v1855, %v1879
        %v1924 = vmul.f32 %v1856, %v1879
        %v1925 = vmul.f32 %v1857, %v1879
        %v1926 = vmul.f32 %v1858, %v1879
        %v1927 = vmul.f32 %v1859, %v1879
        %v1928 = vmul.f32 %v1860, %v1879
        %v1929 = vmul.f32 %v1861, %v1879
        %v1930 = vmul.f32 %v1862, %v1879
        %v1931 = vmul.f32 %v1863, %v1879
        %v1932 = vmul.f32 %v1864, %v1879
        %v1933 = vmul.f32 %v1865, %v1879
        %v1934 = vmul.f32 %v1866, %v1879
        %v1935 = vmul.f32 %v1867, %v1879
        %v1936 = vmul.f32 %v1868, %v1879
        %v1937 = vmul.f32 %v1869, %v1879
        %v1938 = vmul.f32 %v1870, %v1879
        %v1939 = vmul.f32 %v1871, %v1879
        %v1940 = vmul.f32 %v1872, %v1879
        %v1941 = vmul.f32 %v1873, %v1879
        %v1942 = vmul.f32 %v1874, %v1879
        %v1943 = vmul.f32 %v1875, %v1879
        %v1944 = vlaneseq
        %v1945 = vshrl.u32 %v1944, 7
        %v1946 = vsub.s32 0, %v1945
        %v1947 = vrot.slane %v849, %v1946
        %v1948 = vadd.f32 %v1880, %v1947
        %v1949 = vadd.f32 %v1881, %v1947
        %v1950 = vadd.f32 %v1882, %v1947
        %v1951 = vadd.f32 %v1883, %v1947
        %v1952 = vadd.f32 %v1884, %v1947
        %v1953 = vadd.f32 %v1885, %v1947
        %v1954 = vadd.f32 %v1886, %v1947
        %v1955 = vadd.f32 %v1887, %v1947
        %v1956 = vadd.f32 %v1888, %v1947
        %v1957 = vadd.f32 %v1889, %v1947
        %v1958 = vadd.f32 %v1890, %v1947
        %v1959 = vadd.f32 %v1891, %v1947
        %v1960 = vadd.f32 %v1892, %v1947
        %v1961 = vadd.f32 %v1893, %v1947
        %v1962 = vadd.f32 %v1894, %v1947
        %v1963 = vadd.f32 %v1895, %v1947
        %v1964 = vadd.f32 %v1896, %v1947
        %v1965 = vadd.f32 %v1897, %v1947
        %v1966 = vadd.f32 %v1898, %v1947
        %v1967 = vadd.f32 %v1899, %v1947
        %v1968 = vadd.f32 %v1900, %v1947
        %v1969 = vadd.f32 %v1901, %v1947
        %v1970 = vadd.f32 %v1902, %v1947
        %v1971 = vadd.f32 %v1903, %v1947
        %v1972 = vadd.f32 %v1904, %v1947
        %v1973 = vadd.f32 %v1905, %v1947
        %v1974 = vadd.f32 %v1906, %v1947
        %v1975 = vadd.f32 %v1907, %v1947
        %v1976 = vadd.f32 %v1908, %v1947
        %v1977 = vadd.f32 %v1909, %v1947
        %v1978 = vadd.f32 %v1910, %v1947
        %v1979 = vadd.f32 %v1911, %v1947
        %v1980 = vadd.f32 %v1912, %v1947
        %v1981 = vadd.f32 %v1913, %v1947
        %v1982 = vadd.f32 %v1914, %v1947
        %v1983 = vadd.f32 %v1915, %v1947
        %v1984 = vadd.f32 %v1916, %v1947
        %v1985 = vadd.f32 %v1917, %v1947
        %v1986 = vadd.f32 %v1918, %v1947
        %v1987 = vadd.f32 %v1919, %v1947
        %v1988 = vadd.f32 %v1920, %v1947
        %v1989 = vadd.f32 %v1921, %v1947
        %v1990 = vadd.f32 %v1922, %v1947
        %v1991 = vadd.f32 %v1923, %v1947
        %v1992 = vadd.f32 %v1924, %v1947
        %v1993 = vadd.f32 %v1925, %v1947
        %v1994 = vadd.f32 %v1926, %v1947
        %v1995 = vadd.f32 %v1927, %v1947
        %v1996 = vadd.f32 %v1928, %v1947
        %v1997 = vadd.f32 %v1929, %v1947
        %v1998 = vadd.f32 %v1930, %v1947
        %v1999 = vadd.f32 %v1931, %v1947
        %v2000 = vadd.f32 %v1932, %v1947
        %v2001 = vadd.f32 %v1933, %v1947
        %v2002 = vadd.f32 %v1934, %v1947
        %v2003 = vadd.f32 %v1935, %v1947
        %v2004 = vadd.f32 %v1936, %v1947
        %v2005 = vadd.f32 %v1937, %v1947
        %v2006 = vadd.f32 %v1938, %v1947
        %v2007 = vadd.f32 %v1939, %v1947
        %v2008 = vadd.f32 %v1940, %v1947
        %v2009 = vadd.f32 %v1941, %v1947
        %v2010 = vadd.f32 %v1942, %v1947
        %v2011 = vadd.f32 %v1943, %v1947
        %v2012 = vpack.c.bf16 %v1949, %v1948
        %v2013 = vpack.c.bf16 %v1951, %v1950
        %v2014 = vpack.c.bf16 %v1953, %v1952
        %v2015 = vpack.c.bf16 %v1955, %v1954
        %v2016 = vpack.c.bf16 %v1957, %v1956
        %v2017 = vpack.c.bf16 %v1959, %v1958
        %v2018 = vpack.c.bf16 %v1961, %v1960
        %v2019 = vpack.c.bf16 %v1963, %v1962
        %v2020 = vpack.c.bf16 %v1965, %v1964
        %v2021 = vpack.c.bf16 %v1967, %v1966
        %v2022 = vpack.c.bf16 %v1969, %v1968
        %v2023 = vpack.c.bf16 %v1971, %v1970
        %v2024 = vpack.c.bf16 %v1973, %v1972
        %v2025 = vpack.c.bf16 %v1975, %v1974
        %v2026 = vpack.c.bf16 %v1977, %v1976
        %v2027 = vpack.c.bf16 %v1979, %v1978
        %v2028 = vpack.c.bf16 %v1981, %v1980
        %v2029 = vpack.c.bf16 %v1983, %v1982
        %v2030 = vpack.c.bf16 %v1985, %v1984
        %v2031 = vpack.c.bf16 %v1987, %v1986
        %v2032 = vpack.c.bf16 %v1989, %v1988
        %v2033 = vpack.c.bf16 %v1991, %v1990
        %v2034 = vpack.c.bf16 %v1993, %v1992
        %v2035 = vpack.c.bf16 %v1995, %v1994
        %v2036 = vpack.c.bf16 %v1997, %v1996
        %v2037 = vpack.c.bf16 %v1999, %v1998
        %v2038 = vpack.c.bf16 %v2001, %v2000
        %v2039 = vpack.c.bf16 %v2003, %v2002
        %v2040 = vpack.c.bf16 %v2005, %v2004
        %v2041 = vpack.c.bf16 %v2007, %v2006
        %v2042 = vpack.c.bf16 %v2009, %v2008
        %v2043 = vpack.c.bf16 %v2011, %v2010
        %v2044 = vld [vmem:[%s3] sm:$0xf]
        %v2045 = vld [vmem:[%s3 + $0x4] sm:$0xf]
        %v2046 = vld [vmem:[%s3 + $0x8] sm:$0xf]
        %v2047 = vld [vmem:[%s3 + $0xc] sm:$0xf]
        %v2048 = vld [vmem:[%s3 + $0x10] sm:$0xf]
        %v2049 = vld [vmem:[%s3 + $0x14] sm:$0xf]
        %v2050 = vld [vmem:[%s3 + $0x18] sm:$0xf]
        %v2051 = vld [vmem:[%s3 + $0x1c] sm:$0xf]
        %v2052 = vld [vmem:[%s4] sm:$0x1]
        %v2053 = vlaneseq
        %v2054 = vshrl.u32 %v2053, 7
        %v2055 = vsub.s32 0, %v2054
        %v2056 = vrot.slane %v2052, %v2055
        %v2065 = vunpack.c.l.b16 %v2044
        %v2066 = vunpack.c.l.b16 %v2045
        %v2067 = vunpack.c.l.b16 %v2046
        %v2068 = vunpack.c.l.b16 %v2047
        %v2069 = vunpack.c.l.b16 %v2048
        %v2070 = vunpack.c.l.b16 %v2049
        %v2071 = vunpack.c.l.b16 %v2050
        %v2072 = vunpack.c.l.b16 %v2051
        %v2073 = vpack.c.b16 %v2066, %v2065
        %v2074 = vpack.c.b16 %v2068, %v2067
        %v2075 = vpack.c.b16 %v2070, %v2069
        %v2076 = vpack.c.b16 %v2072, %v2071
        %v2082 = vsel %vm850, %v2012, 0
        %v2085 = vsel %vm850, %v2013, 0
        %v2088 = vsel %vm850, %v2014, 0
        %v2091 = vsel %vm850, %v2015, 0
        %v2094 = vsel %vm850, %v2016, 0
        %v2097 = vsel %vm850, %v2017, 0
        %v2100 = vsel %vm850, %v2018, 0
        %v2103 = vsel %vm850, %v2019, 0
        %v2106 = vsel %vm850, %v2020, 0
        %v2109 = vsel %vm850, %v2021, 0
        %v2112 = vsel %vm850, %v2022, 0
        %v2115 = vsel %vm850, %v2023, 0
        %v2118 = vsel %vm850, %v2024, 0
        %v2121 = vsel %vm850, %v2025, 0
        %v2124 = vsel %vm850, %v2026, 0
        %v2127 = vsel %vm850, %v2027, 0
        %v2130 = vsel %vm850, %v2028, 0
        %v2133 = vsel %vm850, %v2029, 0
        %v2136 = vsel %vm850, %v2030, 0
        %v2139 = vsel %vm850, %v2031, 0
        %v2142 = vsel %vm850, %v2032, 0
        %v2145 = vsel %vm850, %v2033, 0
        %v2148 = vsel %vm850, %v2034, 0
        %v2151 = vsel %vm850, %v2035, 0
        %v2154 = vsel %vm850, %v2036, 0
        %v2157 = vsel %vm850, %v2037, 0
        %v2160 = vsel %vm850, %v2038, 0
        %v2163 = vsel %vm850, %v2039, 0
        %v2166 = vsel %vm850, %v2040, 0
        %v2169 = vsel %vm850, %v2041, 0
        %v2172 = vsel %vm850, %v2042, 0
        %v2175 = vsel %vm850, %v2043, 0
        %2177 = vmatprep.subr.bf16.mxu0 0
        %2178 = vmatpush1.bf16.msra.mxu0 %v2073
        %2179 = vmatprep.subr.bf16.mxu0 0
        %2180 = vmatpush1.bf16.msra.mxu0 %v2074
        %2181 = vmatprep.subr.bf16.mxu0 0
        %2182 = vmatpush1.bf16.msra.mxu0 %v2075
        %2183 = vmatprep.subr.bf16.mxu0 0
        %2184 = vmatpush1.bf16.msra.mxu0 %v2076
        %2185 = vmatprep.subr.bf16.mxu0 0
        %2186 = vmatpush1.bf16.msra.mxu0 0
        %2187 = vmatprep.subr.bf16.mxu0 0
        %2188 = vmatpush1.bf16.msra.mxu0 0
        %2189 = vmatprep.subr.bf16.mxu0 0
        %2190 = vmatpush1.bf16.msra.mxu0 0
        %2191 = vmatprep.subr.bf16.mxu0 0
        %2192 = vmatpush1.bf16.msra.mxu0 0
        %2193 = vmatprep.subr.bf16.mxu0 0
        %2194 = vmatpush1.bf16.msra.mxu0 0
        %2195 = vmatprep.subr.bf16.mxu0 0
        %2196 = vmatpush1.bf16.msra.mxu0 0
        %2197 = vmatprep.subr.bf16.mxu0 0
        %2198 = vmatpush1.bf16.msra.mxu0 0
        %2199 = vmatprep.subr.bf16.mxu0 0
        %2200 = vmatpush1.bf16.msra.mxu0 0
        %2201 = vmatprep.subr.bf16.mxu0 0
        %2202 = vmatpush1.bf16.msra.mxu0 0
        %2203 = vmatprep.subr.bf16.mxu0 0
        %2204 = vmatpush1.bf16.msra.mxu0 0
        %2205 = vmatprep.subr.bf16.mxu0 0
        %2206 = vmatpush1.bf16.msra.mxu0 0
        %2207 = vmatprep.subr.bf16.mxu0 0
        %2208 = vmatpush1.bf16.msra.mxu0 0
        %2209 = vmatprep.mubr.bf16.mxu0 0
        %2210 = vmatmul.mubr.bf16.gmra.mrb[0].mxu0 %v2082
        %v2211 = vpop.f32.mrb[0].mxu0
        %v2212 = vadd.f32 %v2056, %v2211
        %v2213 = vpop.f32.mrb[0].mxu0
        %v2214 = vpop.f32.mrb[0].mxu0
        %v2215 = vadd.f32 %v2056, %v2214
        %v2216 = vpop.f32.mrb[0].mxu0
        %2217 = vmatprep.mubr.bf16.mxu0 0
        %2218 = vmatmul.mubr.bf16.gmra.mrb[0].mxu0 %v2085
        %v2219 = vpop.f32.mrb[0].mxu0
        %v2220 = vadd.f32 %v2056, %v2219
        %v2221 = vpop.f32.mrb[0].mxu0
        %v2222 = vpop.f32.mrb[0].mxu0
        %v2223 = vadd.f32 %v2056, %v2222
        %v2224 = vpop.f32.mrb[0].mxu0
        %2225 = vmatprep.mubr.bf16.mxu0 0
        %2226 = vmatmul.mubr.bf16.gmra.mrb[0].mxu0 %v2088
        %v2227 = vpop.f32.mrb[0].mxu0
        %v2228 = vadd.f32 %v2056, %v2227
        %v2229 = vpop.f32.mrb[0].mxu0
        %v2230 = vpop.f32.mrb[0].mxu0
        %v2231 = vadd.f32 %v2056, %v2230
        %v2232 = vpop.f32.mrb[0].mxu0
        %2233 = vmatprep.mubr.bf16.mxu0 0
        %2234 = vmatmul.mubr.bf16.gmra.mrb[0].mxu0 %v2091
        %v2235 = vpop.f32.mrb[0].mxu0
        %v2236 = vadd.f32 %v2056, %v2235
        %v2237 = vpop.f32.mrb[0].mxu0
        %v2238 = vpop.f32.mrb[0].mxu0
        %v2239 = vadd.f32 %v2056, %v2238
        %v2240 = vpop.f32.mrb[0].mxu0
        %2241 = vmatprep.mubr.bf16.mxu0 0
        %2242 = vmatmul.mubr.bf16.gmra.mrb[0].mxu0 %v2094
        %v2243 = vpop.f32.mrb[0].mxu0
        %v2244 = vadd.f32 %v2056, %v2243
        %v2245 = vpop.f32.mrb[0].mxu0
        %v2246 = vpop.f32.mrb[0].mxu0
        %v2247 = vadd.f32 %v2056, %v2246
        %v2248 = vpop.f32.mrb[0].mxu0
        %2249 = vmatprep.mubr.bf16.mxu0 0
        %2250 = vmatmul.mubr.bf16.gmra.mrb[0].mxu0 %v2097
        %v2251 = vpop.f32.mrb[0].mxu0
        %v2252 = vadd.f32 %v2056, %v2251
        %v2253 = vpop.f32.mrb[0].mxu0
        %v2254 = vpop.f32.mrb[0].mxu0
        %v2255 = vadd.f32 %v2056, %v2254
        %v2256 = vpop.f32.mrb[0].mxu0
        %2257 = vmatprep.mubr.bf16.mxu0 0
        %2258 = vmatmul.mubr.bf16.gmra.mrb[0].mxu0 %v2100
        %v2259 = vpop.f32.mrb[0].mxu0
        %v2260 = vadd.f32 %v2056, %v2259
        %v2261 = vpop.f32.mrb[0].mxu0
        %v2262 = vpop.f32.mrb[0].mxu0
        %v2263 = vadd.f32 %v2056, %v2262
        %v2264 = vpop.f32.mrb[0].mxu0
        %2265 = vmatprep.mubr.bf16.mxu0 0
        %2266 = vmatmul.mubr.bf16.gmra.mrb[0].mxu0 %v2103
        %v2267 = vpop.f32.mrb[0].mxu0
        %v2268 = vadd.f32 %v2056, %v2267
        %v2269 = vpop.f32.mrb[0].mxu0
        %v2270 = vpop.f32.mrb[0].mxu0
        %v2271 = vadd.f32 %v2056, %v2270
        %v2272 = vpop.f32.mrb[0].mxu0
        %2273 = vmatprep.mubr.bf16.mxu0 0
        %2274 = vmatmul.mubr.bf16.gmra.mrb[0].mxu0 %v2106
        %v2275 = vpop.f32.mrb[0].mxu0
        %v2276 = vadd.f32 %v2056, %v2275
        %v2277 = vpop.f32.mrb[0].mxu0
        %v2278 = vpop.f32.mrb[0].mxu0
        %v2279 = vadd.f32 %v2056, %v2278
        %v2280 = vpop.f32.mrb[0].mxu0
        %2281 = vmatprep.mubr.bf16.mxu0 0
        %2282 = vmatmul.mubr.bf16.gmra.mrb[0].mxu0 %v2109
        %v2283 = vpop.f32.mrb[0].mxu0
        %v2284 = vadd.f32 %v2056, %v2283
        %v2285 = vpop.f32.mrb[0].mxu0
        %v2286 = vpop.f32.mrb[0].mxu0
        %v2287 = vadd.f32 %v2056, %v2286
        %v2288 = vpop.f32.mrb[0].mxu0
        %2289 = vmatprep.mubr.bf16.mxu0 0
        %2290 = vmatmul.mubr.bf16.gmra.mrb[0].mxu0 %v2112
        %v2291 = vpop.f32.mrb[0].mxu0
        %v2292 = vadd.f32 %v2056, %v2291
        %v2293 = vpop.f32.mrb[0].mxu0
        %v2294 = vpop.f32.mrb[0].mxu0
        %v2295 = vadd.f32 %v2056, %v2294
        %v2296 = vpop.f32.mrb[0].mxu0
        %2297 = vmatprep.mubr.bf16.mxu0 0
        %2298 = vmatmul.mubr.bf16.gmra.mrb[0].mxu0 %v2115
        %v2299 = vpop.f32.mrb[0].mxu0
        %v2300 = vadd.f32 %v2056, %v2299
        %v2301 = vpop.f32.mrb[0].mxu0
        %v2302 = vpop.f32.mrb[0].mxu0
        %v2303 = vadd.f32 %v2056, %v2302
        %v2304 = vpop.f32.mrb[0].mxu0
        %2305 = vmatprep.mubr.bf16.mxu0 0
        %2306 = vmatmul.mubr.bf16.gmra.mrb[0].mxu0 %v2118
        %v2307 = vpop.f32.mrb[0].mxu0
        %v2308 = vadd.f32 %v2056, %v2307
        %v2309 = vpop.f32.mrb[0].mxu0
        %v2310 = vpop.f32.mrb[0].mxu0
        %v2311 = vadd.f32 %v2056, %v2310
        %v2312 = vpop.f32.mrb[0].mxu0
        %2313 = vmatprep.mubr.bf16.mxu0 0
        %2314 = vmatmul.mubr.bf16.gmra.mrb[0].mxu0 %v2121
        %v2315 = vpop.f32.mrb[0].mxu0
        %v2316 = vadd.f32 %v2056, %v2315
        %v2317 = vpop.f32.mrb[0].mxu0
        %v2318 = vpop.f32.mrb[0].mxu0
        %v2319 = vadd.f32 %v2056, %v2318
        %v2320 = vpop.f32.mrb[0].mxu0
        %2321 = vmatprep.mubr.bf16.mxu0 0
        %2322 = vmatmul.mubr.bf16.gmra.mrb[0].mxu0 %v2124
        %v2323 = vpop.f32.mrb[0].mxu0
        %v2324 = vadd.f32 %v2056, %v2323
        %v2325 = vpop.f32.mrb[0].mxu0
        %v2326 = vpop.f32.mrb[0].mxu0
        %v2327 = vadd.f32 %v2056, %v2326
        %v2328 = vpop.f32.mrb[0].mxu0
        %2329 = vmatprep.mubr.bf16.mxu0 0
        %2330 = vmatmul.mubr.bf16.gmra.mrb[0].mxu0 %v2127
        %v2331 = vpop.f32.mrb[0].mxu0
        %v2332 = vadd.f32 %v2056, %v2331
        %v2333 = vpop.f32.mrb[0].mxu0
        %v2334 = vpop.f32.mrb[0].mxu0
        %v2335 = vadd.f32 %v2056, %v2334
        %v2336 = vpop.f32.mrb[0].mxu0
        %2337 = vmatprep.mubr.bf16.mxu0 0
        %2338 = vmatmul.mubr.bf16.gmra.mrb[0].mxu0 %v2130
        %v2339 = vpop.f32.mrb[0].mxu0
        %v2340 = vadd.f32 %v2056, %v2339
        %v2341 = vpop.f32.mrb[0].mxu0
        %v2342 = vpop.f32.mrb[0].mxu0
        %v2343 = vadd.f32 %v2056, %v2342
        %v2344 = vpop.f32.mrb[0].mxu0
        %2345 = vmatprep.mubr.bf16.mxu0 0
        %2346 = vmatmul.mubr.bf16.gmra.mrb[0].mxu0 %v2133
        %v2347 = vpop.f32.mrb[0].mxu0
        %v2348 = vadd.f32 %v2056, %v2347
        %v2349 = vpop.f32.mrb[0].mxu0
        %v2350 = vpop.f32.mrb[0].mxu0
        %v2351 = vadd.f32 %v2056, %v2350
        %v2352 = vpop.f32.mrb[0].mxu0
        %2353 = vmatprep.mubr.bf16.mxu0 0
        %2354 = vmatmul.mubr.bf16.gmra.mrb[0].mxu0 %v2136
        %v2355 = vpop.f32.mrb[0].mxu0
        %v2356 = vadd.f32 %v2056, %v2355
        %v2357 = vpop.f32.mrb[0].mxu0
        %v2358 = vpop.f32.mrb[0].mxu0
        %v2359 = vadd.f32 %v2056, %v2358
        %v2360 = vpop.f32.mrb[0].mxu0
        %2361 = vmatprep.mubr.bf16.mxu0 0
        %2362 = vmatmul.mubr.bf16.gmra.mrb[0].mxu0 %v2139
        %v2363 = vpop.f32.mrb[0].mxu0
        %v2364 = vadd.f32 %v2056, %v2363
        %v2365 = vpop.f32.mrb[0].mxu0
        %v2366 = vpop.f32.mrb[0].mxu0
        %v2367 = vadd.f32 %v2056, %v2366
        %v2368 = vpop.f32.mrb[0].mxu0
        %2369 = vmatprep.mubr.bf16.mxu0 0
        %2370 = vmatmul.mubr.bf16.gmra.mrb[0].mxu0 %v2142
        %v2371 = vpop.f32.mrb[0].mxu0
        %v2372 = vadd.f32 %v2056, %v2371
        %v2373 = vpop.f32.mrb[0].mxu0
        %v2374 = vpop.f32.mrb[0].mxu0
        %v2375 = vadd.f32 %v2056, %v2374
        %v2376 = vpop.f32.mrb[0].mxu0
        %2377 = vmatprep.mubr.bf16.mxu0 0
        %2378 = vmatmul.mubr.bf16.gmra.mrb[0].mxu0 %v2145
        %v2379 = vpop.f32.mrb[0].mxu0
        %v2380 = vadd.f32 %v2056, %v2379
        %v2381 = vpop.f32.mrb[0].mxu0
        %v2382 = vpop.f32.mrb[0].mxu0
        %v2383 = vadd.f32 %v2056, %v2382
        %v2384 = vpop.f32.mrb[0].mxu0
        %2385 = vmatprep.mubr.bf16.mxu0 0
        %2386 = vmatmul.mubr.bf16.gmra.mrb[0].mxu0 %v2148
        %v2387 = vpop.f32.mrb[0].mxu0
        %v2388 = vadd.f32 %v2056, %v2387
        %v2389 = vpop.f32.mrb[0].mxu0
        %v2390 = vpop.f32.mrb[0].mxu0
        %v2391 = vadd.f32 %v2056, %v2390
        %v2392 = vpop.f32.mrb[0].mxu0
        %2393 = vmatprep.mubr.bf16.mxu0 0
        %2394 = vmatmul.mubr.bf16.gmra.mrb[0].mxu0 %v2151
        %v2395 = vpop.f32.mrb[0].mxu0
        %v2396 = vadd.f32 %v2056, %v2395
        %v2397 = vpop.f32.mrb[0].mxu0
        %v2398 = vpop.f32.mrb[0].mxu0
        %v2399 = vadd.f32 %v2056, %v2398
        %v2400 = vpop.f32.mrb[0].mxu0
        %2401 = vmatprep.mubr.bf16.mxu0 0
        %2402 = vmatmul.mubr.bf16.gmra.mrb[0].mxu0 %v2154
        %v2403 = vpop.f32.mrb[0].mxu0
        %v2404 = vadd.f32 %v2056, %v2403
        %v2405 = vpop.f32.mrb[0].mxu0
        %v2406 = vpop.f32.mrb[0].mxu0
        %v2407 = vadd.f32 %v2056, %v2406
        %v2408 = vpop.f32.mrb[0].mxu0
        %2409 = vmatprep.mubr.bf16.mxu0 0
        %2410 = vmatmul.mubr.bf16.gmra.mrb[0].mxu0 %v2157
        %v2411 = vpop.f32.mrb[0].mxu0
        %v2412 = vadd.f32 %v2056, %v2411
        %v2413 = vpop.f32.mrb[0].mxu0
        %v2414 = vpop.f32.mrb[0].mxu0
        %v2415 = vadd.f32 %v2056, %v2414
        %v2416 = vpop.f32.mrb[0].mxu0
        %2417 = vmatprep.mubr.bf16.mxu0 0
        %2418 = vmatmul.mubr.bf16.gmra.mrb[0].mxu0 %v2160
        %v2419 = vpop.f32.mrb[0].mxu0
        %v2420 = vadd.f32 %v2056, %v2419
        %v2421 = vpop.f32.mrb[0].mxu0
        %v2422 = vpop.f32.mrb[0].mxu0
        %v2423 = vadd.f32 %v2056, %v2422
        %v2424 = vpop.f32.mrb[0].mxu0
        %2425 = vmatprep.mubr.bf16.mxu0 0
        %2426 = vmatmul.mubr.bf16.gmra.mrb[0].mxu0 %v2163
        %v2427 = vpop.f32.mrb[0].mxu0
        %v2428 = vadd.f32 %v2056, %v2427
        %v2429 = vpop.f32.mrb[0].mxu0
        %v2430 = vpop.f32.mrb[0].mxu0
        %v2431 = vadd.f32 %v2056, %v2430
        %v2432 = vpop.f32.mrb[0].mxu0
        %2433 = vmatprep.mubr.bf16.mxu0 0
        %2434 = vmatmul.mubr.bf16.gmra.mrb[0].mxu0 %v2166
        %v2435 = vpop.f32.mrb[0].mxu0
        %v2436 = vadd.f32 %v2056, %v2435
        %v2437 = vpop.f32.mrb[0].mxu0
        %v2438 = vpop.f32.mrb[0].mxu0
        %v2439 = vadd.f32 %v2056, %v2438
        %v2440 = vpop.f32.mrb[0].mxu0
        %2441 = vmatprep.mubr.bf16.mxu0 0
        %2442 = vmatmul.mubr.bf16.gmra.mrb[0].mxu0 %v2169
        %v2443 = vpop.f32.mrb[0].mxu0
        %v2444 = vadd.f32 %v2056, %v2443
        %v2445 = vpop.f32.mrb[0].mxu0
        %v2446 = vpop.f32.mrb[0].mxu0
        %v2447 = vadd.f32 %v2056, %v2446
        %v2448 = vpop.f32.mrb[0].mxu0
        %2449 = vmatprep.mubr.bf16.mxu0 0
        %2450 = vmatmul.mubr.bf16.gmra.mrb[0].mxu0 %v2172
        %v2451 = vpop.f32.mrb[0].mxu0
        %v2452 = vadd.f32 %v2056, %v2451
        %v2453 = vpop.f32.mrb[0].mxu0
        %v2454 = vpop.f32.mrb[0].mxu0
        %v2455 = vadd.f32 %v2056, %v2454
        %v2456 = vpop.f32.mrb[0].mxu0
        %2457 = vmatprep.mubr.bf16.mxu0 0
        %2458 = vmatmul.mubr.bf16.gmra.mrb[0].mxu0 %v2175
        %v2459 = vpop.f32.mrb[0].mxu0
        %v2460 = vadd.f32 %v2056, %v2459
        %v2461 = vpop.f32.mrb[0].mxu0
        %v2462 = vpop.f32.mrb[0].mxu0
        %v2463 = vadd.f32 %v2056, %v2462
        %v2464 = vpop.f32.mrb[0].mxu0
        %2465 = vdwg.mxu0
        %v2466 = vmax.f32 %v2212, 0.0
        %v2467 = vmax.f32 %v2215, 0.0
        %v2468 = vmax.f32 %v2220, 0.0
        %v2469 = vmax.f32 %v2223, 0.0
        %v2470 = vmax.f32 %v2228, 0.0
        %v2471 = vmax.f32 %v2231, 0.0
        %v2472 = vmax.f32 %v2236, 0.0
        %v2473 = vmax.f32 %v2239, 0.0
        %v2474 = vmax.f32 %v2244, 0.0
        %v2475 = vmax.f32 %v2247, 0.0
        %v2476 = vmax.f32 %v2252, 0.0
        %v2477 = vmax.f32 %v2255, 0.0
        %v2478 = vmax.f32 %v2260, 0.0
        %v2479 = vmax.f32 %v2263, 0.0
        %v2480 = vmax.f32 %v2268, 0.0
        %v2481 = vmax.f32 %v2271, 0.0
        %v2482 = vmax.f32 %v2276, 0.0
        %v2483 = vmax.f32 %v2279, 0.0
        %v2484 = vmax.f32 %v2284, 0.0
        %v2485 = vmax.f32 %v2287, 0.0
        %v2486 = vmax.f32 %v2292, 0.0
        %v2487 = vmax.f32 %v2295, 0.0
        %v2488 = vmax.f32 %v2300, 0.0
        %v2489 = vmax.f32 %v2303, 0.0
        %v2490 = vmax.f32 %v2308, 0.0
        %v2491 = vmax.f32 %v2311, 0.0
        %v2492 = vmax.f32 %v2316, 0.0
        %v2493 = vmax.f32 %v2319, 0.0
        %v2494 = vmax.f32 %v2324, 0.0
        %v2495 = vmax.f32 %v2327, 0.0
        %v2496 = vmax.f32 %v2332, 0.0
        %v2497 = vmax.f32 %v2335, 0.0
        %v2498 = vmax.f32 %v2340, 0.0
        %v2499 = vmax.f32 %v2343, 0.0
        %v2500 = vmax.f32 %v2348, 0.0
        %v2501 = vmax.f32 %v2351, 0.0
        %v2502 = vmax.f32 %v2356, 0.0
        %v2503 = vmax.f32 %v2359, 0.0
        %v2504 = vmax.f32 %v2364, 0.0
        %v2505 = vmax.f32 %v2367, 0.0
        %v2506 = vmax.f32 %v2372, 0.0
        %v2507 = vmax.f32 %v2375, 0.0
        %v2508 = vmax.f32 %v2380, 0.0
        %v2509 = vmax.f32 %v2383, 0.0
        %v2510 = vmax.f32 %v2388, 0.0
        %v2511 = vmax.f32 %v2391, 0.0
        %v2512 = vmax.f32 %v2396, 0.0
        %v2513 = vmax.f32 %v2399, 0.0
        %v2514 = vmax.f32 %v2404, 0.0
        %v2515 = vmax.f32 %v2407, 0.0
        %v2516 = vmax.f32 %v2412, 0.0
        %v2517 = vmax.f32 %v2415, 0.0
        %v2518 = vmax.f32 %v2420, 0.0
        %v2519 = vmax.f32 %v2423, 0.0
        %v2520 = vmax.f32 %v2428, 0.0
        %v2521 = vmax.f32 %v2431, 0.0
        %v2522 = vmax.f32 %v2436, 0.0
        %v2523 = vmax.f32 %v2439, 0.0
        %v2524 = vmax.f32 %v2444, 0.0
        %v2525 = vmax.f32 %v2447, 0.0
        %v2526 = vmax.f32 %v2452, 0.0
        %v2527 = vmax.f32 %v2455, 0.0
        %v2528 = vmax.f32 %v2460, 0.0
        %v2529 = vmax.f32 %v2463, 0.0
        %v2530 = vld [vmem:[%s4 + $0x1] sm:$0x1]
        %v2531 = vld [vmem:[%s4 + $0x2] sm:$0x1]
        %v2532 = vsel %vm398, %v2466, 0.0
        %2533 = vadd.xlane.f32.xlu0 %v2532
        %v2534 = vpop.xlane.xlu0 %2533
        %v2535 = vsel %vm398, %v2467, 0.0
        %2536 = vadd.xlane.f32.xlu0 %v2535
        %v2537 = vpop.xlane.xlu0 %2536
        %v2538 = vsel %vm398, %v2468, 0.0
        %2539 = vadd.xlane.f32.xlu0 %v2538
        %v2540 = vpop.xlane.xlu0 %2539
        %v2541 = vsel %vm398, %v2469, 0.0
        %2542 = vadd.xlane.f32.xlu0 %v2541
        %v2543 = vpop.xlane.xlu0 %2542
        %v2544 = vsel %vm398, %v2470, 0.0
        %2545 = vadd.xlane.f32.xlu0 %v2544
        %v2546 = vpop.xlane.xlu0 %2545
        %v2547 = vsel %vm398, %v2471, 0.0
        %2548 = vadd.xlane.f32.xlu0 %v2547
        %v2549 = vpop.xlane.xlu0 %2548
        %v2550 = vsel %vm398, %v2472, 0.0
        %2551 = vadd.xlane.f32.xlu0 %v2550
        %v2552 = vpop.xlane.xlu0 %2551
        %v2553 = vsel %vm398, %v2473, 0.0
        %2554 = vadd.xlane.f32.xlu0 %v2553
        %v2555 = vpop.xlane.xlu0 %2554
        %v2556 = vsel %vm398, %v2474, 0.0
        %2557 = vadd.xlane.f32.xlu0 %v2556
        %v2558 = vpop.xlane.xlu0 %2557
        %v2559 = vsel %vm398, %v2475, 0.0
        %2560 = vadd.xlane.f32.xlu0 %v2559
        %v2561 = vpop.xlane.xlu0 %2560
        %v2562 = vsel %vm398, %v2476, 0.0
        %2563 = vadd.xlane.f32.xlu0 %v2562
        %v2564 = vpop.xlane.xlu0 %2563
        %v2565 = vsel %vm398, %v2477, 0.0
        %2566 = vadd.xlane.f32.xlu0 %v2565
        %v2567 = vpop.xlane.xlu0 %2566
        %v2568 = vsel %vm398, %v2478, 0.0
        %2569 = vadd.xlane.f32.xlu0 %v2568
        %v2570 = vpop.xlane.xlu0 %2569
        %v2571 = vsel %vm398, %v2479, 0.0
        %2572 = vadd.xlane.f32.xlu0 %v2571
        %v2573 = vpop.xlane.xlu0 %2572
        %v2574 = vsel %vm398, %v2480, 0.0
        %2575 = vadd.xlane.f32.xlu0 %v2574
        %v2576 = vpop.xlane.xlu0 %2575
        %v2577 = vsel %vm398, %v2481, 0.0
        %2578 = vadd.xlane.f32.xlu0 %v2577
        %v2579 = vpop.xlane.xlu0 %2578
        %v2580 = vsel %vm398, %v2482, 0.0
        %2581 = vadd.xlane.f32.xlu0 %v2580
        %v2582 = vpop.xlane.xlu0 %2581
        %v2583 = vsel %vm398, %v2483, 0.0
        %2584 = vadd.xlane.f32.xlu0 %v2583
        %v2585 = vpop.xlane.xlu0 %2584
        %v2586 = vsel %vm398, %v2484, 0.0
        %2587 = vadd.xlane.f32.xlu0 %v2586
        %v2588 = vpop.xlane.xlu0 %2587
        %v2589 = vsel %vm398, %v2485, 0.0
        %2590 = vadd.xlane.f32.xlu0 %v2589
        %v2591 = vpop.xlane.xlu0 %2590
        %v2592 = vsel %vm398, %v2486, 0.0
        %2593 = vadd.xlane.f32.xlu0 %v2592
        %v2594 = vpop.xlane.xlu0 %2593
        %v2595 = vsel %vm398, %v2487, 0.0
        %2596 = vadd.xlane.f32.xlu0 %v2595
        %v2597 = vpop.xlane.xlu0 %2596
        %v2598 = vsel %vm398, %v2488, 0.0
        %2599 = vadd.xlane.f32.xlu0 %v2598
        %v2600 = vpop.xlane.xlu0 %2599
        %v2601 = vsel %vm398, %v2489, 0.0
        %2602 = vadd.xlane.f32.xlu0 %v2601
        %v2603 = vpop.xlane.xlu0 %2602
        %v2604 = vsel %vm398, %v2490, 0.0
        %2605 = vadd.xlane.f32.xlu0 %v2604
        %v2606 = vpop.xlane.xlu0 %2605
        %v2607 = vsel %vm398, %v2491, 0.0
        %2608 = vadd.xlane.f32.xlu0 %v2607
        %v2609 = vpop.xlane.xlu0 %2608
        %v2610 = vsel %vm398, %v2492, 0.0
        %2611 = vadd.xlane.f32.xlu0 %v2610
        %v2612 = vpop.xlane.xlu0 %2611
        %v2613 = vsel %vm398, %v2493, 0.0
        %2614 = vadd.xlane.f32.xlu0 %v2613
        %v2615 = vpop.xlane.xlu0 %2614
        %v2616 = vsel %vm398, %v2494, 0.0
        %2617 = vadd.xlane.f32.xlu0 %v2616
        %v2618 = vpop.xlane.xlu0 %2617
        %v2619 = vsel %vm398, %v2495, 0.0
        %2620 = vadd.xlane.f32.xlu0 %v2619
        %v2621 = vpop.xlane.xlu0 %2620
        %v2622 = vsel %vm398, %v2496, 0.0
        %2623 = vadd.xlane.f32.xlu0 %v2622
        %v2624 = vpop.xlane.xlu0 %2623
        %v2625 = vsel %vm398, %v2497, 0.0
        %2626 = vadd.xlane.f32.xlu0 %v2625
        %v2627 = vpop.xlane.xlu0 %2626
        %v2628 = vsel %vm398, %v2498, 0.0
        %2629 = vadd.xlane.f32.xlu0 %v2628
        %v2630 = vpop.xlane.xlu0 %2629
        %v2631 = vsel %vm398, %v2499, 0.0
        %2632 = vadd.xlane.f32.xlu0 %v2631
        %v2633 = vpop.xlane.xlu0 %2632
        %v2634 = vsel %vm398, %v2500, 0.0
        %2635 = vadd.xlane.f32.xlu0 %v2634
        %v2636 = vpop.xlane.xlu0 %2635
        %v2637 = vsel %vm398, %v2501, 0.0
        %2638 = vadd.xlane.f32.xlu0 %v2637
        %v2639 = vpop.xlane.xlu0 %2638
        %v2640 = vsel %vm398, %v2502, 0.0
        %2641 = vadd.xlane.f32.xlu0 %v2640
        %v2642 = vpop.xlane.xlu0 %2641
        %v2643 = vsel %vm398, %v2503, 0.0
        %2644 = vadd.xlane.f32.xlu0 %v2643
        %v2645 = vpop.xlane.xlu0 %2644
        %v2646 = vsel %vm398, %v2504, 0.0
        %2647 = vadd.xlane.f32.xlu0 %v2646
        %v2648 = vpop.xlane.xlu0 %2647
        %v2649 = vsel %vm398, %v2505, 0.0
        %2650 = vadd.xlane.f32.xlu0 %v2649
        %v2651 = vpop.xlane.xlu0 %2650
        %v2652 = vsel %vm398, %v2506, 0.0
        %2653 = vadd.xlane.f32.xlu0 %v2652
        %v2654 = vpop.xlane.xlu0 %2653
        %v2655 = vsel %vm398, %v2507, 0.0
        %2656 = vadd.xlane.f32.xlu0 %v2655
        %v2657 = vpop.xlane.xlu0 %2656
        %v2658 = vsel %vm398, %v2508, 0.0
        %2659 = vadd.xlane.f32.xlu0 %v2658
        %v2660 = vpop.xlane.xlu0 %2659
        %v2661 = vsel %vm398, %v2509, 0.0
        %2662 = vadd.xlane.f32.xlu0 %v2661
        %v2663 = vpop.xlane.xlu0 %2662
        %v2664 = vsel %vm398, %v2510, 0.0
        %2665 = vadd.xlane.f32.xlu0 %v2664
        %v2666 = vpop.xlane.xlu0 %2665
        %v2667 = vsel %vm398, %v2511, 0.0
        %2668 = vadd.xlane.f32.xlu0 %v2667
        %v2669 = vpop.xlane.xlu0 %2668
        %v2670 = vsel %vm398, %v2512, 0.0
        %2671 = vadd.xlane.f32.xlu0 %v2670
        %v2672 = vpop.xlane.xlu0 %2671
        %v2673 = vsel %vm398, %v2513, 0.0
        %2674 = vadd.xlane.f32.xlu0 %v2673
        %v2675 = vpop.xlane.xlu0 %2674
        %v2676 = vsel %vm398, %v2514, 0.0
        %2677 = vadd.xlane.f32.xlu0 %v2676
        %v2678 = vpop.xlane.xlu0 %2677
        %v2679 = vsel %vm398, %v2515, 0.0
        %2680 = vadd.xlane.f32.xlu0 %v2679
        %v2681 = vpop.xlane.xlu0 %2680
        %v2682 = vsel %vm398, %v2516, 0.0
        %2683 = vadd.xlane.f32.xlu0 %v2682
        %v2684 = vpop.xlane.xlu0 %2683
        %v2685 = vsel %vm398, %v2517, 0.0
        %2686 = vadd.xlane.f32.xlu0 %v2685
        %v2687 = vpop.xlane.xlu0 %2686
        %v2688 = vsel %vm398, %v2518, 0.0
        %2689 = vadd.xlane.f32.xlu0 %v2688
        %v2690 = vpop.xlane.xlu0 %2689
        %v2691 = vsel %vm398, %v2519, 0.0
        %2692 = vadd.xlane.f32.xlu0 %v2691
        %v2693 = vpop.xlane.xlu0 %2692
        %v2694 = vsel %vm398, %v2520, 0.0
        %2695 = vadd.xlane.f32.xlu0 %v2694
        %v2696 = vpop.xlane.xlu0 %2695
        %v2697 = vsel %vm398, %v2521, 0.0
        %2698 = vadd.xlane.f32.xlu0 %v2697
        %v2699 = vpop.xlane.xlu0 %2698
        %v2700 = vsel %vm398, %v2522, 0.0
        %2701 = vadd.xlane.f32.xlu0 %v2700
        %v2702 = vpop.xlane.xlu0 %2701
        %v2703 = vsel %vm398, %v2523, 0.0
        %2704 = vadd.xlane.f32.xlu0 %v2703
        %v2705 = vpop.xlane.xlu0 %2704
        %v2706 = vsel %vm398, %v2524, 0.0
        %2707 = vadd.xlane.f32.xlu0 %v2706
        %v2708 = vpop.xlane.xlu0 %2707
        %v2709 = vsel %vm398, %v2525, 0.0
        %2710 = vadd.xlane.f32.xlu0 %v2709
        %v2711 = vpop.xlane.xlu0 %2710
        %v2712 = vsel %vm398, %v2526, 0.0
        %2713 = vadd.xlane.f32.xlu0 %v2712
        %v2714 = vpop.xlane.xlu0 %2713
        %v2715 = vsel %vm398, %v2527, 0.0
        %2716 = vadd.xlane.f32.xlu0 %v2715
        %v2717 = vpop.xlane.xlu0 %2716
        %v2718 = vsel %vm398, %v2528, 0.0
        %2719 = vadd.xlane.f32.xlu0 %v2718
        %v2720 = vpop.xlane.xlu0 %2719
        %v2721 = vsel %vm398, %v2529, 0.0
        %2722 = vadd.xlane.f32.xlu0 %v2721
        %v2723 = vpop.xlane.xlu0 %2722
        %v2724 = vrcp.pop 32.0
        %v2725 = vmul.f32 %v2534, %v2724
        %v2726 = vmul.f32 %v2537, %v2724
        %v2727 = vmul.f32 %v2540, %v2724
        %v2728 = vmul.f32 %v2543, %v2724
        %v2729 = vmul.f32 %v2546, %v2724
        %v2730 = vmul.f32 %v2549, %v2724
        %v2731 = vmul.f32 %v2552, %v2724
        %v2732 = vmul.f32 %v2555, %v2724
        %v2733 = vmul.f32 %v2558, %v2724
        %v2734 = vmul.f32 %v2561, %v2724
        %v2735 = vmul.f32 %v2564, %v2724
        %v2736 = vmul.f32 %v2567, %v2724
        %v2737 = vmul.f32 %v2570, %v2724
        %v2738 = vmul.f32 %v2573, %v2724
        %v2739 = vmul.f32 %v2576, %v2724
        %v2740 = vmul.f32 %v2579, %v2724
        %v2741 = vmul.f32 %v2582, %v2724
        %v2742 = vmul.f32 %v2585, %v2724
        %v2743 = vmul.f32 %v2588, %v2724
        %v2744 = vmul.f32 %v2591, %v2724
        %v2745 = vmul.f32 %v2594, %v2724
        %v2746 = vmul.f32 %v2597, %v2724
        %v2747 = vmul.f32 %v2600, %v2724
        %v2748 = vmul.f32 %v2603, %v2724
        %v2749 = vmul.f32 %v2606, %v2724
        %v2750 = vmul.f32 %v2609, %v2724
        %v2751 = vmul.f32 %v2612, %v2724
        %v2752 = vmul.f32 %v2615, %v2724
        %v2753 = vmul.f32 %v2618, %v2724
        %v2754 = vmul.f32 %v2621, %v2724
        %v2755 = vmul.f32 %v2624, %v2724
        %v2756 = vmul.f32 %v2627, %v2724
        %v2757 = vmul.f32 %v2630, %v2724
        %v2758 = vmul.f32 %v2633, %v2724
        %v2759 = vmul.f32 %v2636, %v2724
        %v2760 = vmul.f32 %v2639, %v2724
        %v2761 = vmul.f32 %v2642, %v2724
        %v2762 = vmul.f32 %v2645, %v2724
        %v2763 = vmul.f32 %v2648, %v2724
        %v2764 = vmul.f32 %v2651, %v2724
        %v2765 = vmul.f32 %v2654, %v2724
        %v2766 = vmul.f32 %v2657, %v2724
        %v2767 = vmul.f32 %v2660, %v2724
        %v2768 = vmul.f32 %v2663, %v2724
        %v2769 = vmul.f32 %v2666, %v2724
        %v2770 = vmul.f32 %v2669, %v2724
        %v2771 = vmul.f32 %v2672, %v2724
        %v2772 = vmul.f32 %v2675, %v2724
        %v2773 = vmul.f32 %v2678, %v2724
        %v2774 = vmul.f32 %v2681, %v2724
        %v2775 = vmul.f32 %v2684, %v2724
        %v2776 = vmul.f32 %v2687, %v2724
        %v2777 = vmul.f32 %v2690, %v2724
        %v2778 = vmul.f32 %v2693, %v2724
        %v2779 = vmul.f32 %v2696, %v2724
        %v2780 = vmul.f32 %v2699, %v2724
        %v2781 = vmul.f32 %v2702, %v2724
        %v2782 = vmul.f32 %v2705, %v2724
        %v2783 = vmul.f32 %v2708, %v2724
        %v2784 = vmul.f32 %v2711, %v2724
        %v2785 = vmul.f32 %v2714, %v2724
        %v2786 = vmul.f32 %v2717, %v2724
        %v2787 = vmul.f32 %v2720, %v2724
        %v2788 = vmul.f32 %v2723, %v2724
        %v2789 = vmul.f32 %v2466, %v2466
        %v2790 = vmul.f32 %v2467, %v2467
        %v2791 = vmul.f32 %v2468, %v2468
        %v2792 = vmul.f32 %v2469, %v2469
        %v2793 = vmul.f32 %v2470, %v2470
        %v2794 = vmul.f32 %v2471, %v2471
        %v2795 = vmul.f32 %v2472, %v2472
        %v2796 = vmul.f32 %v2473, %v2473
        %v2797 = vmul.f32 %v2474, %v2474
        %v2798 = vmul.f32 %v2475, %v2475
        %v2799 = vmul.f32 %v2476, %v2476
        %v2800 = vmul.f32 %v2477, %v2477
        %v2801 = vmul.f32 %v2478, %v2478
        %v2802 = vmul.f32 %v2479, %v2479
        %v2803 = vmul.f32 %v2480, %v2480
        %v2804 = vmul.f32 %v2481, %v2481
        %v2805 = vmul.f32 %v2482, %v2482
        %v2806 = vmul.f32 %v2483, %v2483
        %v2807 = vmul.f32 %v2484, %v2484
        %v2808 = vmul.f32 %v2485, %v2485
        %v2809 = vmul.f32 %v2486, %v2486
        %v2810 = vmul.f32 %v2487, %v2487
        %v2811 = vmul.f32 %v2488, %v2488
        %v2812 = vmul.f32 %v2489, %v2489
        %v2813 = vmul.f32 %v2490, %v2490
        %v2814 = vmul.f32 %v2491, %v2491
        %v2815 = vmul.f32 %v2492, %v2492
        %v2816 = vmul.f32 %v2493, %v2493
        %v2817 = vmul.f32 %v2494, %v2494
        %v2818 = vmul.f32 %v2495, %v2495
        %v2819 = vmul.f32 %v2496, %v2496
        %v2820 = vmul.f32 %v2497, %v2497
        %v2821 = vmul.f32 %v2498, %v2498
        %v2822 = vmul.f32 %v2499, %v2499
        %v2823 = vmul.f32 %v2500, %v2500
        %v2824 = vmul.f32 %v2501, %v2501
        %v2825 = vmul.f32 %v2502, %v2502
        %v2826 = vmul.f32 %v2503, %v2503
        %v2827 = vmul.f32 %v2504, %v2504
        %v2828 = vmul.f32 %v2505, %v2505
        %v2829 = vmul.f32 %v2506, %v2506
        %v2830 = vmul.f32 %v2507, %v2507
        %v2831 = vmul.f32 %v2508, %v2508
        %v2832 = vmul.f32 %v2509, %v2509
        %v2833 = vmul.f32 %v2510, %v2510
        %v2834 = vmul.f32 %v2511, %v2511
        %v2835 = vmul.f32 %v2512, %v2512
        %v2836 = vmul.f32 %v2513, %v2513
        %v2837 = vmul.f32 %v2514, %v2514
        %v2838 = vmul.f32 %v2515, %v2515
        %v2839 = vmul.f32 %v2516, %v2516
        %v2840 = vmul.f32 %v2517, %v2517
        %v2841 = vmul.f32 %v2518, %v2518
        %v2842 = vmul.f32 %v2519, %v2519
        %v2843 = vmul.f32 %v2520, %v2520
        %v2844 = vmul.f32 %v2521, %v2521
        %v2845 = vmul.f32 %v2522, %v2522
        %v2846 = vmul.f32 %v2523, %v2523
        %v2847 = vmul.f32 %v2524, %v2524
        %v2848 = vmul.f32 %v2525, %v2525
        %v2849 = vmul.f32 %v2526, %v2526
        %v2850 = vmul.f32 %v2527, %v2527
        %v2851 = vmul.f32 %v2528, %v2528
        %v2852 = vmul.f32 %v2529, %v2529
        %v2853 = vsel %vm398, %v2789, 0.0
        %2854 = vadd.xlane.f32.xlu0 %v2853
        %v2855 = vpop.xlane.xlu0 %2854
        %v2856 = vsel %vm398, %v2790, 0.0
        %2857 = vadd.xlane.f32.xlu0 %v2856
        %v2858 = vpop.xlane.xlu0 %2857
        %v2859 = vsel %vm398, %v2791, 0.0
        %2860 = vadd.xlane.f32.xlu0 %v2859
        %v2861 = vpop.xlane.xlu0 %2860
        %v2862 = vsel %vm398, %v2792, 0.0
        %2863 = vadd.xlane.f32.xlu0 %v2862
        %v2864 = vpop.xlane.xlu0 %2863
        %v2865 = vsel %vm398, %v2793, 0.0
        %2866 = vadd.xlane.f32.xlu0 %v2865
        %v2867 = vpop.xlane.xlu0 %2866
        %v2868 = vsel %vm398, %v2794, 0.0
        %2869 = vadd.xlane.f32.xlu0 %v2868
        %v2870 = vpop.xlane.xlu0 %2869
        %v2871 = vsel %vm398, %v2795, 0.0
        %2872 = vadd.xlane.f32.xlu0 %v2871
        %v2873 = vpop.xlane.xlu0 %2872
        %v2874 = vsel %vm398, %v2796, 0.0
        %2875 = vadd.xlane.f32.xlu0 %v2874
        %v2876 = vpop.xlane.xlu0 %2875
        %v2877 = vsel %vm398, %v2797, 0.0
        %2878 = vadd.xlane.f32.xlu0 %v2877
        %v2879 = vpop.xlane.xlu0 %2878
        %v2880 = vsel %vm398, %v2798, 0.0
        %2881 = vadd.xlane.f32.xlu0 %v2880
        %v2882 = vpop.xlane.xlu0 %2881
        %v2883 = vsel %vm398, %v2799, 0.0
        %2884 = vadd.xlane.f32.xlu0 %v2883
        %v2885 = vpop.xlane.xlu0 %2884
        %v2886 = vsel %vm398, %v2800, 0.0
        %2887 = vadd.xlane.f32.xlu0 %v2886
        %v2888 = vpop.xlane.xlu0 %2887
        %v2889 = vsel %vm398, %v2801, 0.0
        %2890 = vadd.xlane.f32.xlu0 %v2889
        %v2891 = vpop.xlane.xlu0 %2890
        %v2892 = vsel %vm398, %v2802, 0.0
        %2893 = vadd.xlane.f32.xlu0 %v2892
        %v2894 = vpop.xlane.xlu0 %2893
        %v2895 = vsel %vm398, %v2803, 0.0
        %2896 = vadd.xlane.f32.xlu0 %v2895
        %v2897 = vpop.xlane.xlu0 %2896
        %v2898 = vsel %vm398, %v2804, 0.0
        %2899 = vadd.xlane.f32.xlu0 %v2898
        %v2900 = vpop.xlane.xlu0 %2899
        %v2901 = vsel %vm398, %v2805, 0.0
        %2902 = vadd.xlane.f32.xlu0 %v2901
        %v2903 = vpop.xlane.xlu0 %2902
        %v2904 = vsel %vm398, %v2806, 0.0
        %2905 = vadd.xlane.f32.xlu0 %v2904
        %v2906 = vpop.xlane.xlu0 %2905
        %v2907 = vsel %vm398, %v2807, 0.0
        %2908 = vadd.xlane.f32.xlu0 %v2907
        %v2909 = vpop.xlane.xlu0 %2908
        %v2910 = vsel %vm398, %v2808, 0.0
        %2911 = vadd.xlane.f32.xlu0 %v2910
        %v2912 = vpop.xlane.xlu0 %2911
        %v2913 = vsel %vm398, %v2809, 0.0
        %2914 = vadd.xlane.f32.xlu0 %v2913
        %v2915 = vpop.xlane.xlu0 %2914
        %v2916 = vsel %vm398, %v2810, 0.0
        %2917 = vadd.xlane.f32.xlu0 %v2916
        %v2918 = vpop.xlane.xlu0 %2917
        %v2919 = vsel %vm398, %v2811, 0.0
        %2920 = vadd.xlane.f32.xlu0 %v2919
        %v2921 = vpop.xlane.xlu0 %2920
        %v2922 = vsel %vm398, %v2812, 0.0
        %2923 = vadd.xlane.f32.xlu0 %v2922
        %v2924 = vpop.xlane.xlu0 %2923
        %v2925 = vsel %vm398, %v2813, 0.0
        %2926 = vadd.xlane.f32.xlu0 %v2925
        %v2927 = vpop.xlane.xlu0 %2926
        %v2928 = vsel %vm398, %v2814, 0.0
        %2929 = vadd.xlane.f32.xlu0 %v2928
        %v2930 = vpop.xlane.xlu0 %2929
        %v2931 = vsel %vm398, %v2815, 0.0
        %2932 = vadd.xlane.f32.xlu0 %v2931
        %v2933 = vpop.xlane.xlu0 %2932
        %v2934 = vsel %vm398, %v2816, 0.0
        %2935 = vadd.xlane.f32.xlu0 %v2934
        %v2936 = vpop.xlane.xlu0 %2935
        %v2937 = vsel %vm398, %v2817, 0.0
        %2938 = vadd.xlane.f32.xlu0 %v2937
        %v2939 = vpop.xlane.xlu0 %2938
        %v2940 = vsel %vm398, %v2818, 0.0
        %2941 = vadd.xlane.f32.xlu0 %v2940
        %v2942 = vpop.xlane.xlu0 %2941
        %v2943 = vsel %vm398, %v2819, 0.0
        %2944 = vadd.xlane.f32.xlu0 %v2943
        %v2945 = vpop.xlane.xlu0 %2944
        %v2946 = vsel %vm398, %v2820, 0.0
        %2947 = vadd.xlane.f32.xlu0 %v2946
        %v2948 = vpop.xlane.xlu0 %2947
        %v2949 = vsel %vm398, %v2821, 0.0
        %2950 = vadd.xlane.f32.xlu0 %v2949
        %v2951 = vpop.xlane.xlu0 %2950
        %v2952 = vsel %vm398, %v2822, 0.0
        %2953 = vadd.xlane.f32.xlu0 %v2952
        %v2954 = vpop.xlane.xlu0 %2953
        %v2955 = vsel %vm398, %v2823, 0.0
        %2956 = vadd.xlane.f32.xlu0 %v2955
        %v2957 = vpop.xlane.xlu0 %2956
        %v2958 = vsel %vm398, %v2824, 0.0
        %2959 = vadd.xlane.f32.xlu0 %v2958
        %v2960 = vpop.xlane.xlu0 %2959
        %v2961 = vsel %vm398, %v2825, 0.0
        %2962 = vadd.xlane.f32.xlu0 %v2961
        %v2963 = vpop.xlane.xlu0 %2962
        %v2964 = vsel %vm398, %v2826, 0.0
        %2965 = vadd.xlane.f32.xlu0 %v2964
        %v2966 = vpop.xlane.xlu0 %2965
        %v2967 = vsel %vm398, %v2827, 0.0
        %2968 = vadd.xlane.f32.xlu0 %v2967
        %v2969 = vpop.xlane.xlu0 %2968
        %v2970 = vsel %vm398, %v2828, 0.0
        %2971 = vadd.xlane.f32.xlu0 %v2970
        %v2972 = vpop.xlane.xlu0 %2971
        %v2973 = vsel %vm398, %v2829, 0.0
        %2974 = vadd.xlane.f32.xlu0 %v2973
        %v2975 = vpop.xlane.xlu0 %2974
        %v2976 = vsel %vm398, %v2830, 0.0
        %2977 = vadd.xlane.f32.xlu0 %v2976
        %v2978 = vpop.xlane.xlu0 %2977
        %v2979 = vsel %vm398, %v2831, 0.0
        %2980 = vadd.xlane.f32.xlu0 %v2979
        %v2981 = vpop.xlane.xlu0 %2980
        %v2982 = vsel %vm398, %v2832, 0.0
        %2983 = vadd.xlane.f32.xlu0 %v2982
        %v2984 = vpop.xlane.xlu0 %2983
        %v2985 = vsel %vm398, %v2833, 0.0
        %2986 = vadd.xlane.f32.xlu0 %v2985
        %v2987 = vpop.xlane.xlu0 %2986
        %v2988 = vsel %vm398, %v2834, 0.0
        %2989 = vadd.xlane.f32.xlu0 %v2988
        %v2990 = vpop.xlane.xlu0 %2989
        %v2991 = vsel %vm398, %v2835, 0.0
        %2992 = vadd.xlane.f32.xlu0 %v2991
        %v2993 = vpop.xlane.xlu0 %2992
        %v2994 = vsel %vm398, %v2836, 0.0
        %2995 = vadd.xlane.f32.xlu0 %v2994
        %v2996 = vpop.xlane.xlu0 %2995
        %v2997 = vsel %vm398, %v2837, 0.0
        %2998 = vadd.xlane.f32.xlu0 %v2997
        %v2999 = vpop.xlane.xlu0 %2998
        %v3000 = vsel %vm398, %v2838, 0.0
        %3001 = vadd.xlane.f32.xlu0 %v3000
        %v3002 = vpop.xlane.xlu0 %3001
        %v3003 = vsel %vm398, %v2839, 0.0
        %3004 = vadd.xlane.f32.xlu0 %v3003
        %v3005 = vpop.xlane.xlu0 %3004
        %v3006 = vsel %vm398, %v2840, 0.0
        %3007 = vadd.xlane.f32.xlu0 %v3006
        %v3008 = vpop.xlane.xlu0 %3007
        %v3009 = vsel %vm398, %v2841, 0.0
        %3010 = vadd.xlane.f32.xlu0 %v3009
        %v3011 = vpop.xlane.xlu0 %3010
        %v3012 = vsel %vm398, %v2842, 0.0
        %3013 = vadd.xlane.f32.xlu0 %v3012
        %v3014 = vpop.xlane.xlu0 %3013
        %v3015 = vsel %vm398, %v2843, 0.0
        %3016 = vadd.xlane.f32.xlu0 %v3015
        %v3017 = vpop.xlane.xlu0 %3016
        %v3018 = vsel %vm398, %v2844, 0.0
        %3019 = vadd.xlane.f32.xlu0 %v3018
        %v3020 = vpop.xlane.xlu0 %3019
        %v3021 = vsel %vm398, %v2845, 0.0
        %3022 = vadd.xlane.f32.xlu0 %v3021
        %v3023 = vpop.xlane.xlu0 %3022
        %v3024 = vsel %vm398, %v2846, 0.0
        %3025 = vadd.xlane.f32.xlu0 %v3024
        %v3026 = vpop.xlane.xlu0 %3025
        %v3027 = vsel %vm398, %v2847, 0.0
        %3028 = vadd.xlane.f32.xlu0 %v3027
        %v3029 = vpop.xlane.xlu0 %3028
        %v3030 = vsel %vm398, %v2848, 0.0
        %3031 = vadd.xlane.f32.xlu0 %v3030
        %v3032 = vpop.xlane.xlu0 %3031
        %v3033 = vsel %vm398, %v2849, 0.0
        %3034 = vadd.xlane.f32.xlu0 %v3033
        %v3035 = vpop.xlane.xlu0 %3034
        %v3036 = vsel %vm398, %v2850, 0.0
        %3037 = vadd.xlane.f32.xlu0 %v3036
        %v3038 = vpop.xlane.xlu0 %3037
        %v3039 = vsel %vm398, %v2851, 0.0
        %3040 = vadd.xlane.f32.xlu0 %v3039
        %v3041 = vpop.xlane.xlu0 %3040
        %v3042 = vsel %vm398, %v2852, 0.0
        %3043 = vadd.xlane.f32.xlu0 %v3042
        %v3044 = vpop.xlane.xlu0 %3043
        %v3045 = vmul.f32 %v2855, %v2724
        %v3046 = vmul.f32 %v2858, %v2724
        %v3047 = vmul.f32 %v2861, %v2724
        %v3048 = vmul.f32 %v2864, %v2724
        %v3049 = vmul.f32 %v2867, %v2724
        %v3050 = vmul.f32 %v2870, %v2724
        %v3051 = vmul.f32 %v2873, %v2724
        %v3052 = vmul.f32 %v2876, %v2724
        %v3053 = vmul.f32 %v2879, %v2724
        %v3054 = vmul.f32 %v2882, %v2724
        %v3055 = vmul.f32 %v2885, %v2724
        %v3056 = vmul.f32 %v2888, %v2724
        %v3057 = vmul.f32 %v2891, %v2724
        %v3058 = vmul.f32 %v2894, %v2724
        %v3059 = vmul.f32 %v2897, %v2724
        %v3060 = vmul.f32 %v2900, %v2724
        %v3061 = vmul.f32 %v2903, %v2724
        %v3062 = vmul.f32 %v2906, %v2724
        %v3063 = vmul.f32 %v2909, %v2724
        %v3064 = vmul.f32 %v2912, %v2724
        %v3065 = vmul.f32 %v2915, %v2724
        %v3066 = vmul.f32 %v2918, %v2724
        %v3067 = vmul.f32 %v2921, %v2724
        %v3068 = vmul.f32 %v2924, %v2724
        %v3069 = vmul.f32 %v2927, %v2724
        %v3070 = vmul.f32 %v2930, %v2724
        %v3071 = vmul.f32 %v2933, %v2724
        %v3072 = vmul.f32 %v2936, %v2724
        %v3073 = vmul.f32 %v2939, %v2724
        %v3074 = vmul.f32 %v2942, %v2724
        %v3075 = vmul.f32 %v2945, %v2724
        %v3076 = vmul.f32 %v2948, %v2724
        %v3077 = vmul.f32 %v2951, %v2724
        %v3078 = vmul.f32 %v2954, %v2724
        %v3079 = vmul.f32 %v2957, %v2724
        %v3080 = vmul.f32 %v2960, %v2724
        %v3081 = vmul.f32 %v2963, %v2724
        %v3082 = vmul.f32 %v2966, %v2724
        %v3083 = vmul.f32 %v2969, %v2724
        %v3084 = vmul.f32 %v2972, %v2724
        %v3085 = vmul.f32 %v2975, %v2724
        %v3086 = vmul.f32 %v2978, %v2724
        %v3087 = vmul.f32 %v2981, %v2724
        %v3088 = vmul.f32 %v2984, %v2724
        %v3089 = vmul.f32 %v2987, %v2724
        %v3090 = vmul.f32 %v2990, %v2724
        %v3091 = vmul.f32 %v2993, %v2724
        %v3092 = vmul.f32 %v2996, %v2724
        %v3093 = vmul.f32 %v2999, %v2724
        %v3094 = vmul.f32 %v3002, %v2724
        %v3095 = vmul.f32 %v3005, %v2724
        %v3096 = vmul.f32 %v3008, %v2724
        %v3097 = vmul.f32 %v3011, %v2724
        %v3098 = vmul.f32 %v3014, %v2724
        %v3099 = vmul.f32 %v3017, %v2724
        %v3100 = vmul.f32 %v3020, %v2724
        %v3101 = vmul.f32 %v3023, %v2724
        %v3102 = vmul.f32 %v3026, %v2724
        %v3103 = vmul.f32 %v3029, %v2724
        %v3104 = vmul.f32 %v3032, %v2724
        %v3105 = vmul.f32 %v3035, %v2724
        %v3106 = vmul.f32 %v3038, %v2724
        %v3107 = vmul.f32 %v3041, %v2724
        %v3108 = vmul.f32 %v3044, %v2724
        %v3109 = vmul.f32 %v2725, %v2725
        %v3110 = vmul.f32 %v2726, %v2726
        %v3111 = vmul.f32 %v2727, %v2727
        %v3112 = vmul.f32 %v2728, %v2728
        %v3113 = vmul.f32 %v2729, %v2729
        %v3114 = vmul.f32 %v2730, %v2730
        %v3115 = vmul.f32 %v2731, %v2731
        %v3116 = vmul.f32 %v2732, %v2732
        %v3117 = vmul.f32 %v2733, %v2733
        %v3118 = vmul.f32 %v2734, %v2734
        %v3119 = vmul.f32 %v2735, %v2735
        %v3120 = vmul.f32 %v2736, %v2736
        %v3121 = vmul.f32 %v2737, %v2737
        %v3122 = vmul.f32 %v2738, %v2738
        %v3123 = vmul.f32 %v2739, %v2739
        %v3124 = vmul.f32 %v2740, %v2740
        %v3125 = vmul.f32 %v2741, %v2741
        %v3126 = vmul.f32 %v2742, %v2742
        %v3127 = vmul.f32 %v2743, %v2743
        %v3128 = vmul.f32 %v2744, %v2744
        %v3129 = vmul.f32 %v2745, %v2745
        %v3130 = vmul.f32 %v2746, %v2746
        %v3131 = vmul.f32 %v2747, %v2747
        %v3132 = vmul.f32 %v2748, %v2748
        %v3133 = vmul.f32 %v2749, %v2749
        %v3134 = vmul.f32 %v2750, %v2750
        %v3135 = vmul.f32 %v2751, %v2751
        %v3136 = vmul.f32 %v2752, %v2752
        %v3137 = vmul.f32 %v2753, %v2753
        %v3138 = vmul.f32 %v2754, %v2754
        %v3139 = vmul.f32 %v2755, %v2755
        %v3140 = vmul.f32 %v2756, %v2756
        %v3141 = vmul.f32 %v2757, %v2757
        %v3142 = vmul.f32 %v2758, %v2758
        %v3143 = vmul.f32 %v2759, %v2759
        %v3144 = vmul.f32 %v2760, %v2760
        %v3145 = vmul.f32 %v2761, %v2761
        %v3146 = vmul.f32 %v2762, %v2762
        %v3147 = vmul.f32 %v2763, %v2763
        %v3148 = vmul.f32 %v2764, %v2764
        %v3149 = vmul.f32 %v2765, %v2765
        %v3150 = vmul.f32 %v2766, %v2766
        %v3151 = vmul.f32 %v2767, %v2767
        %v3152 = vmul.f32 %v2768, %v2768
        %v3153 = vmul.f32 %v2769, %v2769
        %v3154 = vmul.f32 %v2770, %v2770
        %v3155 = vmul.f32 %v2771, %v2771
        %v3156 = vmul.f32 %v2772, %v2772
        %v3157 = vmul.f32 %v2773, %v2773
        %v3158 = vmul.f32 %v2774, %v2774
        %v3159 = vmul.f32 %v2775, %v2775
        %v3160 = vmul.f32 %v2776, %v2776
        %v3161 = vmul.f32 %v2777, %v2777
        %v3162 = vmul.f32 %v2778, %v2778
        %v3163 = vmul.f32 %v2779, %v2779
        %v3164 = vmul.f32 %v2780, %v2780
        %v3165 = vmul.f32 %v2781, %v2781
        %v3166 = vmul.f32 %v2782, %v2782
        %v3167 = vmul.f32 %v2783, %v2783
        %v3168 = vmul.f32 %v2784, %v2784
        %v3169 = vmul.f32 %v2785, %v2785
        %v3170 = vmul.f32 %v2786, %v2786
        %v3171 = vmul.f32 %v2787, %v2787
        %v3172 = vmul.f32 %v2788, %v2788
        %v3173 = vsub.f32 %v3045, %v3109
        %v3174 = vsub.f32 %v3046, %v3110
        %v3175 = vsub.f32 %v3047, %v3111
        %v3176 = vsub.f32 %v3048, %v3112
        %v3177 = vsub.f32 %v3049, %v3113
        %v3178 = vsub.f32 %v3050, %v3114
        %v3179 = vsub.f32 %v3051, %v3115
        %v3180 = vsub.f32 %v3052, %v3116
        %v3181 = vsub.f32 %v3053, %v3117
        %v3182 = vsub.f32 %v3054, %v3118
        %v3183 = vsub.f32 %v3055, %v3119
        %v3184 = vsub.f32 %v3056, %v3120
        %v3185 = vsub.f32 %v3057, %v3121
        %v3186 = vsub.f32 %v3058, %v3122
        %v3187 = vsub.f32 %v3059, %v3123
        %v3188 = vsub.f32 %v3060, %v3124
        %v3189 = vsub.f32 %v3061, %v3125
        %v3190 = vsub.f32 %v3062, %v3126
        %v3191 = vsub.f32 %v3063, %v3127
        %v3192 = vsub.f32 %v3064, %v3128
        %v3193 = vsub.f32 %v3065, %v3129
        %v3194 = vsub.f32 %v3066, %v3130
        %v3195 = vsub.f32 %v3067, %v3131
        %v3196 = vsub.f32 %v3068, %v3132
        %v3197 = vsub.f32 %v3069, %v3133
        %v3198 = vsub.f32 %v3070, %v3134
        %v3199 = vsub.f32 %v3071, %v3135
        %v3200 = vsub.f32 %v3072, %v3136
        %v3201 = vsub.f32 %v3073, %v3137
        %v3202 = vsub.f32 %v3074, %v3138
        %v3203 = vsub.f32 %v3075, %v3139
        %v3204 = vsub.f32 %v3076, %v3140
        %v3205 = vsub.f32 %v3077, %v3141
        %v3206 = vsub.f32 %v3078, %v3142
        %v3207 = vsub.f32 %v3079, %v3143
        %v3208 = vsub.f32 %v3080, %v3144
        %v3209 = vsub.f32 %v3081, %v3145
        %v3210 = vsub.f32 %v3082, %v3146
        %v3211 = vsub.f32 %v3083, %v3147
        %v3212 = vsub.f32 %v3084, %v3148
        %v3213 = vsub.f32 %v3085, %v3149
        %v3214 = vsub.f32 %v3086, %v3150
        %v3215 = vsub.f32 %v3087, %v3151
        %v3216 = vsub.f32 %v3088, %v3152
        %v3217 = vsub.f32 %v3089, %v3153
        %v3218 = vsub.f32 %v3090, %v3154
        %v3219 = vsub.f32 %v3091, %v3155
        %v3220 = vsub.f32 %v3092, %v3156
        %v3221 = vsub.f32 %v3093, %v3157
        %v3222 = vsub.f32 %v3094, %v3158
        %v3223 = vsub.f32 %v3095, %v3159
        %v3224 = vsub.f32 %v3096, %v3160
        %v3225 = vsub.f32 %v3097, %v3161
        %v3226 = vsub.f32 %v3098, %v3162
        %v3227 = vsub.f32 %v3099, %v3163
        %v3228 = vsub.f32 %v3100, %v3164
        %v3229 = vsub.f32 %v3101, %v3165
        %v3230 = vsub.f32 %v3102, %v3166
        %v3231 = vsub.f32 %v3103, %v3167
        %v3232 = vsub.f32 %v3104, %v3168
        %v3233 = vsub.f32 %v3105, %v3169
        %v3234 = vsub.f32 %v3106, %v3170
        %v3235 = vsub.f32 %v3107, %v3171
        %v3236 = vsub.f32 %v3108, %v3172
        %v3237 = vmax.f32 %v3173, 0.0
        %v3238 = vmax.f32 %v3174, 0.0
        %v3239 = vmax.f32 %v3175, 0.0
        %v3240 = vmax.f32 %v3176, 0.0
        %v3241 = vmax.f32 %v3177, 0.0
        %v3242 = vmax.f32 %v3178, 0.0
        %v3243 = vmax.f32 %v3179, 0.0
        %v3244 = vmax.f32 %v3180, 0.0
        %v3245 = vmax.f32 %v3181, 0.0
        %v3246 = vmax.f32 %v3182, 0.0
        %v3247 = vmax.f32 %v3183, 0.0
        %v3248 = vmax.f32 %v3184, 0.0
        %v3249 = vmax.f32 %v3185, 0.0
        %v3250 = vmax.f32 %v3186, 0.0
        %v3251 = vmax.f32 %v3187, 0.0
        %v3252 = vmax.f32 %v3188, 0.0
        %v3253 = vmax.f32 %v3189, 0.0
        %v3254 = vmax.f32 %v3190, 0.0
        %v3255 = vmax.f32 %v3191, 0.0
        %v3256 = vmax.f32 %v3192, 0.0
        %v3257 = vmax.f32 %v3193, 0.0
        %v3258 = vmax.f32 %v3194, 0.0
        %v3259 = vmax.f32 %v3195, 0.0
        %v3260 = vmax.f32 %v3196, 0.0
        %v3261 = vmax.f32 %v3197, 0.0
        %v3262 = vmax.f32 %v3198, 0.0
        %v3263 = vmax.f32 %v3199, 0.0
        %v3264 = vmax.f32 %v3200, 0.0
        %v3265 = vmax.f32 %v3201, 0.0
        %v3266 = vmax.f32 %v3202, 0.0
        %v3267 = vmax.f32 %v3203, 0.0
        %v3268 = vmax.f32 %v3204, 0.0
        %v3269 = vmax.f32 %v3205, 0.0
        %v3270 = vmax.f32 %v3206, 0.0
        %v3271 = vmax.f32 %v3207, 0.0
        %v3272 = vmax.f32 %v3208, 0.0
        %v3273 = vmax.f32 %v3209, 0.0
        %v3274 = vmax.f32 %v3210, 0.0
        %v3275 = vmax.f32 %v3211, 0.0
        %v3276 = vmax.f32 %v3212, 0.0
        %v3277 = vmax.f32 %v3213, 0.0
        %v3278 = vmax.f32 %v3214, 0.0
        %v3279 = vmax.f32 %v3215, 0.0
        %v3280 = vmax.f32 %v3216, 0.0
        %v3281 = vmax.f32 %v3217, 0.0
        %v3282 = vmax.f32 %v3218, 0.0
        %v3283 = vmax.f32 %v3219, 0.0
        %v3284 = vmax.f32 %v3220, 0.0
        %v3285 = vmax.f32 %v3221, 0.0
        %v3286 = vmax.f32 %v3222, 0.0
        %v3287 = vmax.f32 %v3223, 0.0
        %v3288 = vmax.f32 %v3224, 0.0
        %v3289 = vmax.f32 %v3225, 0.0
        %v3290 = vmax.f32 %v3226, 0.0
        %v3291 = vmax.f32 %v3227, 0.0
        %v3292 = vmax.f32 %v3228, 0.0
        %v3293 = vmax.f32 %v3229, 0.0
        %v3294 = vmax.f32 %v3230, 0.0
        %v3295 = vmax.f32 %v3231, 0.0
        %v3296 = vmax.f32 %v3232, 0.0
        %v3297 = vmax.f32 %v3233, 0.0
        %v3298 = vmax.f32 %v3234, 0.0
        %v3299 = vmax.f32 %v3235, 0.0
        %v3300 = vmax.f32 %v3236, 0.0
        %v3301 = vsub.f32 %v2466, %v2725
        %v3302 = vsub.f32 %v2467, %v2726
        %v3303 = vsub.f32 %v2468, %v2727
        %v3304 = vsub.f32 %v2469, %v2728
        %v3305 = vsub.f32 %v2470, %v2729
        %v3306 = vsub.f32 %v2471, %v2730
        %v3307 = vsub.f32 %v2472, %v2731
        %v3308 = vsub.f32 %v2473, %v2732
        %v3309 = vsub.f32 %v2474, %v2733
        %v3310 = vsub.f32 %v2475, %v2734
        %v3311 = vsub.f32 %v2476, %v2735
        %v3312 = vsub.f32 %v2477, %v2736
        %v3313 = vsub.f32 %v2478, %v2737
        %v3314 = vsub.f32 %v2479, %v2738
        %v3315 = vsub.f32 %v2480, %v2739
        %v3316 = vsub.f32 %v2481, %v2740
        %v3317 = vsub.f32 %v2482, %v2741
        %v3318 = vsub.f32 %v2483, %v2742
        %v3319 = vsub.f32 %v2484, %v2743
        %v3320 = vsub.f32 %v2485, %v2744
        %v3321 = vsub.f32 %v2486, %v2745
        %v3322 = vsub.f32 %v2487, %v2746
        %v3323 = vsub.f32 %v2488, %v2747
        %v3324 = vsub.f32 %v2489, %v2748
        %v3325 = vsub.f32 %v2490, %v2749
        %v3326 = vsub.f32 %v2491, %v2750
        %v3327 = vsub.f32 %v2492, %v2751
        %v3328 = vsub.f32 %v2493, %v2752
        %v3329 = vsub.f32 %v2494, %v2753
        %v3330 = vsub.f32 %v2495, %v2754
        %v3331 = vsub.f32 %v2496, %v2755
        %v3332 = vsub.f32 %v2497, %v2756
        %v3333 = vsub.f32 %v2498, %v2757
        %v3334 = vsub.f32 %v2499, %v2758
        %v3335 = vsub.f32 %v2500, %v2759
        %v3336 = vsub.f32 %v2501, %v2760
        %v3337 = vsub.f32 %v2502, %v2761
        %v3338 = vsub.f32 %v2503, %v2762
        %v3339 = vsub.f32 %v2504, %v2763
        %v3340 = vsub.f32 %v2505, %v2764
        %v3341 = vsub.f32 %v2506, %v2765
        %v3342 = vsub.f32 %v2507, %v2766
        %v3343 = vsub.f32 %v2508, %v2767
        %v3344 = vsub.f32 %v2509, %v2768
        %v3345 = vsub.f32 %v2510, %v2769
        %v3346 = vsub.f32 %v2511, %v2770
        %v3347 = vsub.f32 %v2512, %v2771
        %v3348 = vsub.f32 %v2513, %v2772
        %v3349 = vsub.f32 %v2514, %v2773
        %v3350 = vsub.f32 %v2515, %v2774
        %v3351 = vsub.f32 %v2516, %v2775
        %v3352 = vsub.f32 %v2517, %v2776
        %v3353 = vsub.f32 %v2518, %v2777
        %v3354 = vsub.f32 %v2519, %v2778
        %v3355 = vsub.f32 %v2520, %v2779
        %v3356 = vsub.f32 %v2521, %v2780
        %v3357 = vsub.f32 %v2522, %v2781
        %v3358 = vsub.f32 %v2523, %v2782
        %v3359 = vsub.f32 %v2524, %v2783
        %v3360 = vsub.f32 %v2525, %v2784
        %v3361 = vsub.f32 %v2526, %v2785
        %v3362 = vsub.f32 %v2527, %v2786
        %v3363 = vsub.f32 %v2528, %v2787
        %v3364 = vsub.f32 %v2529, %v2788
        %v3365 = vadd.f32 %v3237, 1e-05
        %v3366 = vadd.f32 %v3238, 1e-05
        %v3367 = vadd.f32 %v3239, 1e-05
        %v3368 = vadd.f32 %v3240, 1e-05
        %v3369 = vadd.f32 %v3241, 1e-05
        %v3370 = vadd.f32 %v3242, 1e-05
        %v3371 = vadd.f32 %v3243, 1e-05
        %v3372 = vadd.f32 %v3244, 1e-05
        %v3373 = vadd.f32 %v3245, 1e-05
        %v3374 = vadd.f32 %v3246, 1e-05
        %v3375 = vadd.f32 %v3247, 1e-05
        %v3376 = vadd.f32 %v3248, 1e-05
        %v3377 = vadd.f32 %v3249, 1e-05
        %v3378 = vadd.f32 %v3250, 1e-05
        %v3379 = vadd.f32 %v3251, 1e-05
        %v3380 = vadd.f32 %v3252, 1e-05
        %v3381 = vadd.f32 %v3253, 1e-05
        %v3382 = vadd.f32 %v3254, 1e-05
        %v3383 = vadd.f32 %v3255, 1e-05
        %v3384 = vadd.f32 %v3256, 1e-05
        %v3385 = vadd.f32 %v3257, 1e-05
        %v3386 = vadd.f32 %v3258, 1e-05
        %v3387 = vadd.f32 %v3259, 1e-05
        %v3388 = vadd.f32 %v3260, 1e-05
        %v3389 = vadd.f32 %v3261, 1e-05
        %v3390 = vadd.f32 %v3262, 1e-05
        %v3391 = vadd.f32 %v3263, 1e-05
        %v3392 = vadd.f32 %v3264, 1e-05
        %v3393 = vadd.f32 %v3265, 1e-05
        %v3394 = vadd.f32 %v3266, 1e-05
        %v3395 = vadd.f32 %v3267, 1e-05
        %v3396 = vadd.f32 %v3268, 1e-05
        %v3397 = vadd.f32 %v3269, 1e-05
        %v3398 = vadd.f32 %v3270, 1e-05
        %v3399 = vadd.f32 %v3271, 1e-05
        %v3400 = vadd.f32 %v3272, 1e-05
        %v3401 = vadd.f32 %v3273, 1e-05
        %v3402 = vadd.f32 %v3274, 1e-05
        %v3403 = vadd.f32 %v3275, 1e-05
        %v3404 = vadd.f32 %v3276, 1e-05
        %v3405 = vadd.f32 %v3277, 1e-05
        %v3406 = vadd.f32 %v3278, 1e-05
        %v3407 = vadd.f32 %v3279, 1e-05
        %v3408 = vadd.f32 %v3280, 1e-05
        %v3409 = vadd.f32 %v3281, 1e-05
        %v3410 = vadd.f32 %v3282, 1e-05
        %v3411 = vadd.f32 %v3283, 1e-05
        %v3412 = vadd.f32 %v3284, 1e-05
        %v3413 = vadd.f32 %v3285, 1e-05
        %v3414 = vadd.f32 %v3286, 1e-05
        %v3415 = vadd.f32 %v3287, 1e-05
        %v3416 = vadd.f32 %v3288, 1e-05
        %v3417 = vadd.f32 %v3289, 1e-05
        %v3418 = vadd.f32 %v3290, 1e-05
        %v3419 = vadd.f32 %v3291, 1e-05
        %v3420 = vadd.f32 %v3292, 1e-05
        %v3421 = vadd.f32 %v3293, 1e-05
        %v3422 = vadd.f32 %v3294, 1e-05
        %v3423 = vadd.f32 %v3295, 1e-05
        %v3424 = vadd.f32 %v3296, 1e-05
        %v3425 = vadd.f32 %v3297, 1e-05
        %v3426 = vadd.f32 %v3298, 1e-05
        %v3427 = vadd.f32 %v3299, 1e-05
        %v3428 = vadd.f32 %v3300, 1e-05
        %v3429 = vrsqrt.pop %v3365
        %v3430 = vrsqrt.pop %v3366
        %v3431 = vrsqrt.pop %v3367
        %v3432 = vrsqrt.pop %v3368
        %v3433 = vrsqrt.pop %v3369
        %v3434 = vrsqrt.pop %v3370
        %v3435 = vrsqrt.pop %v3371
        %v3436 = vrsqrt.pop %v3372
        %v3437 = vrsqrt.pop %v3373
        %v3438 = vrsqrt.pop %v3374
        %v3439 = vrsqrt.pop %v3375
        %v3440 = vrsqrt.pop %v3376
        %v3441 = vrsqrt.pop %v3377
        %v3442 = vrsqrt.pop %v3378
        %v3443 = vrsqrt.pop %v3379
        %v3444 = vrsqrt.pop %v3380
        %v3445 = vrsqrt.pop %v3381
        %v3446 = vrsqrt.pop %v3382
        %v3447 = vrsqrt.pop %v3383
        %v3448 = vrsqrt.pop %v3384
        %v3449 = vrsqrt.pop %v3385
        %v3450 = vrsqrt.pop %v3386
        %v3451 = vrsqrt.pop %v3387
        %v3452 = vrsqrt.pop %v3388
        %v3453 = vrsqrt.pop %v3389
        %v3454 = vrsqrt.pop %v3390
        %v3455 = vrsqrt.pop %v3391
        %v3456 = vrsqrt.pop %v3392
        %v3457 = vrsqrt.pop %v3393
        %v3458 = vrsqrt.pop %v3394
        %v3459 = vrsqrt.pop %v3395
        %v3460 = vrsqrt.pop %v3396
        %v3461 = vrsqrt.pop %v3397
        %v3462 = vrsqrt.pop %v3398
        %v3463 = vrsqrt.pop %v3399
        %v3464 = vrsqrt.pop %v3400
        %v3465 = vrsqrt.pop %v3401
        %v3466 = vrsqrt.pop %v3402
        %v3467 = vrsqrt.pop %v3403
        %v3468 = vrsqrt.pop %v3404
        %v3469 = vrsqrt.pop %v3405
        %v3470 = vrsqrt.pop %v3406
        %v3471 = vrsqrt.pop %v3407
        %v3472 = vrsqrt.pop %v3408
        %v3473 = vrsqrt.pop %v3409
        %v3474 = vrsqrt.pop %v3410
        %v3475 = vrsqrt.pop %v3411
        %v3476 = vrsqrt.pop %v3412
        %v3477 = vrsqrt.pop %v3413
        %v3478 = vrsqrt.pop %v3414
        %v3479 = vrsqrt.pop %v3415
        %v3480 = vrsqrt.pop %v3416
        %v3481 = vrsqrt.pop %v3417
        %v3482 = vrsqrt.pop %v3418
        %v3483 = vrsqrt.pop %v3419
        %v3484 = vrsqrt.pop %v3420
        %v3485 = vrsqrt.pop %v3421
        %v3486 = vrsqrt.pop %v3422
        %v3487 = vrsqrt.pop %v3423
        %v3488 = vrsqrt.pop %v3424
        %v3489 = vrsqrt.pop %v3425
        %v3490 = vrsqrt.pop %v3426
        %v3491 = vrsqrt.pop %v3427
        %v3492 = vrsqrt.pop %v3428
        %v3493 = vmul.f32 %v3301, %v3429
        %v3494 = vmul.f32 %v3302, %v3430
        %v3495 = vmul.f32 %v3303, %v3431
        %v3496 = vmul.f32 %v3304, %v3432
        %v3497 = vmul.f32 %v3305, %v3433
        %v3498 = vmul.f32 %v3306, %v3434
        %v3499 = vmul.f32 %v3307, %v3435
        %v3500 = vmul.f32 %v3308, %v3436
        %v3501 = vmul.f32 %v3309, %v3437
        %v3502 = vmul.f32 %v3310, %v3438
        %v3503 = vmul.f32 %v3311, %v3439
        %v3504 = vmul.f32 %v3312, %v3440
        %v3505 = vmul.f32 %v3313, %v3441
        %v3506 = vmul.f32 %v3314, %v3442
        %v3507 = vmul.f32 %v3315, %v3443
        %v3508 = vmul.f32 %v3316, %v3444
        %v3509 = vmul.f32 %v3317, %v3445
        %v3510 = vmul.f32 %v3318, %v3446
        %v3511 = vmul.f32 %v3319, %v3447
        %v3512 = vmul.f32 %v3320, %v3448
        %v3513 = vmul.f32 %v3321, %v3449
        %v3514 = vmul.f32 %v3322, %v3450
        %v3515 = vmul.f32 %v3323, %v3451
        %v3516 = vmul.f32 %v3324, %v3452
        %v3517 = vmul.f32 %v3325, %v3453
        %v3518 = vmul.f32 %v3326, %v3454
        %v3519 = vmul.f32 %v3327, %v3455
        %v3520 = vmul.f32 %v3328, %v3456
        %v3521 = vmul.f32 %v3329, %v3457
        %v3522 = vmul.f32 %v3330, %v3458
        %v3523 = vmul.f32 %v3331, %v3459
        %v3524 = vmul.f32 %v3332, %v3460
        %v3525 = vmul.f32 %v3333, %v3461
        %v3526 = vmul.f32 %v3334, %v3462
        %v3527 = vmul.f32 %v3335, %v3463
        %v3528 = vmul.f32 %v3336, %v3464
        %v3529 = vmul.f32 %v3337, %v3465
        %v3530 = vmul.f32 %v3338, %v3466
        %v3531 = vmul.f32 %v3339, %v3467
        %v3532 = vmul.f32 %v3340, %v3468
        %v3533 = vmul.f32 %v3341, %v3469
        %v3534 = vmul.f32 %v3342, %v3470
        %v3535 = vmul.f32 %v3343, %v3471
        %v3536 = vmul.f32 %v3344, %v3472
        %v3537 = vmul.f32 %v3345, %v3473
        %v3538 = vmul.f32 %v3346, %v3474
        %v3539 = vmul.f32 %v3347, %v3475
        %v3540 = vmul.f32 %v3348, %v3476
        %v3541 = vmul.f32 %v3349, %v3477
        %v3542 = vmul.f32 %v3350, %v3478
        %v3543 = vmul.f32 %v3351, %v3479
        %v3544 = vmul.f32 %v3352, %v3480
        %v3545 = vmul.f32 %v3353, %v3481
        %v3546 = vmul.f32 %v3354, %v3482
        %v3547 = vmul.f32 %v3355, %v3483
        %v3548 = vmul.f32 %v3356, %v3484
        %v3549 = vmul.f32 %v3357, %v3485
        %v3550 = vmul.f32 %v3358, %v3486
        %v3551 = vmul.f32 %v3359, %v3487
        %v3552 = vmul.f32 %v3360, %v3488
        %v3553 = vmul.f32 %v3361, %v3489
        %v3554 = vmul.f32 %v3362, %v3490
        %v3555 = vmul.f32 %v3363, %v3491
        %v3556 = vmul.f32 %v3364, %v3492
        %v3557 = vlaneseq
        %v3558 = vshrl.u32 %v3557, 7
        %v3559 = vsub.s32 0, %v3558
        %v3560 = vrot.slane %v2530, %v3559
        %v3561 = vmul.f32 %v3493, %v3560
        %v3562 = vmul.f32 %v3494, %v3560
        %v3563 = vmul.f32 %v3495, %v3560
        %v3564 = vmul.f32 %v3496, %v3560
        %v3565 = vmul.f32 %v3497, %v3560
        %v3566 = vmul.f32 %v3498, %v3560
        %v3567 = vmul.f32 %v3499, %v3560
        %v3568 = vmul.f32 %v3500, %v3560
        %v3569 = vmul.f32 %v3501, %v3560
        %v3570 = vmul.f32 %v3502, %v3560
        %v3571 = vmul.f32 %v3503, %v3560
        %v3572 = vmul.f32 %v3504, %v3560
        %v3573 = vmul.f32 %v3505, %v3560
        %v3574 = vmul.f32 %v3506, %v3560
        %v3575 = vmul.f32 %v3507, %v3560
        %v3576 = vmul.f32 %v3508, %v3560
        %v3577 = vmul.f32 %v3509, %v3560
        %v3578 = vmul.f32 %v3510, %v3560
        %v3579 = vmul.f32 %v3511, %v3560
        %v3580 = vmul.f32 %v3512, %v3560
        %v3581 = vmul.f32 %v3513, %v3560
        %v3582 = vmul.f32 %v3514, %v3560
        %v3583 = vmul.f32 %v3515, %v3560
        %v3584 = vmul.f32 %v3516, %v3560
        %v3585 = vmul.f32 %v3517, %v3560
        %v3586 = vmul.f32 %v3518, %v3560
        %v3587 = vmul.f32 %v3519, %v3560
        %v3588 = vmul.f32 %v3520, %v3560
        %v3589 = vmul.f32 %v3521, %v3560
        %v3590 = vmul.f32 %v3522, %v3560
        %v3591 = vmul.f32 %v3523, %v3560
        %v3592 = vmul.f32 %v3524, %v3560
        %v3593 = vmul.f32 %v3525, %v3560
        %v3594 = vmul.f32 %v3526, %v3560
        %v3595 = vmul.f32 %v3527, %v3560
        %v3596 = vmul.f32 %v3528, %v3560
        %v3597 = vmul.f32 %v3529, %v3560
        %v3598 = vmul.f32 %v3530, %v3560
        %v3599 = vmul.f32 %v3531, %v3560
        %v3600 = vmul.f32 %v3532, %v3560
        %v3601 = vmul.f32 %v3533, %v3560
        %v3602 = vmul.f32 %v3534, %v3560
        %v3603 = vmul.f32 %v3535, %v3560
        %v3604 = vmul.f32 %v3536, %v3560
        %v3605 = vmul.f32 %v3537, %v3560
        %v3606 = vmul.f32 %v3538, %v3560
        %v3607 = vmul.f32 %v3539, %v3560
        %v3608 = vmul.f32 %v3540, %v3560
        %v3609 = vmul.f32 %v3541, %v3560
        %v3610 = vmul.f32 %v3542, %v3560
        %v3611 = vmul.f32 %v3543, %v3560
        %v3612 = vmul.f32 %v3544, %v3560
        %v3613 = vmul.f32 %v3545, %v3560
        %v3614 = vmul.f32 %v3546, %v3560
        %v3615 = vmul.f32 %v3547, %v3560
        %v3616 = vmul.f32 %v3548, %v3560
        %v3617 = vmul.f32 %v3549, %v3560
        %v3618 = vmul.f32 %v3550, %v3560
        %v3619 = vmul.f32 %v3551, %v3560
        %v3620 = vmul.f32 %v3552, %v3560
        %v3621 = vmul.f32 %v3553, %v3560
        %v3622 = vmul.f32 %v3554, %v3560
        %v3623 = vmul.f32 %v3555, %v3560
        %v3624 = vmul.f32 %v3556, %v3560
        %v3625 = vlaneseq
        %v3626 = vshrl.u32 %v3625, 7
        %v3627 = vsub.s32 0, %v3626
        %v3628 = vrot.slane %v2531, %v3627
        %v3629 = vadd.f32 %v3561, %v3628
        %v3630 = vadd.f32 %v3562, %v3628
        %v3631 = vadd.f32 %v3563, %v3628
        %v3632 = vadd.f32 %v3564, %v3628
        %v3633 = vadd.f32 %v3565, %v3628
        %v3634 = vadd.f32 %v3566, %v3628
        %v3635 = vadd.f32 %v3567, %v3628
        %v3636 = vadd.f32 %v3568, %v3628
        %v3637 = vadd.f32 %v3569, %v3628
        %v3638 = vadd.f32 %v3570, %v3628
        %v3639 = vadd.f32 %v3571, %v3628
        %v3640 = vadd.f32 %v3572, %v3628
        %v3641 = vadd.f32 %v3573, %v3628
        %v3642 = vadd.f32 %v3574, %v3628
        %v3643 = vadd.f32 %v3575, %v3628
        %v3644 = vadd.f32 %v3576, %v3628
        %v3645 = vadd.f32 %v3577, %v3628
        %v3646 = vadd.f32 %v3578, %v3628
        %v3647 = vadd.f32 %v3579, %v3628
        %v3648 = vadd.f32 %v3580, %v3628
        %v3649 = vadd.f32 %v3581, %v3628
        %v3650 = vadd.f32 %v3582, %v3628
        %v3651 = vadd.f32 %v3583, %v3628
        %v3652 = vadd.f32 %v3584, %v3628
        %v3653 = vadd.f32 %v3585, %v3628
        %v3654 = vadd.f32 %v3586, %v3628
        %v3655 = vadd.f32 %v3587, %v3628
        %v3656 = vadd.f32 %v3588, %v3628
        %v3657 = vadd.f32 %v3589, %v3628
        %v3658 = vadd.f32 %v3590, %v3628
        %v3659 = vadd.f32 %v3591, %v3628
        %v3660 = vadd.f32 %v3592, %v3628
        %v3661 = vadd.f32 %v3593, %v3628
        %v3662 = vadd.f32 %v3594, %v3628
        %v3663 = vadd.f32 %v3595, %v3628
        %v3664 = vadd.f32 %v3596, %v3628
        %v3665 = vadd.f32 %v3597, %v3628
        %v3666 = vadd.f32 %v3598, %v3628
        %v3667 = vadd.f32 %v3599, %v3628
        %v3668 = vadd.f32 %v3600, %v3628
        %v3669 = vadd.f32 %v3601, %v3628
        %v3670 = vadd.f32 %v3602, %v3628
        %v3671 = vadd.f32 %v3603, %v3628
        %v3672 = vadd.f32 %v3604, %v3628
        %v3673 = vadd.f32 %v3605, %v3628
        %v3674 = vadd.f32 %v3606, %v3628
        %v3675 = vadd.f32 %v3607, %v3628
        %v3676 = vadd.f32 %v3608, %v3628
        %v3677 = vadd.f32 %v3609, %v3628
        %v3678 = vadd.f32 %v3610, %v3628
        %v3679 = vadd.f32 %v3611, %v3628
        %v3680 = vadd.f32 %v3612, %v3628
        %v3681 = vadd.f32 %v3613, %v3628
        %v3682 = vadd.f32 %v3614, %v3628
        %v3683 = vadd.f32 %v3615, %v3628
        %v3684 = vadd.f32 %v3616, %v3628
        %v3685 = vadd.f32 %v3617, %v3628
        %v3686 = vadd.f32 %v3618, %v3628
        %v3687 = vadd.f32 %v3619, %v3628
        %v3688 = vadd.f32 %v3620, %v3628
        %v3689 = vadd.f32 %v3621, %v3628
        %v3690 = vadd.f32 %v3622, %v3628
        %v3691 = vadd.f32 %v3623, %v3628
        %v3692 = vadd.f32 %v3624, %v3628
        %v3693 = vpack.c.bf16 %v3630, %v3629
        %v3694 = vpack.c.bf16 %v3632, %v3631
        %v3695 = vpack.c.bf16 %v3634, %v3633
        %v3696 = vpack.c.bf16 %v3636, %v3635
        %v3697 = vpack.c.bf16 %v3638, %v3637
        %v3698 = vpack.c.bf16 %v3640, %v3639
        %v3699 = vpack.c.bf16 %v3642, %v3641
        %v3700 = vpack.c.bf16 %v3644, %v3643
        %v3701 = vpack.c.bf16 %v3646, %v3645
        %v3702 = vpack.c.bf16 %v3648, %v3647
        %v3703 = vpack.c.bf16 %v3650, %v3649
        %v3704 = vpack.c.bf16 %v3652, %v3651
        %v3705 = vpack.c.bf16 %v3654, %v3653
        %v3706 = vpack.c.bf16 %v3656, %v3655
        %v3707 = vpack.c.bf16 %v3658, %v3657
        %v3708 = vpack.c.bf16 %v3660, %v3659
        %v3709 = vpack.c.bf16 %v3662, %v3661
        %v3710 = vpack.c.bf16 %v3664, %v3663
        %v3711 = vpack.c.bf16 %v3666, %v3665
        %v3712 = vpack.c.bf16 %v3668, %v3667
        %v3713 = vpack.c.bf16 %v3670, %v3669
        %v3714 = vpack.c.bf16 %v3672, %v3671
        %v3715 = vpack.c.bf16 %v3674, %v3673
        %v3716 = vpack.c.bf16 %v3676, %v3675
        %v3717 = vpack.c.bf16 %v3678, %v3677
        %v3718 = vpack.c.bf16 %v3680, %v3679
        %v3719 = vpack.c.bf16 %v3682, %v3681
        %v3720 = vpack.c.bf16 %v3684, %v3683
        %v3721 = vpack.c.bf16 %v3686, %v3685
        %v3722 = vpack.c.bf16 %v3688, %v3687
        %v3723 = vpack.c.bf16 %v3690, %v3689
        %v3724 = vpack.c.bf16 %v3692, %v3691
        %v3725 = vld [vmem:[%s5] sm:$0xf]
        %v3726 = vld [vmem:[%s5 + $0x4] sm:$0xf]
        %v3727 = vld [vmem:[%s5 + $0x8] sm:$0xf]
        %v3728 = vld [vmem:[%s5 + $0xc] sm:$0xf]
        %v3729 = vld [vmem:[%s6] sm:$0x1]
        %v3731 = vlaneseq
        %v3732 = vshrl.u32 %v3731, 7
        %v3733 = vsub.s32 0, %v3732
        %v3734 = vrot.slane %v3729, %v3733
        %v3740 = vunpack.c.l.b16 %v3725
        %v3741 = vunpack.c.l.b16 %v3726
        %v3742 = vunpack.c.l.b16 %v3727
        %v3743 = vunpack.c.l.b16 %v3728
        %v3744 = vpack.c.b16 %v3741, %v3740
        %v3745 = vpack.c.b16 %v3743, %v3742
        %v3749 = vsel %vm398, %v3693, 0
        %v3752 = vsel %vm398, %v3694, 0
        %v3755 = vsel %vm398, %v3695, 0
        %v3758 = vsel %vm398, %v3696, 0
        %v3761 = vsel %vm398, %v3697, 0
        %v3764 = vsel %vm398, %v3698, 0
        %v3767 = vsel %vm398, %v3699, 0
        %v3770 = vsel %vm398, %v3700, 0
        %v3773 = vsel %vm398, %v3701, 0
        %v3776 = vsel %vm398, %v3702, 0
        %v3779 = vsel %vm398, %v3703, 0
        %v3782 = vsel %vm398, %v3704, 0
        %v3785 = vsel %vm398, %v3705, 0
        %v3788 = vsel %vm398, %v3706, 0
        %v3791 = vsel %vm398, %v3707, 0
        %v3794 = vsel %vm398, %v3708, 0
        %v3797 = vsel %vm398, %v3709, 0
        %v3800 = vsel %vm398, %v3710, 0
        %v3803 = vsel %vm398, %v3711, 0
        %v3806 = vsel %vm398, %v3712, 0
        %v3809 = vsel %vm398, %v3713, 0
        %v3812 = vsel %vm398, %v3714, 0
        %v3815 = vsel %vm398, %v3715, 0
        %v3818 = vsel %vm398, %v3716, 0
        %v3821 = vsel %vm398, %v3717, 0
        %v3824 = vsel %vm398, %v3718, 0
        %v3827 = vsel %vm398, %v3719, 0
        %v3830 = vsel %vm398, %v3720, 0
        %v3833 = vsel %vm398, %v3721, 0
        %v3836 = vsel %vm398, %v3722, 0
        %v3839 = vsel %vm398, %v3723, 0
        %v3842 = vsel %vm398, %v3724, 0
        %3844 = vmatprep.subr.bf16.mxu0 0
        %3845 = vmatpush1.bf16.msra.mxu0 %v3744
        %3846 = vmatprep.subr.bf16.mxu0 0
        %3847 = vmatpush1.bf16.msra.mxu0 %v3745
        %3848 = vmatprep.subr.bf16.mxu0 0
        %3849 = vmatpush1.bf16.msra.mxu0 0
        %3850 = vmatprep.subr.bf16.mxu0 0
        %3851 = vmatpush1.bf16.msra.mxu0 0
        %3852 = vmatprep.subr.bf16.mxu0 0
        %3853 = vmatpush1.bf16.msra.mxu0 0
        %3854 = vmatprep.subr.bf16.mxu0 0
        %3855 = vmatpush1.bf16.msra.mxu0 0
        %3856 = vmatprep.subr.bf16.mxu0 0
        %3857 = vmatpush1.bf16.msra.mxu0 0
        %3858 = vmatprep.subr.bf16.mxu0 0
        %3859 = vmatpush1.bf16.msra.mxu0 0
        %3860 = vmatprep.subr.bf16.mxu0 0
        %3861 = vmatpush1.bf16.msra.mxu0 0
        %3862 = vmatprep.subr.bf16.mxu0 0
        %3863 = vmatpush1.bf16.msra.mxu0 0
        %3864 = vmatprep.subr.bf16.mxu0 0
        %3865 = vmatpush1.bf16.msra.mxu0 0
        %3866 = vmatprep.subr.bf16.mxu0 0
        %3867 = vmatpush1.bf16.msra.mxu0 0
        %3868 = vmatprep.subr.bf16.mxu0 0
        %3869 = vmatpush1.bf16.msra.mxu0 0
        %3870 = vmatprep.subr.bf16.mxu0 0
        %3871 = vmatpush1.bf16.msra.mxu0 0
        %3872 = vmatprep.subr.bf16.mxu0 0
        %3873 = vmatpush1.bf16.msra.mxu0 0
        %3874 = vmatprep.subr.bf16.mxu0 0
        %3875 = vmatpush1.bf16.msra.mxu0 0
        %3876 = vmatprep.mubr.bf16.mxu0 0
        %3877 = vmatmul.mubr.bf16.gmra.mrb[0].mxu0 %v3749
        %v3878 = vpop.f32.mrb[0].mxu0
        %v3879 = vadd.f32 %v3734, %v3878
        %v3880 = vpop.f32.mrb[0].mxu0
        %v3881 = vpop.f32.mrb[0].mxu0
        %v3882 = vadd.f32 %v3734, %v3881
        %v3883 = vpop.f32.mrb[0].mxu0
        %3884 = vmatprep.mubr.bf16.mxu0 0
        %3885 = vmatmul.mubr.bf16.gmra.mrb[0].mxu0 %v3752
        %v3886 = vpop.f32.mrb[0].mxu0
        %v3887 = vadd.f32 %v3734, %v3886
        %v3888 = vpop.f32.mrb[0].mxu0
        %v3889 = vpop.f32.mrb[0].mxu0
        %v3890 = vadd.f32 %v3734, %v3889
        %v3891 = vpop.f32.mrb[0].mxu0
        %3892 = vmatprep.mubr.bf16.mxu0 0
        %3893 = vmatmul.mubr.bf16.gmra.mrb[0].mxu0 %v3755
        %v3894 = vpop.f32.mrb[0].mxu0
        %v3895 = vadd.f32 %v3734, %v3894
        %v3896 = vpop.f32.mrb[0].mxu0
        %v3897 = vpop.f32.mrb[0].mxu0
        %v3898 = vadd.f32 %v3734, %v3897
        %v3899 = vpop.f32.mrb[0].mxu0
        %3900 = vmatprep.mubr.bf16.mxu0 0
        %3901 = vmatmul.mubr.bf16.gmra.mrb[0].mxu0 %v3758
        %v3902 = vpop.f32.mrb[0].mxu0
        %v3903 = vadd.f32 %v3734, %v3902
        %v3904 = vpop.f32.mrb[0].mxu0
        %v3905 = vpop.f32.mrb[0].mxu0
        %v3906 = vadd.f32 %v3734, %v3905
        %v3907 = vpop.f32.mrb[0].mxu0
        %3908 = vmatprep.mubr.bf16.mxu0 0
        %3909 = vmatmul.mubr.bf16.gmra.mrb[0].mxu0 %v3761
        %v3910 = vpop.f32.mrb[0].mxu0
        %v3911 = vadd.f32 %v3734, %v3910
        %v3912 = vpop.f32.mrb[0].mxu0
        %v3913 = vpop.f32.mrb[0].mxu0
        %v3914 = vadd.f32 %v3734, %v3913
        %v3915 = vpop.f32.mrb[0].mxu0
        %3916 = vmatprep.mubr.bf16.mxu0 0
        %3917 = vmatmul.mubr.bf16.gmra.mrb[0].mxu0 %v3764
        %v3918 = vpop.f32.mrb[0].mxu0
        %v3919 = vadd.f32 %v3734, %v3918
        %v3920 = vpop.f32.mrb[0].mxu0
        %v3921 = vpop.f32.mrb[0].mxu0
        %v3922 = vadd.f32 %v3734, %v3921
        %v3923 = vpop.f32.mrb[0].mxu0
        %3924 = vmatprep.mubr.bf16.mxu0 0
        %3925 = vmatmul.mubr.bf16.gmra.mrb[0].mxu0 %v3767
        %v3926 = vpop.f32.mrb[0].mxu0
        %v3927 = vadd.f32 %v3734, %v3926
        %v3928 = vpop.f32.mrb[0].mxu0
        %v3929 = vpop.f32.mrb[0].mxu0
        %v3930 = vadd.f32 %v3734, %v3929
        %v3931 = vpop.f32.mrb[0].mxu0
        %3932 = vmatprep.mubr.bf16.mxu0 0
        %3933 = vmatmul.mubr.bf16.gmra.mrb[0].mxu0 %v3770
        %v3934 = vpop.f32.mrb[0].mxu0
        %v3935 = vadd.f32 %v3734, %v3934
        %v3936 = vpop.f32.mrb[0].mxu0
        %v3937 = vpop.f32.mrb[0].mxu0
        %v3938 = vadd.f32 %v3734, %v3937
        %v3939 = vpop.f32.mrb[0].mxu0
        %3940 = vmatprep.mubr.bf16.mxu0 0
        %3941 = vmatmul.mubr.bf16.gmra.mrb[0].mxu0 %v3773
        %v3942 = vpop.f32.mrb[0].mxu0
        %v3943 = vadd.f32 %v3734, %v3942
        %v3944 = vpop.f32.mrb[0].mxu0
        %v3945 = vpop.f32.mrb[0].mxu0
        %v3946 = vadd.f32 %v3734, %v3945
        %v3947 = vpop.f32.mrb[0].mxu0
        %3948 = vmatprep.mubr.bf16.mxu0 0
        %3949 = vmatmul.mubr.bf16.gmra.mrb[0].mxu0 %v3776
        %v3950 = vpop.f32.mrb[0].mxu0
        %v3951 = vadd.f32 %v3734, %v3950
        %v3952 = vpop.f32.mrb[0].mxu0
        %v3953 = vpop.f32.mrb[0].mxu0
        %v3954 = vadd.f32 %v3734, %v3953
        %v3955 = vpop.f32.mrb[0].mxu0
        %3956 = vmatprep.mubr.bf16.mxu0 0
        %3957 = vmatmul.mubr.bf16.gmra.mrb[0].mxu0 %v3779
        %v3958 = vpop.f32.mrb[0].mxu0
        %v3959 = vadd.f32 %v3734, %v3958
        %v3960 = vpop.f32.mrb[0].mxu0
        %v3961 = vpop.f32.mrb[0].mxu0
        %v3962 = vadd.f32 %v3734, %v3961
        %v3963 = vpop.f32.mrb[0].mxu0
        %3964 = vmatprep.mubr.bf16.mxu0 0
        %3965 = vmatmul.mubr.bf16.gmra.mrb[0].mxu0 %v3782
        %v3966 = vpop.f32.mrb[0].mxu0
        %v3967 = vadd.f32 %v3734, %v3966
        %v3968 = vpop.f32.mrb[0].mxu0
        %v3969 = vpop.f32.mrb[0].mxu0
        %v3970 = vadd.f32 %v3734, %v3969
        %v3971 = vpop.f32.mrb[0].mxu0
        %3972 = vmatprep.mubr.bf16.mxu0 0
        %3973 = vmatmul.mubr.bf16.gmra.mrb[0].mxu0 %v3785
        %v3974 = vpop.f32.mrb[0].mxu0
        %v3975 = vadd.f32 %v3734, %v3974
        %v3976 = vpop.f32.mrb[0].mxu0
        %v3977 = vpop.f32.mrb[0].mxu0
        %v3978 = vadd.f32 %v3734, %v3977
        %v3979 = vpop.f32.mrb[0].mxu0
        %3980 = vmatprep.mubr.bf16.mxu0 0
        %3981 = vmatmul.mubr.bf16.gmra.mrb[0].mxu0 %v3788
        %v3982 = vpop.f32.mrb[0].mxu0
        %v3983 = vadd.f32 %v3734, %v3982
        %v3984 = vpop.f32.mrb[0].mxu0
        %v3985 = vpop.f32.mrb[0].mxu0
        %v3986 = vadd.f32 %v3734, %v3985
        %v3987 = vpop.f32.mrb[0].mxu0
        %3988 = vmatprep.mubr.bf16.mxu0 0
        %3989 = vmatmul.mubr.bf16.gmra.mrb[0].mxu0 %v3791
        %v3990 = vpop.f32.mrb[0].mxu0
        %v3991 = vadd.f32 %v3734, %v3990
        %v3992 = vpop.f32.mrb[0].mxu0
        %v3993 = vpop.f32.mrb[0].mxu0
        %v3994 = vadd.f32 %v3734, %v3993
        %v3995 = vpop.f32.mrb[0].mxu0
        %3996 = vmatprep.mubr.bf16.mxu0 0
        %3997 = vmatmul.mubr.bf16.gmra.mrb[0].mxu0 %v3794
        %v3998 = vpop.f32.mrb[0].mxu0
        %v3999 = vadd.f32 %v3734, %v3998
        %v4000 = vpop.f32.mrb[0].mxu0
        %v4001 = vpop.f32.mrb[0].mxu0
        %v4002 = vadd.f32 %v3734, %v4001
        %v4003 = vpop.f32.mrb[0].mxu0
        %4004 = vmatprep.mubr.bf16.mxu0 0
        %4005 = vmatmul.mubr.bf16.gmra.mrb[0].mxu0 %v3797
        %v4006 = vpop.f32.mrb[0].mxu0
        %v4007 = vadd.f32 %v3734, %v4006
        %v4008 = vpop.f32.mrb[0].mxu0
        %v4009 = vpop.f32.mrb[0].mxu0
        %v4010 = vadd.f32 %v3734, %v4009
        %v4011 = vpop.f32.mrb[0].mxu0
        %4012 = vmatprep.mubr.bf16.mxu0 0
        %4013 = vmatmul.mubr.bf16.gmra.mrb[0].mxu0 %v3800
        %v4014 = vpop.f32.mrb[0].mxu0
        %v4015 = vadd.f32 %v3734, %v4014
        %v4016 = vpop.f32.mrb[0].mxu0
        %v4017 = vpop.f32.mrb[0].mxu0
        %v4018 = vadd.f32 %v3734, %v4017
        %v4019 = vpop.f32.mrb[0].mxu0
        %4020 = vmatprep.mubr.bf16.mxu0 0
        %4021 = vmatmul.mubr.bf16.gmra.mrb[0].mxu0 %v3803
        %v4022 = vpop.f32.mrb[0].mxu0
        %v4023 = vadd.f32 %v3734, %v4022
        %v4024 = vpop.f32.mrb[0].mxu0
        %v4025 = vpop.f32.mrb[0].mxu0
        %v4026 = vadd.f32 %v3734, %v4025
        %v4027 = vpop.f32.mrb[0].mxu0
        %4028 = vmatprep.mubr.bf16.mxu0 0
        %4029 = vmatmul.mubr.bf16.gmra.mrb[0].mxu0 %v3806
        %v4030 = vpop.f32.mrb[0].mxu0
        %v4031 = vadd.f32 %v3734, %v4030
        %v4032 = vpop.f32.mrb[0].mxu0
        %v4033 = vpop.f32.mrb[0].mxu0
        %v4034 = vadd.f32 %v3734, %v4033
        %v4035 = vpop.f32.mrb[0].mxu0
        %4036 = vmatprep.mubr.bf16.mxu0 0
        %4037 = vmatmul.mubr.bf16.gmra.mrb[0].mxu0 %v3809
        %v4038 = vpop.f32.mrb[0].mxu0
        %v4039 = vadd.f32 %v3734, %v4038
        %v4040 = vpop.f32.mrb[0].mxu0
        %v4041 = vpop.f32.mrb[0].mxu0
        %v4042 = vadd.f32 %v3734, %v4041
        %v4043 = vpop.f32.mrb[0].mxu0
        %4044 = vmatprep.mubr.bf16.mxu0 0
        %4045 = vmatmul.mubr.bf16.gmra.mrb[0].mxu0 %v3812
        %v4046 = vpop.f32.mrb[0].mxu0
        %v4047 = vadd.f32 %v3734, %v4046
        %v4048 = vpop.f32.mrb[0].mxu0
        %v4049 = vpop.f32.mrb[0].mxu0
        %v4050 = vadd.f32 %v3734, %v4049
        %v4051 = vpop.f32.mrb[0].mxu0
        %4052 = vmatprep.mubr.bf16.mxu0 0
        %4053 = vmatmul.mubr.bf16.gmra.mrb[0].mxu0 %v3815
        %v4054 = vpop.f32.mrb[0].mxu0
        %v4055 = vadd.f32 %v3734, %v4054
        %v4056 = vpop.f32.mrb[0].mxu0
        %v4057 = vpop.f32.mrb[0].mxu0
        %v4058 = vadd.f32 %v3734, %v4057
        %v4059 = vpop.f32.mrb[0].mxu0
        %4060 = vmatprep.mubr.bf16.mxu0 0
        %4061 = vmatmul.mubr.bf16.gmra.mrb[0].mxu0 %v3818
        %v4062 = vpop.f32.mrb[0].mxu0
        %v4063 = vadd.f32 %v3734, %v4062
        %v4064 = vpop.f32.mrb[0].mxu0
        %v4065 = vpop.f32.mrb[0].mxu0
        %v4066 = vadd.f32 %v3734, %v4065
        %v4067 = vpop.f32.mrb[0].mxu0
        %4068 = vmatprep.mubr.bf16.mxu0 0
        %4069 = vmatmul.mubr.bf16.gmra.mrb[0].mxu0 %v3821
        %v4070 = vpop.f32.mrb[0].mxu0
        %v4071 = vadd.f32 %v3734, %v4070
        %v4072 = vpop.f32.mrb[0].mxu0
        %v4073 = vpop.f32.mrb[0].mxu0
        %v4074 = vadd.f32 %v3734, %v4073
        %v4075 = vpop.f32.mrb[0].mxu0
        %4076 = vmatprep.mubr.bf16.mxu0 0
        %4077 = vmatmul.mubr.bf16.gmra.mrb[0].mxu0 %v3824
        %v4078 = vpop.f32.mrb[0].mxu0
        %v4079 = vadd.f32 %v3734, %v4078
        %v4080 = vpop.f32.mrb[0].mxu0
        %v4081 = vpop.f32.mrb[0].mxu0
        %v4082 = vadd.f32 %v3734, %v4081
        %v4083 = vpop.f32.mrb[0].mxu0
        %4084 = vmatprep.mubr.bf16.mxu0 0
        %4085 = vmatmul.mubr.bf16.gmra.mrb[0].mxu0 %v3827
        %v4086 = vpop.f32.mrb[0].mxu0
        %v4087 = vadd.f32 %v3734, %v4086
        %v4088 = vpop.f32.mrb[0].mxu0
        %v4089 = vpop.f32.mrb[0].mxu0
        %v4090 = vadd.f32 %v3734, %v4089
        %v4091 = vpop.f32.mrb[0].mxu0
        %4092 = vmatprep.mubr.bf16.mxu0 0
        %4093 = vmatmul.mubr.bf16.gmra.mrb[0].mxu0 %v3830
        %v4094 = vpop.f32.mrb[0].mxu0
        %v4095 = vadd.f32 %v3734, %v4094
        %v4096 = vpop.f32.mrb[0].mxu0
        %v4097 = vpop.f32.mrb[0].mxu0
        %v4098 = vadd.f32 %v3734, %v4097
        %v4099 = vpop.f32.mrb[0].mxu0
        %4100 = vmatprep.mubr.bf16.mxu0 0
        %4101 = vmatmul.mubr.bf16.gmra.mrb[0].mxu0 %v3833
        %v4102 = vpop.f32.mrb[0].mxu0
        %v4103 = vadd.f32 %v3734, %v4102
        %v4104 = vpop.f32.mrb[0].mxu0
        %v4105 = vpop.f32.mrb[0].mxu0
        %v4106 = vadd.f32 %v3734, %v4105
        %v4107 = vpop.f32.mrb[0].mxu0
        %4108 = vmatprep.mubr.bf16.mxu0 0
        %4109 = vmatmul.mubr.bf16.gmra.mrb[0].mxu0 %v3836
        %v4110 = vpop.f32.mrb[0].mxu0
        %v4111 = vadd.f32 %v3734, %v4110
        %v4112 = vpop.f32.mrb[0].mxu0
        %v4113 = vpop.f32.mrb[0].mxu0
        %v4114 = vadd.f32 %v3734, %v4113
        %v4115 = vpop.f32.mrb[0].mxu0
        %4116 = vmatprep.mubr.bf16.mxu0 0
        %4117 = vmatmul.mubr.bf16.gmra.mrb[0].mxu0 %v3839
        %v4118 = vpop.f32.mrb[0].mxu0
        %v4119 = vadd.f32 %v3734, %v4118
        %v4120 = vpop.f32.mrb[0].mxu0
        %v4121 = vpop.f32.mrb[0].mxu0
        %v4122 = vadd.f32 %v3734, %v4121
        %v4123 = vpop.f32.mrb[0].mxu0
        %4124 = vmatprep.mubr.bf16.mxu0 0
        %4125 = vmatmul.mubr.bf16.gmra.mrb[0].mxu0 %v3842
        %v4126 = vpop.f32.mrb[0].mxu0
        %v4127 = vadd.f32 %v3734, %v4126
        %v4128 = vpop.f32.mrb[0].mxu0
        %v4129 = vpop.f32.mrb[0].mxu0
        %v4130 = vadd.f32 %v3734, %v4129
        %v4131 = vpop.f32.mrb[0].mxu0
        %4132 = vdwg.mxu0
        %4133 = vst [vmem:[%s272] sm:$0xff] %v3879
        %4134 = vst [vmem:[%s272 + $0x8] sm:$0xff] %v3882
        %4135 = vst [vmem:[%s272 + $0x10] sm:$0xff] %v3887
        %4136 = vst [vmem:[%s272 + $0x18] sm:$0xff] %v3890
        %4137 = vst [vmem:[%s272 + $0x20] sm:$0xff] %v3895
        %4138 = vst [vmem:[%s272 + $0x28] sm:$0xff] %v3898
        %4139 = vst [vmem:[%s272 + $0x30] sm:$0xff] %v3903
        %4140 = vst [vmem:[%s272 + $0x38] sm:$0xff] %v3906
        %4141 = vst [vmem:[%s272 + $0x40] sm:$0xff] %v3911
        %4142 = vst [vmem:[%s272 + $0x48] sm:$0xff] %v3914
        %4143 = vst [vmem:[%s272 + $0x50] sm:$0xff] %v3919
        %4144 = vst [vmem:[%s272 + $0x58] sm:$0xff] %v3922
        %4145 = vst [vmem:[%s272 + $0x60] sm:$0xff] %v3927
        %4146 = vst [vmem:[%s272 + $0x68] sm:$0xff] %v3930
        %4147 = vst [vmem:[%s272 + $0x70] sm:$0xff] %v3935
        %4148 = vst [vmem:[%s272 + $0x78] sm:$0xff] %v3938
        %4149 = vst [vmem:[%s272 + $0x80] sm:$0xff] %v3943
        %4150 = vst [vmem:[%s272 + $0x88] sm:$0xff] %v3946
        %4151 = vst [vmem:[%s272 + $0x90] sm:$0xff] %v3951
        %4152 = vst [vmem:[%s272 + $0x98] sm:$0xff] %v3954
        %4153 = vst [vmem:[%s272 + $0xa0] sm:$0xff] %v3959
        %4154 = vst [vmem:[%s272 + $0xa8] sm:$0xff] %v3962
        %4155 = vst [vmem:[%s272 + $0xb0] sm:$0xff] %v3967
        %4156 = vst [vmem:[%s272 + $0xb8] sm:$0xff] %v3970
        %4157 = vst [vmem:[%s272 + $0xc0] sm:$0xff] %v3975
        %4158 = vst [vmem:[%s272 + $0xc8] sm:$0xff] %v3978
        %4159 = vst [vmem:[%s272 + $0xd0] sm:$0xff] %v3983
        %4160 = vst [vmem:[%s272 + $0xd8] sm:$0xff] %v3986
        %4161 = vst [vmem:[%s272 + $0xe0] sm:$0xff] %v3991
        %4162 = vst [vmem:[%s272 + $0xe8] sm:$0xff] %v3994
        %4163 = vst [vmem:[%s272 + $0xf0] sm:$0xff] %v3999
        %4164 = vst [vmem:[%s272 + $0xf8] sm:$0xff] %v4002
        %4165 = vst [vmem:[%s272 + $0x100] sm:$0xff] %v4007
        %4166 = vst [vmem:[%s272 + $0x108] sm:$0xff] %v4010
        %4167 = vst [vmem:[%s272 + $0x110] sm:$0xff] %v4015
        %4168 = vst [vmem:[%s272 + $0x118] sm:$0xff] %v4018
        %4169 = vst [vmem:[%s272 + $0x120] sm:$0xff] %v4023
        %4170 = vst [vmem:[%s272 + $0x128] sm:$0xff] %v4026
        %4171 = vst [vmem:[%s272 + $0x130] sm:$0xff] %v4031
        %4172 = vst [vmem:[%s272 + $0x138] sm:$0xff] %v4034
        %4173 = vst [vmem:[%s272 + $0x140] sm:$0xff] %v4039
        %4174 = vst [vmem:[%s272 + $0x148] sm:$0xff] %v4042
        %4175 = vst [vmem:[%s272 + $0x150] sm:$0xff] %v4047
        %4176 = vst [vmem:[%s272 + $0x158] sm:$0xff] %v4050
        %4177 = vst [vmem:[%s272 + $0x160] sm:$0xff] %v4055
        %4178 = vst [vmem:[%s272 + $0x168] sm:$0xff] %v4058
        %4179 = vst [vmem:[%s272 + $0x170] sm:$0xff] %v4063
        %4180 = vst [vmem:[%s272 + $0x178] sm:$0xff] %v4066
        %4181 = vst [vmem:[%s272 + $0x180] sm:$0xff] %v4071
        %4182 = vst [vmem:[%s272 + $0x188] sm:$0xff] %v4074
        %4183 = vst [vmem:[%s272 + $0x190] sm:$0xff] %v4079
        %4184 = vst [vmem:[%s272 + $0x198] sm:$0xff] %v4082
        %4185 = vst [vmem:[%s272 + $0x1a0] sm:$0xff] %v4087
        %4186 = vst [vmem:[%s272 + $0x1a8] sm:$0xff] %v4090
        %4187 = vst [vmem:[%s272 + $0x1b0] sm:$0xff] %v4095
        %4188 = vst [vmem:[%s272 + $0x1b8] sm:$0xff] %v4098
        %4189 = vst [vmem:[%s272 + $0x1c0] sm:$0xff] %v4103
        %4190 = vst [vmem:[%s272 + $0x1c8] sm:$0xff] %v4106
        %4191 = vst [vmem:[%s272 + $0x1d0] sm:$0xff] %v4111
        %4192 = vst [vmem:[%s272 + $0x1d8] sm:$0xff] %v4114
        %4193 = vst [vmem:[%s272 + $0x1e0] sm:$0xff] %v4119
        %4194 = vst [vmem:[%s272 + $0x1e8] sm:$0xff] %v4122
        %4195 = vst [vmem:[%s272 + $0x1f0] sm:$0xff] %v4127
        %4196 = vst [vmem:[%s272 + $0x1f8] sm:$0xff] %v4130
        %s4197 = sand.u32 %s181, 1
        %s4198 = scalar_lea.sflag [#allocation3], %s4197
        %s4199 = sand.u32 %s181, 1
        %s4200 = smul.addr %s4199, 512
        %s4201 = scalar_lea.vmem [#allocation2], %s4200
        // Predicated region
        $region49: #{tpu_custom_call.1} parent=47 // pred_check
          %p4202 = pneg %p191
        $region50: #{tpu_custom_call.1} parent=47 // pred_check_branch
          %4204 = sbr.rel (%p4202) target = $region52
        $region51: #{tpu_custom_call.1} parent=47 // pred_region
          %s4205 = smul.u32 64, %s21
          %s4207 = ssub.s32 8192, 8192
          %4208 = vsyncadd %s4198, %s4207
          %s4209 = smul.addr %s4205, 128
          %s4210 = scalar_lea.hbm %s7, %s4209
          %s4211 = sshll.u32 %s4201, 4
          %s4212 = int_to_ptr.vmem [resolvable:$true] %s4211
          %4217 = dma.vmem_to_hbm [thread:$0]  %s4212, 8192, %s4210, %s4198, 128, 128, 8
        $region52: #{tpu_custom_call.1} parent=47 // pred_fallthru
          _
      $region48: #{tpu_custom_call.1} parent=5 // pred_fallthru
        _
      %p4218 = scmp.le.s32.totalorder 2, %s16
      // Predicated region
      $region53: #{tpu_custom_call.1} parent=5 // pred_check
        %p4219 = pneg %p4218
      $region54: #{tpu_custom_call.1} parent=5 // pred_check_branch
        %4221 = sbr.rel (%p4219) target = $region56
      $region55: #{tpu_custom_call.1} parent=5 // pred_region
        %s4222 = ssub.s32 %s16, 2
        // Predicated region
        $region57: #{tpu_custom_call.1} parent=55 // pred_check
          %p4223 = pneg %p197
        $region58: #{tpu_custom_call.1} parent=55 // pred_check_branch
          %4225 = sbr.rel (%p4223) target = $region60
        $region59: #{tpu_custom_call.1} parent=55 // pred_region
          %s4226 = sand.u32 %s182, 1
          %s4227 = scalar_lea.sflag [#allocation3], %s4226
          %s4228 = sand.u32 %s182, 1
          %s4229 = smul.addr %s4228, 512
          %s4230 = scalar_lea.vmem [#allocation2], %s4229
          %4231 = dma.done %s4227, 8192
        $region60: #{tpu_custom_call.1} parent=55 // pred_fallthru
          _
      $region56: #{tpu_custom_call.1} parent=5 // pred_fallthru
        _
    $region6: #{tpu_custom_call.1} parent=1 // loop_footer
      %s20 = sadd.s32 1, %s16
    $region7: #{tpu_custom_call.1} parent=1 // loop_footer_branch
      %15 = sbr.rel target = $region3
    $region8: #{tpu_custom_call.1} parent=1 // loop_exit
      _
    %4232 = vsyncpa [#allocation3], 1
    %s4233 = scalar_lea.sflag [#allocation3], 1
    %4234 = vsyncpa %s4233, 1

</llo_original>
